<compile_context>
chip_gen: v6e
topology: v6e:2x2x1
jax: 0.10.0
libtpu: 0.0.40
codegen_flags: <defaults>
</compile_context>

<pallas_src>
import math

import jax
import jax.numpy as jnp
from jax.experimental import pallas as pl
from jax.experimental.pallas import tpu as pltpu

HIDDEN = 512
N_REPEAT = 6
PARAM_FEATS = 3
IN_FEATS = PARAM_FEATS + 1      # 4 real input features
IN_PAD = 8                      # layer-1 K padded to 8 (tidy MXU tile)
MAX_TILE_R = 1024               # per-step row-tile cap
COMPUTE_BOUND_ROWS = 512        # above this, weight DMA is no longer the bound


def _round_up(x, m):
    return ((x + m - 1) // m) * m


def _epilogue_dtype_for_backend():
    """bf16 bias/ReLU on chips with a bf16 VPU (v6e/v7x); f32 on v5e."""
    try:
        kind = jax.devices()[0].device_kind.lower()
    except Exception:
        return jnp.bfloat16
    if "v5 lite" in kind or "v5e" in kind or "v5litepod" in kind:
        return jnp.float32
    return jnp.bfloat16


def _act(acc_f32, bias, epi_dtype):
    """Bias-add + ReLU on the f32 MXU accumulator, in the epilogue dtype."""
    if epi_dtype == jnp.bfloat16:
        return jnp.maximum(acc_f32.astype(jnp.bfloat16) + bias, 0.0)
    return jnp.maximum(acc_f32 + bias, 0.0)


def _build_kernel(tile_r, n_sub, epi_dtype):
    sub = tile_r // n_sub

    def kernel(x_ref,
               w1_ref, b1_ref, w2_ref, b2_ref, w3_ref, b3_ref,
               w4_ref, b4_ref, w5_ref, b5_ref, w6_ref,
               o_ref):
        w1 = w1_ref[...]                      # (IN_PAD, 512) bf16
        b1 = b1_ref[...]                      # (1, 512)      epilogue dtype
        w6 = w6_ref[...]                      # (1, 512)      f32

        # Layer 1 (padded 8 -> 512) on the MXU: one small-K matmul per chunk.
        hs = []
        for c in range(n_sub):
            xc = x_ref[c * sub:(c + 1) * sub, :]          # (sub, IN_PAD) bf16
            acc = jnp.dot(xc, w1, preferred_element_type=jnp.float32)
            hs.append(_act(acc, b1, epi_dtype))

        # Layers 2-5 (512 -> 512): bf16 MXU matmuls with f32 accumulation.
        # Sub-chunks are independent, so the scheduler can overlap chunk j+1's
        # matmul pushes with chunk j's VPU epilogue.
        for w_ref, b_ref in ((w2_ref, b2_ref), (w3_ref, b3_ref),
                             (w4_ref, b4_ref), (w5_ref, b5_ref)):
            w = w_ref[...]
            b = b_ref[...]
            accs = [jnp.dot(h if h.dtype == jnp.bfloat16
                            else h.astype(jnp.bfloat16),
                            w, preferred_element_type=jnp.float32)
                    for h in hs]
            hs = [_act(a, b, epi_dtype) for a in accs]

        # Final layer (512 -> 1, no bias): f32 VPU multiply + XLU lane reduce
        # instead of an N=1 MXU matmul.
        for c in range(n_sub):
            o_ref[c * sub:(c + 1) * sub, :] = jnp.sum(
                hs[c].astype(jnp.float32) * w6, axis=-1, keepdims=True)

    return kernel


def _tiling(rows):
    """Pick (num_tiles, tile_r, n_sub) for a flattened row count."""
    if rows >= 2048:
        n_sub = 4
    elif rows >= 64:
        n_sub = 2
    else:
        n_sub = 1
    row_mult = 16 * n_sub            # keep sub-chunks 16-row aligned (bf16)
    if rows > COMPUTE_BOUND_ROWS:
        # Compute-bound: >=2 tiles so both v7x TensorCores get work.
        num_tiles = max(2, pl.cdiv(rows, MAX_TILE_R))
    else:
        num_tiles = 1                # weight-DMA bound: don't duplicate DMA
    tile_r = _round_up(pl.cdiv(rows, num_tiles), row_mult)
    return num_tiles, tile_r, n_sub


def _run_mlp_pallas(x_pad, prepared, tile_r, n_sub):
    """x_pad: (r_pad, IN_PAD) bf16 -> (r_pad, 1) f32."""
    r_pad = x_pad.shape[0]
    (w1, b1, w2, b2, w3, b3, w4, b4, w5, b5, w6t) = prepared
    epi_dtype = b1.dtype

    kernel = _build_kernel(tile_r, n_sub, epi_dtype)
    grid = (r_pad // tile_r,)

    def const_spec(shape):
        # Constant block index: fetched once, stays VMEM-resident across tiles.
        return pl.BlockSpec(shape, lambda i: (0, 0))

    flops_per_row = 2 * IN_PAD * HIDDEN + 4 * 2 * HIDDEN * HIDDEN + 2 * HIDDEN
    weight_bytes = (IN_PAD * HIDDEN * 2               # w1 (bf16)
                    + 4 * HIDDEN * HIDDEN * 2         # w2..w5 (bf16)
                    + 5 * HIDDEN * b1.dtype.itemsize  # biases
                    + HIDDEN * 4)                     # w6 row (f32)
    cost = pl.CostEstimate(
        flops=int(r_pad * flops_per_row),
        transcendentals=0,
        bytes_accessed=int(weight_bytes + r_pad * (IN_PAD * 2 + 4)))

    return pl.pallas_call(
        kernel,
        out_shape=jax.ShapeDtypeStruct((r_pad, 1), jnp.float32),
        grid=grid,
        in_specs=[
            pl.BlockSpec((tile_r, IN_PAD), lambda i: (i, 0)),   # features
            const_spec((IN_PAD, HIDDEN)),   # w1
            const_spec((1, HIDDEN)),        # b1
            const_spec((HIDDEN, HIDDEN)),   # w2
            const_spec((1, HIDDEN)),        # b2
            const_spec((HIDDEN, HIDDEN)),   # w3
            const_spec((1, HIDDEN)),        # b3
            const_spec((HIDDEN, HIDDEN)),   # w4
            const_spec((1, HIDDEN)),        # b4
            const_spec((HIDDEN, HIDDEN)),   # w5
            const_spec((1, HIDDEN)),        # b5
            const_spec((1, HIDDEN)),        # w6^T
        ],
        out_specs=pl.BlockSpec((tile_r, 1), lambda i: (i, 0)),
        compiler_params=pltpu.CompilerParams(
            dimension_semantics=("parallel",)),
        cost_estimate=cost,
    )(x_pad, w1, b1, w2, b2, w3, b3, w4, b4, w5, b5, w6t)


@jax.jit
def ff_aware_mlp_energy_predictor(parameter, energy_ff, prepared_params):
    """parameter: (B, 6, 3), energy_ff: (B,)  ->  (B,) f32."""
    b = parameter.shape[0]
    rows = b * N_REPEAT
    num_tiles, tile_r, n_sub = _tiling(rows)
    r_pad = num_tiles * tile_r

    # Feature assembly: [parameter | (550+e)/100 | zero K-padding] as bf16.
    p_flat = parameter.reshape(rows, PARAM_FEATS).astype(jnp.float32)
    e = (550.0 + energy_ff.astype(jnp.float32)) / 100.0                  # (B,)
    e_col = jnp.broadcast_to(e[:, None], (b, N_REPEAT)).reshape(rows, 1)
    x = jnp.concatenate([p_flat, e_col], axis=-1).astype(jnp.bfloat16)   # (rows,4)
    x = jnp.pad(x, ((0, r_pad - rows), (0, IN_PAD - IN_FEATS)))

    y_pad = _run_mlp_pallas(x, prepared_params, tile_r, n_sub)           # (r_pad,1)

    # Drop padding rows, reduce over the n=6 axis.
    y = y_pad[:rows, 0].reshape(b, N_REPEAT)
    return jnp.sum(y, axis=-1)


def init_params(key):
    """Deterministic init matching nn.Linear shapes (uniform +-1/sqrt(fan_in))."""
    dims = [(IN_FEATS, HIDDEN), (HIDDEN, HIDDEN), (HIDDEN, HIDDEN),
            (HIDDEN, HIDDEN), (HIDDEN, HIDDEN), (HIDDEN, 1)]
    params = []
    keys = jax.random.split(key, 2 * len(dims))
    for i, (fan_in, fan_out) in enumerate(dims):
        bound = 1.0 / math.sqrt(fan_in)
        w = jax.random.uniform(keys[2 * i], (fan_in, fan_out),
                               minval=-bound, maxval=bound, dtype=jnp.float32)
        params.append(w)
        if i < len(dims) - 1:  # last layer has bias=False
            bb = jax.random.uniform(keys[2 * i + 1], (1, fan_out),
                                    minval=-bound, maxval=bound,
                                    dtype=jnp.float32)
            params.append(bb)
    return tuple(params)


def prepare_params(params, epi_dtype=None):
    """One-time weight prep (outside the per-call path): bf16 MXU weights,
    K-padded w1, epilogue-dtype biases, transposed w6 row."""
    if epi_dtype is None:
        epi_dtype = _epilogue_dtype_for_backend()
    (w1, b1, w2, b2, w3, b3, w4, b4, w5, b5, w6) = params
    w1p = jnp.pad(w1, ((0, IN_PAD - IN_FEATS), (0, 0))).astype(jnp.bfloat16)
    return (w1p, b1.astype(epi_dtype),
            w2.astype(jnp.bfloat16), b2.astype(epi_dtype),
            w3.astype(jnp.bfloat16), b3.astype(epi_dtype),
            w4.astype(jnp.bfloat16), b4.astype(epi_dtype),
            w5.astype(jnp.bfloat16), b5.astype(epi_dtype),
            w6.reshape(1, HIDDEN).astype(jnp.float32))


def _reference_forward(parameter, energy_ff, params, epi_dtype):
    """Pure-JAX reference mirroring the kernel's bf16 quantization/epilogue."""
    (w1, b1, w2, b2, w3, b3, w4, b4, w5, b5, w6) = params
    b = parameter.shape[0]
    e = (550.0 + energy_ff) / 100.0
    e = jnp.broadcast_to(e[:, None, None], (b, N_REPEAT, 1))
    x = jnp.concatenate([parameter, e], axis=-1).astype(jnp.bfloat16)    # (B,6,4)

    def act(acc, bias):
        bias = bias.astype(epi_dtype)
        if epi_dtype == jnp.bfloat16:
            return jnp.maximum(acc.astype(jnp.bfloat16) + bias, 0.0)
        return jnp.maximum(acc + bias, 0.0)

    h = act(jnp.dot(x, w1.astype(jnp.bfloat16),
                    preferred_element_type=jnp.float32), b1)
    for w, bb in ((w2, b2), (w3, b3), (w4, b4), (w5, b5)):
        h = act(jnp.dot(h.astype(jnp.bfloat16), w.astype(jnp.bfloat16),
                        preferred_element_type=jnp.float32), bb)
    y = jnp.dot(h.astype(jnp.float32), w6,
                precision=jax.lax.Precision.HIGHEST)                     # (B,6,1)
    return jnp.sum(y, axis=(-1, -2))                                     # (B,)


if __name__ == "__main__":
    key = jax.random.PRNGKey(0)
    k_p1, k_e1, k_w, k_p2, k_e2 = jax.random.split(key, 5)

    params = init_params(k_w)
    epi_dtype = _epilogue_dtype_for_backend()
    prepared = prepare_params(params, epi_dtype)

    # Small-batch check (single tile, n_sub = 1 path).
    B = 2
    parameter = jax.random.normal(k_p1, (B, N_REPEAT, PARAM_FEATS),
                                  dtype=jnp.float32)
    energy_ff = jax.random.uniform(k_e1, (B,), minval=-500.0, maxval=-400.0,
                                   dtype=jnp.float32)
    out = jax.block_until_ready(
        ff_aware_mlp_energy_predictor(parameter, energy_ff, prepared))
    ref = jax.block_until_ready(
        _reference_forward(parameter, energy_ff, params, epi_dtype))
    assert out.shape == (B,)
    assert jnp.allclose(out, ref, atol=1e-2, rtol=1e-2), (out, ref)

    # Larger-batch check (multi-tile grid + in-kernel sub-chunks + row padding).
    B2 = 97
    parameter2 = jax.random.normal(k_p2, (B2, N_REPEAT, PARAM_FEATS),
                                   dtype=jnp.float32)
    energy_ff2 = jax.random.uniform(k_e2, (B2,), minval=-500.0, maxval=-400.0,
                                    dtype=jnp.float32)
    out2 = jax.block_until_ready(
        ff_aware_mlp_energy_predictor(parameter2, energy_ff2, prepared))
    ref2 = jax.block_until_ready(
        _reference_forward(parameter2, energy_ff2, params, epi_dtype))
    assert out2.shape == (B2,)
    assert jnp.allclose(out2, ref2, atol=1e-2, rtol=1e-2), (out2, ref2)

    print("KERNEL_OK")
</pallas_src>

<mosaic_0001>
module attributes {stable_mosaic.version = 11 : i64} {
  func.func @kernel(%arg0: i32, %arg1: memref<16x8xbf16, #tpu.memory_space<vmem>>, %arg2: memref<8x512xbf16, #tpu.memory_space<vmem>>, %arg3: memref<1x512xbf16, #tpu.memory_space<vmem>>, %arg4: memref<512x512xbf16, #tpu.memory_space<vmem>>, %arg5: memref<1x512xbf16, #tpu.memory_space<vmem>>, %arg6: memref<512x512xbf16, #tpu.memory_space<vmem>>, %arg7: memref<1x512xbf16, #tpu.memory_space<vmem>>, %arg8: memref<512x512xbf16, #tpu.memory_space<vmem>>, %arg9: memref<1x512xbf16, #tpu.memory_space<vmem>>, %arg10: memref<512x512xbf16, #tpu.memory_space<vmem>>, %arg11: memref<1x512xbf16, #tpu.memory_space<vmem>>, %arg12: memref<1x512xf32, #tpu.memory_space<vmem>>, %arg13: memref<16x1xf32, #tpu.memory_space<vmem>>) attributes {dimension_semantics = [#tpu.dimension_semantics<parallel>], iteration_bounds = array<i64: 1>, scalar_prefetch = 0 : i64, scratch_operands = 0 : i64, tpu.core_type = #tpu.core_type<tc>, window_params = [{transform_indices = @transform_0, window_bounds = array<i64: 16, 8>}, {pipeline_mode = #tpu.pipeline_mode<synchronous>, transform_indices = @transform_1, window_bounds = array<i64: 8, 512>}, {pipeline_mode = #tpu.pipeline_mode<synchronous>, transform_indices = @transform_2, window_bounds = array<i64: 1, 512>}, {pipeline_mode = #tpu.pipeline_mode<synchronous>, transform_indices = @transform_3, window_bounds = array<i64: 512, 512>}, {pipeline_mode = #tpu.pipeline_mode<synchronous>, transform_indices = @transform_4, window_bounds = array<i64: 1, 512>}, {pipeline_mode = #tpu.pipeline_mode<synchronous>, transform_indices = @transform_5, window_bounds = array<i64: 512, 512>}, {pipeline_mode = #tpu.pipeline_mode<synchronous>, transform_indices = @transform_6, window_bounds = array<i64: 1, 512>}, {pipeline_mode = #tpu.pipeline_mode<synchronous>, transform_indices = @transform_7, window_bounds = array<i64: 512, 512>}, {pipeline_mode = #tpu.pipeline_mode<synchronous>, transform_indices = @transform_8, window_bounds = array<i64: 1, 512>}, {pipeline_mode = #tpu.pipeline_mode<synchronous>, transform_indices = @transform_9, window_bounds = array<i64: 512, 512>}, {pipeline_mode = #tpu.pipeline_mode<synchronous>, transform_indices = @transform_10, window_bounds = array<i64: 1, 512>}, {pipeline_mode = #tpu.pipeline_mode<synchronous>, transform_indices = @transform_11, window_bounds = array<i64: 1, 512>}, {transform_indices = @transform_12, window_bounds = array<i64: 16, 1>}]} {
    %c0 = arith.constant 0 : index
    %c0_0 = arith.constant 0 : index
    %0 = vector.load %arg2[%c0, %c0_0] : memref<8x512xbf16, #tpu.memory_space<vmem>>, vector<8x512xbf16>
    %c0_1 = arith.constant 0 : index
    %c0_2 = arith.constant 0 : index
    %1 = vector.load %arg3[%c0_1, %c0_2] : memref<1x512xbf16, #tpu.memory_space<vmem>>, vector<1x512xbf16>
    %c0_3 = arith.constant 0 : index
    %c0_4 = arith.constant 0 : index
    %2 = vector.load %arg12[%c0_3, %c0_4] : memref<1x512xf32, #tpu.memory_space<vmem>>, vector<1x512xf32>
    %c0_5 = arith.constant 0 : index
    %c0_6 = arith.constant 0 : index
    %3 = vector.load %arg1[%c0_5, %c0_6] : memref<16x8xbf16, #tpu.memory_space<vmem>>, vector<16x8xbf16>
    %cst = arith.constant dense<0.000000e+00> : vector<16x512xf32>
    %4 = tpu.matmul %3, %0, %cst {dimension_numbers = #tpu.dot_dimension_numbers<[1], [0], [0], [1], [0, 0, 1, 1], [], []>} : vector<16x8xbf16>, vector<8x512xbf16>, vector<16x512xf32> -> vector<16x512xf32>
    %5 = arith.truncf %4 : vector<16x512xf32> to vector<16x512xbf16>
    %6 = vector.broadcast %1 : vector<1x512xbf16> to vector<16x512xbf16>
    %7 = arith.addf %5, %6 : vector<16x512xbf16>
    %cst_7 = arith.constant 0.000000e+00 : bf16
    %8 = vector.broadcast %cst_7 : bf16 to vector<16x512xbf16>
    %9 = arith.maximumf %7, %8 : vector<16x512xbf16>
    %c0_8 = arith.constant 0 : index
    %c0_9 = arith.constant 0 : index
    %10 = vector.load %arg4[%c0_8, %c0_9] : memref<512x512xbf16, #tpu.memory_space<vmem>>, vector<512x512xbf16>
    %c0_10 = arith.constant 0 : index
    %c0_11 = arith.constant 0 : index
    %11 = vector.load %arg5[%c0_10, %c0_11] : memref<1x512xbf16, #tpu.memory_space<vmem>>, vector<1x512xbf16>
    %cst_12 = arith.constant dense<0.000000e+00> : vector<16x512xf32>
    %12 = tpu.matmul %9, %10, %cst_12 {dimension_numbers = #tpu.dot_dimension_numbers<[1], [0], [0], [1], [0, 0, 1, 1], [], []>} : vector<16x512xbf16>, vector<512x512xbf16>, vector<16x512xf32> -> vector<16x512xf32>
    %13 = arith.truncf %12 : vector<16x512xf32> to vector<16x512xbf16>
    %14 = vector.broadcast %11 : vector<1x512xbf16> to vector<16x512xbf16>
    %15 = arith.addf %13, %14 : vector<16x512xbf16>
    %cst_13 = arith.constant 0.000000e+00 : bf16
    %16 = vector.broadcast %cst_13 : bf16 to vector<16x512xbf16>
    %17 = arith.maximumf %15, %16 : vector<16x512xbf16>
    %c0_14 = arith.constant 0 : index
    %c0_15 = arith.constant 0 : index
    %18 = vector.load %arg6[%c0_14, %c0_15] : memref<512x512xbf16, #tpu.memory_space<vmem>>, vector<512x512xbf16>
    %c0_16 = arith.constant 0 : index
    %c0_17 = arith.constant 0 : index
    %19 = vector.load %arg7[%c0_16, %c0_17] : memref<1x512xbf16, #tpu.memory_space<vmem>>, vector<1x512xbf16>
    %cst_18 = arith.constant dense<0.000000e+00> : vector<16x512xf32>
    %20 = tpu.matmul %17, %18, %cst_18 {dimension_numbers = #tpu.dot_dimension_numbers<[1], [0], [0], [1], [0, 0, 1, 1], [], []>} : vector<16x512xbf16>, vector<512x512xbf16>, vector<16x512xf32> -> vector<16x512xf32>
    %21 = arith.truncf %20 : vector<16x512xf32> to vector<16x512xbf16>
    %22 = vector.broadcast %19 : vector<1x512xbf16> to vector<16x512xbf16>
    %23 = arith.addf %21, %22 : vector<16x512xbf16>
    %cst_19 = arith.constant 0.000000e+00 : bf16
    %24 = vector.broadcast %cst_19 : bf16 to vector<16x512xbf16>
    %25 = arith.maximumf %23, %24 : vector<16x512xbf16>
    %c0_20 = arith.constant 0 : index
    %c0_21 = arith.constant 0 : index
    %26 = vector.load %arg8[%c0_20, %c0_21] : memref<512x512xbf16, #tpu.memory_space<vmem>>, vector<512x512xbf16>
    %c0_22 = arith.constant 0 : index
    %c0_23 = arith.constant 0 : index
    %27 = vector.load %arg9[%c0_22, %c0_23] : memref<1x512xbf16, #tpu.memory_space<vmem>>, vector<1x512xbf16>
    %cst_24 = arith.constant dense<0.000000e+00> : vector<16x512xf32>
    %28 = tpu.matmul %25, %26, %cst_24 {dimension_numbers = #tpu.dot_dimension_numbers<[1], [0], [0], [1], [0, 0, 1, 1], [], []>} : vector<16x512xbf16>, vector<512x512xbf16>, vector<16x512xf32> -> vector<16x512xf32>
    %29 = arith.truncf %28 : vector<16x512xf32> to vector<16x512xbf16>
    %30 = vector.broadcast %27 : vector<1x512xbf16> to vector<16x512xbf16>
    %31 = arith.addf %29, %30 : vector<16x512xbf16>
    %cst_25 = arith.constant 0.000000e+00 : bf16
    %32 = vector.broadcast %cst_25 : bf16 to vector<16x512xbf16>
    %33 = arith.maximumf %31, %32 : vector<16x512xbf16>
    %c0_26 = arith.constant 0 : index
    %c0_27 = arith.constant 0 : index
    %34 = vector.load %arg10[%c0_26, %c0_27] : memref<512x512xbf16, #tpu.memory_space<vmem>>, vector<512x512xbf16>
    %c0_28 = arith.constant 0 : index
    %c0_29 = arith.constant 0 : index
    %35 = vector.load %arg11[%c0_28, %c0_29] : memref<1x512xbf16, #tpu.memory_space<vmem>>, vector<1x512xbf16>
    %cst_30 = arith.constant dense<0.000000e+00> : vector<16x512xf32>
    %36 = tpu.matmul %33, %34, %cst_30 {dimension_numbers = #tpu.dot_dimension_numbers<[1], [0], [0], [1], [0, 0, 1, 1], [], []>} : vector<16x512xbf16>, vector<512x512xbf16>, vector<16x512xf32> -> vector<16x512xf32>
    %37 = arith.truncf %36 : vector<16x512xf32> to vector<16x512xbf16>
    %38 = vector.broadcast %35 : vector<1x512xbf16> to vector<16x512xbf16>
    %39 = arith.addf %37, %38 : vector<16x512xbf16>
    %cst_31 = arith.constant 0.000000e+00 : bf16
    %40 = vector.broadcast %cst_31 : bf16 to vector<16x512xbf16>
    %41 = arith.maximumf %39, %40 : vector<16x512xbf16>
    %42 = arith.extf %41 : vector<16x512xbf16> to vector<16x512xf32>
    %43 = vector.broadcast %2 : vector<1x512xf32> to vector<16x512xf32>
    %44 = arith.mulf %42, %43 : vector<16x512xf32>
    %cst_32 = arith.constant dense<0.000000e+00> : vector<16xf32>
    %45 = vector.multi_reduction <add>, %44, %cst_32 [1] : vector<16x512xf32> to vector<16xf32>
    %46 = vector.shape_cast %45 : vector<16xf32> to vector<16x1xf32>
    %c0_33 = arith.constant 0 : index
    %c0_34 = arith.constant 0 : index
    %47 = vector.load %arg13[%c0_33, %c0_34] : memref<16x1xf32, #tpu.memory_space<vmem>>, vector<16x1xf32>
    tpu.vector_store %arg13[%c0_33, %c0_34], %46 {strides = array<i32>} : memref<16x1xf32, #tpu.memory_space<vmem>>, vector<16x1xf32>,
    return
  }
  func.func @transform_0(%arg0: i32) -> (i32, i32) {
    %c0_i32 = arith.constant 0 : i32
    %c0_i32_0 = arith.constant 0 : i32
    return %arg0, %c0_i32 : i32, i32
  }
  func.func @transform_1(%arg0: i32) -> (i32, i32) {
    %c0_i32 = arith.constant 0 : i32
    %c0_i32_0 = arith.constant 0 : i32
    %c0_i32_1 = arith.constant 0 : i32
    return %c0_i32, %c0_i32_0 : i32, i32
  }
  func.func @transform_2(%arg0: i32) -> (i32, i32) {
    %c0_i32 = arith.constant 0 : i32
    %c0_i32_0 = arith.constant 0 : i32
    %c0_i32_1 = arith.constant 0 : i32
    return %c0_i32, %c0_i32_0 : i32, i32
  }
  func.func @transform_3(%arg0: i32) -> (i32, i32) {
    %c0_i32 = arith.constant 0 : i32
    %c0_i32_0 = arith.constant 0 : i32
    %c0_i32_1 = arith.constant 0 : i32
    return %c0_i32, %c0_i32_0 : i32, i32
  }
  func.func @transform_4(%arg0: i32) -> (i32, i32) {
    %c0_i32 = arith.constant 0 : i32
    %c0_i32_0 = arith.constant 0 : i32
    %c0_i32_1 = arith.constant 0 : i32
    return %c0_i32, %c0_i32_0 : i32, i32
  }
  func.func @transform_5(%arg0: i32) -> (i32, i32) {
    %c0_i32 = arith.constant 0 : i32
    %c0_i32_0 = arith.constant 0 : i32
    %c0_i32_1 = arith.constant 0 : i32
    return %c0_i32, %c0_i32_0 : i32, i32
  }
  func.func @transform_6(%arg0: i32) -> (i32, i32) {
    %c0_i32 = arith.constant 0 : i32
    %c0_i32_0 = arith.constant 0 : i32
    %c0_i32_1 = arith.constant 0 : i32
    return %c0_i32, %c0_i32_0 : i32, i32
  }
  func.func @transform_7(%arg0: i32) -> (i32, i32) {
    %c0_i32 = arith.constant 0 : i32
    %c0_i32_0 = arith.constant 0 : i32
    %c0_i32_1 = arith.constant 0 : i32
    return %c0_i32, %c0_i32_0 : i32, i32
  }
  func.func @transform_8(%arg0: i32) -> (i32, i32) {
    %c0_i32 = arith.constant 0 : i32
    %c0_i32_0 = arith.constant 0 : i32
    %c0_i32_1 = arith.constant 0 : i32
    return %c0_i32, %c0_i32_0 : i32, i32
  }
  func.func @transform_9(%arg0: i32) -> (i32, i32) {
    %c0_i32 = arith.constant 0 : i32
    %c0_i32_0 = arith.constant 0 : i32
    %c0_i32_1 = arith.constant 0 : i32
    return %c0_i32, %c0_i32_0 : i32, i32
  }
  func.func @transform_10(%arg0: i32) -> (i32, i32) {
    %c0_i32 = arith.constant 0 : i32
    %c0_i32_0 = arith.constant 0 : i32
    %c0_i32_1 = arith.constant 0 : i32
    return %c0_i32, %c0_i32_0 : i32, i32
  }
  func.func @transform_11(%arg0: i32) -> (i32, i32) {
    %c0_i32 = arith.constant 0 : i32
    %c0_i32_0 = arith.constant 0 : i32
    %c0_i32_1 = arith.constant 0 : i32
    return %c0_i32, %c0_i32_0 : i32, i32
  }
  func.func @transform_12(%arg0: i32) -> (i32, i32) {
    %c0_i32 = arith.constant 0 : i32
    %c0_i32_0 = arith.constant 0 : i32
    return %arg0, %c0_i32 : i32, i32
  }
}

</mosaic_0001>

<llo_original>
// kernel: squeeze.1
$region0: #{squeeze.1}
  %s0 = inlined_call_operand.vmem [shape: f32[12], index: 0, kind: input, shape index: {}]
  %s1 = inlined_call_operand.vmem [shape: f32[2,6], index: 1, kind: output, shape index: {}]
  $region1: #{squeeze.1} parent=0
    #allocation0 [shape = 'u8[4096]{0}', space=vmem, size = 0x1000, scoped, tag = 'scoped mem for output reshape']
    #allocation1 [shape = 'u8[4096]{0}', space=vmem, size = 0x1000, scoped, tag = 'scoped mem for input reshape']
    %s3 = sshll.u32 1, 1
    %s4 = ssub.s32 %s3, 1
    %v5 = vld [vmem:[%s0] sm:%s4]
    %6 = vst [vmem:[#allocation1] sm:%s4] %v5
    %v7 = vld [vmem:[#allocation1] sm:$0x1]
    %vm8 = vcmask 48128
    %9 = vst.msk [vmem:[#allocation0] sm:$0x1] %vm8, %v7
    %v10 = vld [vmem:[#allocation1] sm:$0x1]
    %11 = vrot.lane.b32.xlu0 %v10, 122
    %v12 = vpop.permute.xlu0 %11
    %vm13 = vcmask 48128
    %s14 = scalar_lea.vmem [#allocation0], 1
    %15 = vst.msk [vmem:[%s14] sm:$0x1] %vm13, %v12
    %s17 = sshll.u32 1, 2
    %s18 = ssub.s32 %s17, 1
    %v20 = vld [vmem:[#allocation0] sm:%s18]
    %s21 = sshll.u32 1, 2
    %s22 = ssub.s32 %s21, 1
    %23 = vst [vmem:[%s1] sm:%s22] %v20

// kernel: ff_aware_mlp_energy_predictor.1
$region0: #{ff_aware_mlp_energy_predictor.1}
  #allocation0 [shape = 'u32[]', space=smem, size = 0x4, offset = 0x4, fixed_abs, tag = 'smem constant byte address 0x4 - core index']
  #allocation1 [shape = 'u32[144,128]{1,0:T(1,128)}', space=vmem, size = 0x12000, scoped, tag = 'internal scratch']
  %s0 = inlined_call_operand.vmem [shape: bf16[16,8], index: 0, kind: input, shape index: {}]
  %s1 = inlined_call_operand.vmem [shape: bf16[8,512], index: 1, kind: input, shape index: {}]
  %s2 = inlined_call_operand.vmem [shape: bf16[1,512], index: 2, kind: input, shape index: {}]
  %s3 = inlined_call_operand.hbm [shape: bf16[512,512], index: 3, kind: input, shape index: {}]
  %s4 = inlined_call_operand.vmem [shape: bf16[1,512], index: 4, kind: input, shape index: {}]
  %s5 = inlined_call_operand.hbm [shape: bf16[512,512], index: 5, kind: input, shape index: {}]
  %s6 = inlined_call_operand.vmem [shape: bf16[1,512], index: 6, kind: input, shape index: {}]
  %s7 = inlined_call_operand.hbm [shape: bf16[512,512], index: 7, kind: input, shape index: {}]
  %s8 = inlined_call_operand.vmem [shape: bf16[1,512], index: 8, kind: input, shape index: {}]
  %s9 = inlined_call_operand.hbm [shape: bf16[512,512], index: 9, kind: input, shape index: {}]
  %s10 = inlined_call_operand.vmem [shape: bf16[1,512], index: 10, kind: input, shape index: {}]
  %s11 = inlined_call_operand.vmem [shape: f32[1,512], index: 11, kind: input, shape index: {}]
  %s12 = inlined_call_operand.vmem [shape: f32[16,1], index: 12, kind: output, shape index: {}]
  %s13 = sld [smem:[#allocation0]]
  $region74: #{ff_aware_mlp_energy_predictor.1} parent=0
    _
  %s15 = ssub.s32 1, %s13
  %s16 = scalar_select 0, %s15, %s13
  $region1: #{ff_aware_mlp_energy_predictor.1} parent=0
    #allocation2 [shape = 'u8[524288]{0}', space=vmem, size = 0x80000, scoped, tag = 'input window, operand 3, single buffered']
    #allocation3 [shape = 's32[1]{0}', space=sflag, size = 0x4, scoped, tag = 'scoped memory for ff_aware_mlp_energy_predictor.1']
    #allocation4 [shape = 'u8[524288]{0}', space=vmem, size = 0x80000, scoped, tag = 'input window, operand 5, single buffered']
    #allocation5 [shape = 's32[1]{0}', space=sflag, size = 0x4, scoped, tag = 'scoped memory for ff_aware_mlp_energy_predictor.1']
    #allocation6 [shape = 'u8[524288]{0}', space=vmem, size = 0x80000, scoped, tag = 'input window, operand 7, single buffered']
    #allocation7 [shape = 'u8[524288]{0}', space=vmem, size = 0x80000, scoped, tag = 'input window, operand 9, single buffered']
    #allocation8 [shape = 's32[1]{0}', space=sflag, size = 0x4, scoped, tag = 'scoped memory for ff_aware_mlp_energy_predictor.1']
    %17 = vsyncpa [#allocation3], 0
    %18 = vsyncpa [#allocation5], 0
    %19 = vsyncpa [#allocation8], 0
    // Predicated region
    $region2: #{ff_aware_mlp_energy_predictor.1} parent=1 // pred_check
      _
    $region3: #{ff_aware_mlp_energy_predictor.1} parent=1 // pred_check_branch
      %21 = sbr.rel (0) target = $region5
    $region4: #{ff_aware_mlp_energy_predictor.1} parent=1 // pred_region
      _
    $region5: #{ff_aware_mlp_energy_predictor.1} parent=1 // pred_fallthru
      _
    // Predicated region
    $region6: #{ff_aware_mlp_energy_predictor.1} parent=1 // pred_check
      _
    $region7: #{ff_aware_mlp_energy_predictor.1} parent=1 // pred_check_branch
      %23 = sbr.rel (0) target = $region9
    $region8: #{ff_aware_mlp_energy_predictor.1} parent=1 // pred_region
      _
    $region9: #{ff_aware_mlp_energy_predictor.1} parent=1 // pred_fallthru
      _
    // Predicated region
    $region10: #{ff_aware_mlp_energy_predictor.1} parent=1 // pred_check
      _
    $region11: #{ff_aware_mlp_energy_predictor.1} parent=1 // pred_check_branch
      %25 = sbr.rel (0) target = $region13
    $region12: #{ff_aware_mlp_energy_predictor.1} parent=1 // pred_region
      _
    $region13: #{ff_aware_mlp_energy_predictor.1} parent=1 // pred_fallthru
      _
    // Predicated region
    $region14: #{ff_aware_mlp_energy_predictor.1} parent=1 // pred_check
      _
    $region15: #{ff_aware_mlp_energy_predictor.1} parent=1 // pred_check_branch
      %27 = sbr.rel (0) target = $region17
    $region16: #{ff_aware_mlp_energy_predictor.1} parent=1 // pred_region
      %s29 = ssub.s32 16384, 16384
      %30 = vsyncadd [#allocation3], %s29
      %s31 = sshll.u32 [#allocation2], 4
      %s32 = int_to_ptr.vmem [resolvable:$true] %s31
      %37 = dma.hbm_to_vmem [thread:$0]  %s3, 16384, %s32, [#allocation3], 256, 256, 16
    $region17: #{ff_aware_mlp_energy_predictor.1} parent=1 // pred_fallthru
      _
    // Predicated region
    $region18: #{ff_aware_mlp_energy_predictor.1} parent=1 // pred_check
      _
    $region19: #{ff_aware_mlp_energy_predictor.1} parent=1 // pred_check_branch
      %39 = sbr.rel (0) target = $region21
    $region20: #{ff_aware_mlp_energy_predictor.1} parent=1 // pred_region
      _
    $region21: #{ff_aware_mlp_energy_predictor.1} parent=1 // pred_fallthru
      _
    // Predicated region
    $region22: #{ff_aware_mlp_energy_predictor.1} parent=1 // pred_check
      _
    $region23: #{ff_aware_mlp_energy_predictor.1} parent=1 // pred_check_branch
      %41 = sbr.rel (0) target = $region25
    $region24: #{ff_aware_mlp_energy_predictor.1} parent=1 // pred_region
      %s43 = ssub.s32 16384, 16384
      %44 = vsyncadd [#allocation5], %s43
      %s45 = sshll.u32 [#allocation4], 4
      %s46 = int_to_ptr.vmem [resolvable:$true] %s45
      %51 = dma.hbm_to_vmem [thread:$0]  %s5, 16384, %s46, [#allocation5], 256, 256, 16
    $region25: #{ff_aware_mlp_energy_predictor.1} parent=1 // pred_fallthru
      _
    // Predicated region
    $region26: #{ff_aware_mlp_energy_predictor.1} parent=1 // pred_check
      _
    $region27: #{ff_aware_mlp_energy_predictor.1} parent=1 // pred_check_branch
      %53 = sbr.rel (0) target = $region29
    $region28: #{ff_aware_mlp_energy_predictor.1} parent=1 // pred_region
      _
    $region29: #{ff_aware_mlp_energy_predictor.1} parent=1 // pred_fallthru
      _
    // Predicated region
    $region30: #{ff_aware_mlp_energy_predictor.1} parent=1 // pred_check
      _
    $region31: #{ff_aware_mlp_energy_predictor.1} parent=1 // pred_check_branch
      %55 = sbr.rel (0) target = $region33
    $region32: #{ff_aware_mlp_energy_predictor.1} parent=1 // pred_region
      %s57 = ssub.s32 16384, 16384
      %58 = vsyncadd [#allocation5], %s57
      %s59 = sshll.u32 [#allocation6], 4
      %s60 = int_to_ptr.vmem [resolvable:$true] %s59
      %65 = dma.hbm_to_vmem [thread:$0]  %s7, 16384, %s60, [#allocation5], 256, 256, 16
    $region33: #{ff_aware_mlp_energy_predictor.1} parent=1 // pred_fallthru
      _
    // Predicated region
    $region34: #{ff_aware_mlp_energy_predictor.1} parent=1 // pred_check
      _
    $region35: #{ff_aware_mlp_energy_predictor.1} parent=1 // pred_check_branch
      %67 = sbr.rel (0) target = $region37
    $region36: #{ff_aware_mlp_energy_predictor.1} parent=1 // pred_region
      _
    $region37: #{ff_aware_mlp_energy_predictor.1} parent=1 // pred_fallthru
      _
    // Predicated region
    $region38: #{ff_aware_mlp_energy_predictor.1} parent=1 // pred_check
      _
    $region39: #{ff_aware_mlp_energy_predictor.1} parent=1 // pred_check_branch
      %69 = sbr.rel (0) target = $region41
    $region40: #{ff_aware_mlp_energy_predictor.1} parent=1 // pred_region
      %s71 = ssub.s32 16384, 16384
      %72 = vsyncadd [#allocation8], %s71
      %s73 = sshll.u32 [#allocation7], 4
      %s74 = int_to_ptr.vmem [resolvable:$true] %s73
      %79 = dma.hbm_to_vmem [thread:$0]  %s9, 16384, %s74, [#allocation8], 256, 256, 16
    $region41: #{ff_aware_mlp_energy_predictor.1} parent=1 // pred_fallthru
      _
    // Predicated region
    $region42: #{ff_aware_mlp_energy_predictor.1} parent=1 // pred_check
      _
    $region43: #{ff_aware_mlp_energy_predictor.1} parent=1 // pred_check_branch
      %81 = sbr.rel (0) target = $region45
    $region44: #{ff_aware_mlp_energy_predictor.1} parent=1 // pred_region
      _
    $region45: #{ff_aware_mlp_energy_predictor.1} parent=1 // pred_fallthru
      _
    // Predicated region
    $region46: #{ff_aware_mlp_energy_predictor.1} parent=1 // pred_check
      _
    $region47: #{ff_aware_mlp_energy_predictor.1} parent=1 // pred_check_branch
      %83 = sbr.rel (0) target = $region49
    $region48: #{ff_aware_mlp_energy_predictor.1} parent=1 // pred_region
      _
    $region49: #{ff_aware_mlp_energy_predictor.1} parent=1 // pred_fallthru
      _
    // Predicated region
    $region50: #{ff_aware_mlp_energy_predictor.1} parent=1 // pred_check
      _
    $region51: #{ff_aware_mlp_energy_predictor.1} parent=1 // pred_check_branch
      %85 = sbr.rel (0) target = $region53
    $region52: #{ff_aware_mlp_energy_predictor.1} parent=1 // pred_region
      %86 = dma.done [#allocation3], 16384
    $region53: #{ff_aware_mlp_energy_predictor.1} parent=1 // pred_fallthru
      _
    // Predicated region
    $region54: #{ff_aware_mlp_energy_predictor.1} parent=1 // pred_check
      _
    $region55: #{ff_aware_mlp_energy_predictor.1} parent=1 // pred_check_branch
      %88 = sbr.rel (0) target = $region57
    $region56: #{ff_aware_mlp_energy_predictor.1} parent=1 // pred_region
      %89 = dma.done [#allocation5], 16384
    $region57: #{ff_aware_mlp_energy_predictor.1} parent=1 // pred_fallthru
      _
    // Predicated region
    $region58: #{ff_aware_mlp_energy_predictor.1} parent=1 // pred_check
      _
    $region59: #{ff_aware_mlp_energy_predictor.1} parent=1 // pred_check_branch
      %91 = sbr.rel (0) target = $region61
    $region60: #{ff_aware_mlp_energy_predictor.1} parent=1 // pred_region
      %92 = dma.done [#allocation5], 16384
    $region61: #{ff_aware_mlp_energy_predictor.1} parent=1 // pred_fallthru
      _
    // Predicated region
    $region62: #{ff_aware_mlp_energy_predictor.1} parent=1 // pred_check
      _
    $region63: #{ff_aware_mlp_energy_predictor.1} parent=1 // pred_check_branch
      %94 = sbr.rel (0) target = $region65
    $region64: #{ff_aware_mlp_energy_predictor.1} parent=1 // pred_region
      %95 = dma.done [#allocation8], 16384
    $region65: #{ff_aware_mlp_energy_predictor.1} parent=1 // pred_fallthru
      _
    %v97 = vld [vmem:[%s1] sm:$0xff]
    %v98 = vld [vmem:[%s1 + $0x8] sm:$0xff]
    %v99 = vld [vmem:[%s2] sm:$0xf]
    %v100 = vld [vmem:[%s11] sm:$0xf]
    %v101 = vld [vmem:[%s0] sm:$0xf]
    %v102 = vld [vmem:[%s0 + $0x4] sm:$0xf]
    %v105 = vunpack.c.l.b16 %v101
    %v106 = vunpack.c.l.b16 %v102
    %v107 = vpack.c.b16 %v106, %v105
    %v110 = vunpack.c.l.b16 %v97
    %v111 = vunpack.c.h.b16 %v97
    %v112 = vunpack.c.l.b16 %v98
    %v113 = vunpack.c.h.b16 %v98
    %v114 = vpack.c.b16 %v110, %v110
    %v115 = vpack.c.b16 %v111, %v111
    %v116 = vpack.c.b16 %v112, %v112
    %v117 = vpack.c.b16 %v113, %v113
    %vm118 = vcmask 64512
    %v120 = vsel %vm118, %v107, 0
    %vm122 = vcmask 1043456
    %v124 = vsel %vm122, %v114, 0
    %v127 = vsel %vm122, %v115, 0
    %v130 = vsel %vm122, %v116, 0
    %v133 = vsel %vm122, %v117, 0
    %135 = vmatprep.subr.bf16.mxu0 0
    %136 = vmatpush1.bf16.msra.mxu0 0
    %137 = vmatprep.subr.bf16.mxu0 0
    %138 = vmatpush1.bf16.msra.mxu0 0
    %139 = vmatprep.subr.bf16.mxu0 0
    %140 = vmatpush1.bf16.msra.mxu0 0
    %141 = vmatprep.subr.bf16.mxu0 0
    %142 = vmatpush1.bf16.msra.mxu0 0
    %143 = vmatprep.subr.bf16.mxu0 0
    %144 = vmatpush1.bf16.msra.mxu0 0
    %145 = vmatprep.subr.bf16.mxu0 0
    %146 = vmatpush1.bf16.msra.mxu0 0
    %147 = vmatprep.subr.bf16.mxu0 0
    %148 = vmatpush1.bf16.msra.mxu0 0
    %149 = vmatprep.subr.bf16.mxu0 %v127
    %150 = vmatpush1.bf16.msra.mxu0 %v124
    %151 = vmatprep.subr.bf16.mxu0 0
    %152 = vmatpush2.bf16.msra.mxu0 0
    %153 = vmatprep.subr.bf16.mxu0 0
    %154 = vmatpush2.bf16.msra.mxu0 0
    %155 = vmatprep.subr.bf16.mxu0 0
    %156 = vmatpush2.bf16.msra.mxu0 0
    %157 = vmatprep.subr.bf16.mxu0 0
    %158 = vmatpush2.bf16.msra.mxu0 0
    %159 = vmatprep.subr.bf16.mxu0 0
    %160 = vmatpush2.bf16.msra.mxu0 0
    %161 = vmatprep.subr.bf16.mxu0 0
    %162 = vmatpush2.bf16.msra.mxu0 0
    %163 = vmatprep.subr.bf16.mxu0 0
    %164 = vmatpush2.bf16.msra.mxu0 0
    %165 = vmatprep.subr.bf16.mxu0 0
    %166 = vmatpush2.bf16.msra.mxu0 0
    %167 = vmatprep.mubr.bf16.mxu0 0
    %168 = vmatmul.mubr.bf16.gmra.mxu0 %v120
    %v169 = vpop.f32.mrf.mxu0
    %v170 = vadd.f32 0.0, %v169
    %v171 = vpop.f32.mrf.mxu0
    %v172 = vadd.f32 0.0, %v171
    %v173 = vpop.f32.mrf.mxu0
    %v174 = vadd.f32 0.0, %v173
    %v175 = vpop.f32.mrf.mxu0
    %v176 = vadd.f32 0.0, %v175
    %177 = vdwg.mxu0
    %178 = vmatprep.subr.bf16.mxu0 0
    %179 = vmatpush1.bf16.msra.mxu0 0
    %180 = vmatprep.subr.bf16.mxu0 0
    %181 = vmatpush1.bf16.msra.mxu0 0
    %182 = vmatprep.subr.bf16.mxu0 0
    %183 = vmatpush1.bf16.msra.mxu0 0
    %184 = vmatprep.subr.bf16.mxu0 0
    %185 = vmatpush1.bf16.msra.mxu0 0
    %186 = vmatprep.subr.bf16.mxu0 0
    %187 = vmatpush1.bf16.msra.mxu0 0
    %188 = vmatprep.subr.bf16.mxu0 0
    %189 = vmatpush1.bf16.msra.mxu0 0
    %190 = vmatprep.subr.bf16.mxu0 0
    %191 = vmatpush1.bf16.msra.mxu0 0
    %192 = vmatprep.subr.bf16.mxu0 %v133
    %193 = vmatpush1.bf16.msra.mxu0 %v130
    %194 = vmatprep.subr.bf16.mxu0 0
    %195 = vmatpush2.bf16.msra.mxu0 0
    %196 = vmatprep.subr.bf16.mxu0 0
    %197 = vmatpush2.bf16.msra.mxu0 0
    %198 = vmatprep.subr.bf16.mxu0 0
    %199 = vmatpush2.bf16.msra.mxu0 0
    %200 = vmatprep.subr.bf16.mxu0 0
    %201 = vmatpush2.bf16.msra.mxu0 0
    %202 = vmatprep.subr.bf16.mxu0 0
    %203 = vmatpush2.bf16.msra.mxu0 0
    %204 = vmatprep.subr.bf16.mxu0 0
    %205 = vmatpush2.bf16.msra.mxu0 0
    %206 = vmatprep.subr.bf16.mxu0 0
    %207 = vmatpush2.bf16.msra.mxu0 0
    %208 = vmatprep.subr.bf16.mxu0 0
    %209 = vmatpush2.bf16.msra.mxu0 0
    %210 = vmatprep.mubr.bf16.mxu0 0
    %211 = vmatmul.mubr.bf16.gmra.mxu0 %v120
    %v212 = vpop.f32.mrf.mxu0
    %v213 = vadd.f32 0.0, %v212
    %v214 = vpop.f32.mrf.mxu0
    %v215 = vadd.f32 0.0, %v214
    %v216 = vpop.f32.mrf.mxu0
    %v217 = vadd.f32 0.0, %v216
    %v218 = vpop.f32.mrf.mxu0
    %v219 = vadd.f32 0.0, %v218
    %220 = vdwg.mxu0
    %v221 = vpack.c.bf16 %v174, %v170
    %v222 = vpack.c.bf16 %v176, %v172
    %v223 = vpack.c.bf16 %v217, %v213
    %v224 = vpack.c.bf16 %v219, %v215
    %v227 = vunpack.c.l.s4 1966171168
    %v228 = vunpack.c.0.s8 %v227
    %v229 = vlaneseq
    %v230 = vshrl.u32 %v229, 7
    %v231 = vsub.s32 %v228, %v230
    %v232 = vrot.slane %v99, %v231
    %v233 = vcombine.high %v232, %v232
    %v235 = vunpack.c.l.s4 1966171168
    %v236 = vunpack.c.0.s8 %v235
    %v237 = vlaneseq
    %v238 = vshrl.u32 %v237, 7
    %v239 = vsub.s32 %v236, %v238
    %v240 = vrot.slane %v232, %v239
    %v242 = vunpack.c.l.s4 1966171168
    %v243 = vunpack.c.0.s8 %v242
    %v244 = vlaneseq
    %v245 = vshrl.u32 %v244, 7
    %v246 = vsub.s32 %v243, %v245
    %v247 = vrot.slane %v233, %v246
    %v248 = vcombine.high %v240, %v240
    %v249 = vcombine.high %v247, %v247
    %v251 = vpack.i.b16 %v240, %v240
    %v253 = vlaneseq
    %v254 = vshrl.u32 %v253, 7
    %v255 = vsub.s32 0, %v254
    %v256 = vrot.slane %v251, %v255
    %v258 = vpack.i.b16 %v247, %v247
    %v260 = vlaneseq
    %v261 = vshrl.u32 %v260, 7
    %v262 = vsub.s32 0, %v261
    %v263 = vrot.slane %v258, %v262
    %v265 = vpack.i.b16 %v248, %v248
    %v267 = vlaneseq
    %v268 = vshrl.u32 %v267, 7
    %v269 = vsub.s32 0, %v268
    %v270 = vrot.slane %v265, %v269
    %v272 = vpack.i.b16 %v249, %v249
    %v274 = vlaneseq
    %v275 = vshrl.u32 %v274, 7
    %v276 = vsub.s32 0, %v275
    %v277 = vrot.slane %v272, %v276
    %v278 = vadd.bf16 %v221, %v256
    %v279 = vadd.bf16 %v222, %v263
    %v280 = vadd.bf16 %v223, %v270
    %v281 = vadd.bf16 %v224, %v277
    %v282 = vmax.bf16 %v278, 0
    %v283 = vmax.bf16 %v279, 0
    %v284 = vmax.bf16 %v280, 0
    %v285 = vmax.bf16 %v281, 0
    %v286 = vld [vmem:[#allocation2] sm:$0xff]
    %v287 = vld [vmem:[#allocation2 + $0x8] sm:$0xff]
    %v288 = vld [vmem:[#allocation2 + $0x10] sm:$0xff]
    %v289 = vld [vmem:[#allocation2 + $0x18] sm:$0xff]
    %v290 = vld [vmem:[#allocation2 + $0x20] sm:$0xff]
    %v291 = vld [vmem:[#allocation2 + $0x28] sm:$0xff]
    %v292 = vld [vmem:[#allocation2 + $0x30] sm:$0xff]
    %v293 = vld [vmem:[#allocation2 + $0x38] sm:$0xff]
    %v294 = vld [vmem:[#allocation2 + $0x40] sm:$0xff]
    %v295 = vld [vmem:[#allocation2 + $0x48] sm:$0xff]
    %v296 = vld [vmem:[#allocation2 + $0x50] sm:$0xff]
    %v297 = vld [vmem:[#allocation2 + $0x58] sm:$0xff]
    %v298 = vld [vmem:[#allocation2 + $0x60] sm:$0xff]
    %v299 = vld [vmem:[#allocation2 + $0x68] sm:$0xff]
    %v300 = vld [vmem:[#allocation2 + $0x70] sm:$0xff]
    %v301 = vld [vmem:[#allocation2 + $0x78] sm:$0xff]
    %v302 = vld [vmem:[#allocation2 + $0x80] sm:$0xff]
    %v303 = vld [vmem:[#allocation2 + $0x88] sm:$0xff]
    %v304 = vld [vmem:[#allocation2 + $0x90] sm:$0xff]
    %v305 = vld [vmem:[#allocation2 + $0x98] sm:$0xff]
    %v306 = vld [vmem:[#allocation2 + $0xa0] sm:$0xff]
    %v307 = vld [vmem:[#allocation2 + $0xa8] sm:$0xff]
    %v308 = vld [vmem:[#allocation2 + $0xb0] sm:$0xff]
    %v309 = vld [vmem:[#allocation2 + $0xb8] sm:$0xff]
    %v310 = vld [vmem:[#allocation2 + $0xc0] sm:$0xff]
    %v311 = vld [vmem:[#allocation2 + $0xc8] sm:$0xff]
    %v312 = vld [vmem:[#allocation2 + $0xd0] sm:$0xff]
    %v313 = vld [vmem:[#allocation2 + $0xd8] sm:$0xff]
    %v314 = vld [vmem:[#allocation2 + $0xe0] sm:$0xff]
    %v315 = vld [vmem:[#allocation2 + $0xe8] sm:$0xff]
    %v316 = vld [vmem:[#allocation2 + $0xf0] sm:$0xff]
    %v317 = vld [vmem:[#allocation2 + $0xf8] sm:$0xff]
    %v318 = vld [vmem:[#allocation2 + $0x100] sm:$0xff]
    %v319 = vld [vmem:[#allocation2 + $0x108] sm:$0xff]
    %v320 = vld [vmem:[#allocation2 + $0x110] sm:$0xff]
    %v321 = vld [vmem:[#allocation2 + $0x118] sm:$0xff]
    %v322 = vld [vmem:[#allocation2 + $0x120] sm:$0xff]
    %v323 = vld [vmem:[#allocation2 + $0x128] sm:$0xff]
    %v324 = vld [vmem:[#allocation2 + $0x130] sm:$0xff]
    %v325 = vld [vmem:[#allocation2 + $0x138] sm:$0xff]
    %v326 = vld [vmem:[#allocation2 + $0x140] sm:$0xff]
    %v327 = vld [vmem:[#allocation2 + $0x148] sm:$0xff]
    %v328 = vld [vmem:[#allocation2 + $0x150] sm:$0xff]
    %v329 = vld [vmem:[#allocation2 + $0x158] sm:$0xff]
    %v330 = vld [vmem:[#allocation2 + $0x160] sm:$0xff]
    %v331 = vld [vmem:[#allocation2 + $0x168] sm:$0xff]
    %v332 = vld [vmem:[#allocation2 + $0x170] sm:$0xff]
    %v333 = vld [vmem:[#allocation2 + $0x178] sm:$0xff]
    %v334 = vld [vmem:[#allocation2 + $0x180] sm:$0xff]
    %v335 = vld [vmem:[#allocation2 + $0x188] sm:$0xff]
    %v336 = vld [vmem:[#allocation2 + $0x190] sm:$0xff]
    %v337 = vld [vmem:[#allocation2 + $0x198] sm:$0xff]
    %v338 = vld [vmem:[#allocation2 + $0x1a0] sm:$0xff]
    %v339 = vld [vmem:[#allocation2 + $0x1a8] sm:$0xff]
    %v340 = vld [vmem:[#allocation2 + $0x1b0] sm:$0xff]
    %v341 = vld [vmem:[#allocation2 + $0x1b8] sm:$0xff]
    %v342 = vld [vmem:[#allocation2 + $0x1c0] sm:$0xff]
    %v343 = vld [vmem:[#allocation2 + $0x1c8] sm:$0xff]
    %v344 = vld [vmem:[#allocation2 + $0x1d0] sm:$0xff]
    %v345 = vld [vmem:[#allocation2 + $0x1d8] sm:$0xff]
    %v346 = vld [vmem:[#allocation2 + $0x1e0] sm:$0xff]
    %v347 = vld [vmem:[#allocation2 + $0x1e8] sm:$0xff]
    %v348 = vld [vmem:[#allocation2 + $0x1f0] sm:$0xff]
    %v349 = vld [vmem:[#allocation2 + $0x1f8] sm:$0xff]
    %v350 = vld [vmem:[#allocation2 + $0x200] sm:$0xff]
    %v351 = vld [vmem:[#allocation2 + $0x208] sm:$0xff]
    %v352 = vld [vmem:[#allocation2 + $0x210] sm:$0xff]
    %v353 = vld [vmem:[#allocation2 + $0x218] sm:$0xff]
    %v354 = vld [vmem:[#allocation2 + $0x220] sm:$0xff]
    %v355 = vld [vmem:[#allocation2 + $0x228] sm:$0xff]
    %v356 = vld [vmem:[#allocation2 + $0x230] sm:$0xff]
    %v357 = vld [vmem:[#allocation2 + $0x238] sm:$0xff]
    %v358 = vld [vmem:[#allocation2 + $0x240] sm:$0xff]
    %v359 = vld [vmem:[#allocation2 + $0x248] sm:$0xff]
    %v360 = vld [vmem:[#allocation2 + $0x250] sm:$0xff]
    %v361 = vld [vmem:[#allocation2 + $0x258] sm:$0xff]
    %v362 = vld [vmem:[#allocation2 + $0x260] sm:$0xff]
    %v363 = vld [vmem:[#allocation2 + $0x268] sm:$0xff]
    %v364 = vld [vmem:[#allocation2 + $0x270] sm:$0xff]
    %v365 = vld [vmem:[#allocation2 + $0x278] sm:$0xff]
    %v366 = vld [vmem:[#allocation2 + $0x280] sm:$0xff]
    %v367 = vld [vmem:[#allocation2 + $0x288] sm:$0xff]
    %v368 = vld [vmem:[#allocation2 + $0x290] sm:$0xff]
    %v369 = vld [vmem:[#allocation2 + $0x298] sm:$0xff]
    %v370 = vld [vmem:[#allocation2 + $0x2a0] sm:$0xff]
    %v371 = vld [vmem:[#allocation2 + $0x2a8] sm:$0xff]
    %v372 = vld [vmem:[#allocation2 + $0x2b0] sm:$0xff]
    %v373 = vld [vmem:[#allocation2 + $0x2b8] sm:$0xff]
    %v374 = vld [vmem:[#allocation2 + $0x2c0] sm:$0xff]
    %v375 = vld [vmem:[#allocation2 + $0x2c8] sm:$0xff]
    %v376 = vld [vmem:[#allocation2 + $0x2d0] sm:$0xff]
    %v377 = vld [vmem:[#allocation2 + $0x2d8] sm:$0xff]
    %v378 = vld [vmem:[#allocation2 + $0x2e0] sm:$0xff]
    %v379 = vld [vmem:[#allocation2 + $0x2e8] sm:$0xff]
    %v380 = vld [vmem:[#allocation2 + $0x2f0] sm:$0xff]
    %v381 = vld [vmem:[#allocation2 + $0x2f8] sm:$0xff]
    %v382 = vld [vmem:[#allocation2 + $0x300] sm:$0xff]
    %v383 = vld [vmem:[#allocation2 + $0x308] sm:$0xff]
    %v384 = vld [vmem:[#allocation2 + $0x310] sm:$0xff]
    %v385 = vld [vmem:[#allocation2 + $0x318] sm:$0xff]
    %v386 = vld [vmem:[#allocation2 + $0x320] sm:$0xff]
    %v387 = vld [vmem:[#allocation2 + $0x328] sm:$0xff]
    %v388 = vld [vmem:[#allocation2 + $0x330] sm:$0xff]
    %v389 = vld [vmem:[#allocation2 + $0x338] sm:$0xff]
    %v390 = vld [vmem:[#allocation2 + $0x340] sm:$0xff]
    %v391 = vld [vmem:[#allocation2 + $0x348] sm:$0xff]
    %v392 = vld [vmem:[#allocation2 + $0x350] sm:$0xff]
    %v393 = vld [vmem:[#allocation2 + $0x358] sm:$0xff]
    %v394 = vld [vmem:[#allocation2 + $0x360] sm:$0xff]
    %v395 = vld [vmem:[#allocation2 + $0x368] sm:$0xff]
    %v396 = vld [vmem:[#allocation2 + $0x370] sm:$0xff]
    %v397 = vld [vmem:[#allocation2 + $0x378] sm:$0xff]
    %v398 = vld [vmem:[#allocation2 + $0x380] sm:$0xff]
    %v399 = vld [vmem:[#allocation2 + $0x388] sm:$0xff]
    %v400 = vld [vmem:[#allocation2 + $0x390] sm:$0xff]
    %v401 = vld [vmem:[#allocation2 + $0x398] sm:$0xff]
    %v402 = vld [vmem:[#allocation2 + $0x3a0] sm:$0xff]
    %v403 = vld [vmem:[#allocation2 + $0x3a8] sm:$0xff]
    %v404 = vld [vmem:[#allocation2 + $0x3b0] sm:$0xff]
    %v405 = vld [vmem:[#allocation2 + $0x3b8] sm:$0xff]
    %v406 = vld [vmem:[#allocation2 + $0x3c0] sm:$0xff]
    %v407 = vld [vmem:[#allocation2 + $0x3c8] sm:$0xff]
    %v408 = vld [vmem:[#allocation2 + $0x3d0] sm:$0xff]
    %v409 = vld [vmem:[#allocation2 + $0x3d8] sm:$0xff]
    %v410 = vld [vmem:[#allocation2 + $0x3e0] sm:$0xff]
    %v411 = vld [vmem:[#allocation2 + $0x3e8] sm:$0xff]
    %v412 = vld [vmem:[#allocation2 + $0x3f0] sm:$0xff]
    %v413 = vld [vmem:[#allocation2 + $0x3f8] sm:$0xff]
    %v414 = vld [vmem:[%s4] sm:$0xf]
    %v543 = vunpack.c.l.b16 %v286
    %v544 = vunpack.c.h.b16 %v286
    %v545 = vunpack.c.l.b16 %v287
    %v546 = vunpack.c.h.b16 %v287
    %v547 = vunpack.c.l.b16 %v288
    %v548 = vunpack.c.h.b16 %v288
    %v549 = vunpack.c.l.b16 %v289
    %v550 = vunpack.c.h.b16 %v289
    %v551 = vunpack.c.l.b16 %v290
    %v552 = vunpack.c.h.b16 %v290
    %v553 = vunpack.c.l.b16 %v291
    %v554 = vunpack.c.h.b16 %v291
    %v555 = vunpack.c.l.b16 %v292
    %v556 = vunpack.c.h.b16 %v292
    %v557 = vunpack.c.l.b16 %v293
    %v558 = vunpack.c.h.b16 %v293
    %v559 = vunpack.c.l.b16 %v294
    %v560 = vunpack.c.h.b16 %v294
    %v561 = vunpack.c.l.b16 %v295
    %v562 = vunpack.c.h.b16 %v295
    %v563 = vunpack.c.l.b16 %v296
    %v564 = vunpack.c.h.b16 %v296
    %v565 = vunpack.c.l.b16 %v297
    %v566 = vunpack.c.h.b16 %v297
    %v567 = vunpack.c.l.b16 %v298
    %v568 = vunpack.c.h.b16 %v298
    %v569 = vunpack.c.l.b16 %v299
    %v570 = vunpack.c.h.b16 %v299
    %v571 = vunpack.c.l.b16 %v300
    %v572 = vunpack.c.h.b16 %v300
    %v573 = vunpack.c.l.b16 %v301
    %v574 = vunpack.c.h.b16 %v301
    %v575 = vunpack.c.l.b16 %v302
    %v576 = vunpack.c.h.b16 %v302
    %v577 = vunpack.c.l.b16 %v303
    %v578 = vunpack.c.h.b16 %v303
    %v579 = vunpack.c.l.b16 %v304
    %v580 = vunpack.c.h.b16 %v304
    %v581 = vunpack.c.l.b16 %v305
    %v582 = vunpack.c.h.b16 %v305
    %v583 = vunpack.c.l.b16 %v306
    %v584 = vunpack.c.h.b16 %v306
    %v585 = vunpack.c.l.b16 %v307
    %v586 = vunpack.c.h.b16 %v307
    %v587 = vunpack.c.l.b16 %v308
    %v588 = vunpack.c.h.b16 %v308
    %v589 = vunpack.c.l.b16 %v309
    %v590 = vunpack.c.h.b16 %v309
    %v591 = vunpack.c.l.b16 %v310
    %v592 = vunpack.c.h.b16 %v310
    %v593 = vunpack.c.l.b16 %v311
    %v594 = vunpack.c.h.b16 %v311
    %v595 = vunpack.c.l.b16 %v312
    %v596 = vunpack.c.h.b16 %v312
    %v597 = vunpack.c.l.b16 %v313
    %v598 = vunpack.c.h.b16 %v313
    %v599 = vunpack.c.l.b16 %v314
    %v600 = vunpack.c.h.b16 %v314
    %v601 = vunpack.c.l.b16 %v315
    %v602 = vunpack.c.h.b16 %v315
    %v603 = vunpack.c.l.b16 %v316
    %v604 = vunpack.c.h.b16 %v316
    %v605 = vunpack.c.l.b16 %v317
    %v606 = vunpack.c.h.b16 %v317
    %v607 = vunpack.c.l.b16 %v318
    %v608 = vunpack.c.h.b16 %v318
    %v609 = vunpack.c.l.b16 %v319
    %v610 = vunpack.c.h.b16 %v319
    %v611 = vunpack.c.l.b16 %v320
    %v612 = vunpack.c.h.b16 %v320
    %v613 = vunpack.c.l.b16 %v321
    %v614 = vunpack.c.h.b16 %v321
    %v615 = vunpack.c.l.b16 %v322
    %v616 = vunpack.c.h.b16 %v322
    %v617 = vunpack.c.l.b16 %v323
    %v618 = vunpack.c.h.b16 %v323
    %v619 = vunpack.c.l.b16 %v324
    %v620 = vunpack.c.h.b16 %v324
    %v621 = vunpack.c.l.b16 %v325
    %v622 = vunpack.c.h.b16 %v325
    %v623 = vunpack.c.l.b16 %v326
    %v624 = vunpack.c.h.b16 %v326
    %v625 = vunpack.c.l.b16 %v327
    %v626 = vunpack.c.h.b16 %v327
    %v627 = vunpack.c.l.b16 %v328
    %v628 = vunpack.c.h.b16 %v328
    %v629 = vunpack.c.l.b16 %v329
    %v630 = vunpack.c.h.b16 %v329
    %v631 = vunpack.c.l.b16 %v330
    %v632 = vunpack.c.h.b16 %v330
    %v633 = vunpack.c.l.b16 %v331
    %v634 = vunpack.c.h.b16 %v331
    %v635 = vunpack.c.l.b16 %v332
    %v636 = vunpack.c.h.b16 %v332
    %v637 = vunpack.c.l.b16 %v333
    %v638 = vunpack.c.h.b16 %v333
    %v639 = vunpack.c.l.b16 %v334
    %v640 = vunpack.c.h.b16 %v334
    %v641 = vunpack.c.l.b16 %v335
    %v642 = vunpack.c.h.b16 %v335
    %v643 = vunpack.c.l.b16 %v336
    %v644 = vunpack.c.h.b16 %v336
    %v645 = vunpack.c.l.b16 %v337
    %v646 = vunpack.c.h.b16 %v337
    %v647 = vunpack.c.l.b16 %v338
    %v648 = vunpack.c.h.b16 %v338
    %v649 = vunpack.c.l.b16 %v339
    %v650 = vunpack.c.h.b16 %v339
    %v651 = vunpack.c.l.b16 %v340
    %v652 = vunpack.c.h.b16 %v340
    %v653 = vunpack.c.l.b16 %v341
    %v654 = vunpack.c.h.b16 %v341
    %v655 = vunpack.c.l.b16 %v342
    %v656 = vunpack.c.h.b16 %v342
    %v657 = vunpack.c.l.b16 %v343
    %v658 = vunpack.c.h.b16 %v343
    %v659 = vunpack.c.l.b16 %v344
    %v660 = vunpack.c.h.b16 %v344
    %v661 = vunpack.c.l.b16 %v345
    %v662 = vunpack.c.h.b16 %v345
    %v663 = vunpack.c.l.b16 %v346
    %v664 = vunpack.c.h.b16 %v346
    %v665 = vunpack.c.l.b16 %v347
    %v666 = vunpack.c.h.b16 %v347
    %v667 = vunpack.c.l.b16 %v348
    %v668 = vunpack.c.h.b16 %v348
    %v669 = vunpack.c.l.b16 %v349
    %v670 = vunpack.c.h.b16 %v349
    %v671 = vunpack.c.l.b16 %v350
    %v672 = vunpack.c.h.b16 %v350
    %v673 = vunpack.c.l.b16 %v351
    %v674 = vunpack.c.h.b16 %v351
    %v675 = vunpack.c.l.b16 %v352
    %v676 = vunpack.c.h.b16 %v352
    %v677 = vunpack.c.l.b16 %v353
    %v678 = vunpack.c.h.b16 %v353
    %v679 = vunpack.c.l.b16 %v354
    %v680 = vunpack.c.h.b16 %v354
    %v681 = vunpack.c.l.b16 %v355
    %v682 = vunpack.c.h.b16 %v355
    %v683 = vunpack.c.l.b16 %v356
    %v684 = vunpack.c.h.b16 %v356
    %v685 = vunpack.c.l.b16 %v357
    %v686 = vunpack.c.h.b16 %v357
    %v687 = vunpack.c.l.b16 %v358
    %v688 = vunpack.c.h.b16 %v358
    %v689 = vunpack.c.l.b16 %v359
    %v690 = vunpack.c.h.b16 %v359
    %v691 = vunpack.c.l.b16 %v360
    %v692 = vunpack.c.h.b16 %v360
    %v693 = vunpack.c.l.b16 %v361
    %v694 = vunpack.c.h.b16 %v361
    %v695 = vunpack.c.l.b16 %v362
    %v696 = vunpack.c.h.b16 %v362
    %v697 = vunpack.c.l.b16 %v363
    %v698 = vunpack.c.h.b16 %v363
    %v699 = vunpack.c.l.b16 %v364
    %v700 = vunpack.c.h.b16 %v364
    %v701 = vunpack.c.l.b16 %v365
    %v702 = vunpack.c.h.b16 %v365
    %v703 = vunpack.c.l.b16 %v366
    %v704 = vunpack.c.h.b16 %v366
    %v705 = vunpack.c.l.b16 %v367
    %v706 = vunpack.c.h.b16 %v367
    %v707 = vunpack.c.l.b16 %v368
    %v708 = vunpack.c.h.b16 %v368
    %v709 = vunpack.c.l.b16 %v369
    %v710 = vunpack.c.h.b16 %v369
    %v711 = vunpack.c.l.b16 %v370
    %v712 = vunpack.c.h.b16 %v370
    %v713 = vunpack.c.l.b16 %v371
    %v714 = vunpack.c.h.b16 %v371
    %v715 = vunpack.c.l.b16 %v372
    %v716 = vunpack.c.h.b16 %v372
    %v717 = vunpack.c.l.b16 %v373
    %v718 = vunpack.c.h.b16 %v373
    %v719 = vunpack.c.l.b16 %v374
    %v720 = vunpack.c.h.b16 %v374
    %v721 = vunpack.c.l.b16 %v375
    %v722 = vunpack.c.h.b16 %v375
    %v723 = vunpack.c.l.b16 %v376
    %v724 = vunpack.c.h.b16 %v376
    %v725 = vunpack.c.l.b16 %v377
    %v726 = vunpack.c.h.b16 %v377
    %v727 = vunpack.c.l.b16 %v378
    %v728 = vunpack.c.h.b16 %v378
    %v729 = vunpack.c.l.b16 %v379
    %v730 = vunpack.c.h.b16 %v379
    %v731 = vunpack.c.l.b16 %v380
    %v732 = vunpack.c.h.b16 %v380
    %v733 = vunpack.c.l.b16 %v381
    %v734 = vunpack.c.h.b16 %v381
    %v735 = vunpack.c.l.b16 %v382
    %v736 = vunpack.c.h.b16 %v382
    %v737 = vunpack.c.l.b16 %v383
    %v738 = vunpack.c.h.b16 %v383
    %v739 = vunpack.c.l.b16 %v384
    %v740 = vunpack.c.h.b16 %v384
    %v741 = vunpack.c.l.b16 %v385
    %v742 = vunpack.c.h.b16 %v385
    %v743 = vunpack.c.l.b16 %v386
    %v744 = vunpack.c.h.b16 %v386
    %v745 = vunpack.c.l.b16 %v387
    %v746 = vunpack.c.h.b16 %v387
    %v747 = vunpack.c.l.b16 %v388
    %v748 = vunpack.c.h.b16 %v388
    %v749 = vunpack.c.l.b16 %v389
    %v750 = vunpack.c.h.b16 %v389
    %v751 = vunpack.c.l.b16 %v390
    %v752 = vunpack.c.h.b16 %v390
    %v753 = vunpack.c.l.b16 %v391
    %v754 = vunpack.c.h.b16 %v391
    %v755 = vunpack.c.l.b16 %v392
    %v756 = vunpack.c.h.b16 %v392
    %v757 = vunpack.c.l.b16 %v393
    %v758 = vunpack.c.h.b16 %v393
    %v759 = vunpack.c.l.b16 %v394
    %v760 = vunpack.c.h.b16 %v394
    %v761 = vunpack.c.l.b16 %v395
    %v762 = vunpack.c.h.b16 %v395
    %v763 = vunpack.c.l.b16 %v396
    %v764 = vunpack.c.h.b16 %v396
    %v765 = vunpack.c.l.b16 %v397
    %v766 = vunpack.c.h.b16 %v397
    %v767 = vunpack.c.l.b16 %v398
    %v768 = vunpack.c.h.b16 %v398
    %v769 = vunpack.c.l.b16 %v399
    %v770 = vunpack.c.h.b16 %v399
    %v771 = vunpack.c.l.b16 %v400
    %v772 = vunpack.c.h.b16 %v400
    %v773 = vunpack.c.l.b16 %v401
    %v774 = vunpack.c.h.b16 %v401
    %v775 = vunpack.c.l.b16 %v402
    %v776 = vunpack.c.h.b16 %v402
    %v777 = vunpack.c.l.b16 %v403
    %v778 = vunpack.c.h.b16 %v403
    %v779 = vunpack.c.l.b16 %v404
    %v780 = vunpack.c.h.b16 %v404
    %v781 = vunpack.c.l.b16 %v405
    %v782 = vunpack.c.h.b16 %v405
    %v783 = vunpack.c.l.b16 %v406
    %v784 = vunpack.c.h.b16 %v406
    %v785 = vunpack.c.l.b16 %v407
    %v786 = vunpack.c.h.b16 %v407
    %v787 = vunpack.c.l.b16 %v408
    %v788 = vunpack.c.h.b16 %v408
    %v789 = vunpack.c.l.b16 %v409
    %v790 = vunpack.c.h.b16 %v409
    %v791 = vunpack.c.l.b16 %v410
    %v792 = vunpack.c.h.b16 %v410
    %v793 = vunpack.c.l.b16 %v411
    %v794 = vunpack.c.h.b16 %v411
    %v795 = vunpack.c.l.b16 %v412
    %v796 = vunpack.c.h.b16 %v412
    %v797 = vunpack.c.l.b16 %v413
    %v798 = vunpack.c.h.b16 %v413
    %v799 = vpack.c.b16 %v547, %v543
    %v800 = vpack.c.b16 %v548, %v544
    %v801 = vpack.c.b16 %v549, %v545
    %v802 = vpack.c.b16 %v550, %v546
    %v803 = vpack.c.b16 %v555, %v551
    %v804 = vpack.c.b16 %v556, %v552
    %v805 = vpack.c.b16 %v557, %v553
    %v806 = vpack.c.b16 %v558, %v554
    %v807 = vpack.c.b16 %v563, %v559
    %v808 = vpack.c.b16 %v564, %v560
    %v809 = vpack.c.b16 %v565, %v561
    %v810 = vpack.c.b16 %v566, %v562
    %v811 = vpack.c.b16 %v571, %v567
    %v812 = vpack.c.b16 %v572, %v568
    %v813 = vpack.c.b16 %v573, %v569
    %v814 = vpack.c.b16 %v574, %v570
    %v815 = vpack.c.b16 %v579, %v575
    %v816 = vpack.c.b16 %v580, %v576
    %v817 = vpack.c.b16 %v581, %v577
    %v818 = vpack.c.b16 %v582, %v578
    %v819 = vpack.c.b16 %v587, %v583
    %v820 = vpack.c.b16 %v588, %v584
    %v821 = vpack.c.b16 %v589, %v585
    %v822 = vpack.c.b16 %v590, %v586
    %v823 = vpack.c.b16 %v595, %v591
    %v824 = vpack.c.b16 %v596, %v592
    %v825 = vpack.c.b16 %v597, %v593
    %v826 = vpack.c.b16 %v598, %v594
    %v827 = vpack.c.b16 %v603, %v599
    %v828 = vpack.c.b16 %v604, %v600
    %v829 = vpack.c.b16 %v605, %v601
    %v830 = vpack.c.b16 %v606, %v602
    %v831 = vpack.c.b16 %v611, %v607
    %v832 = vpack.c.b16 %v612, %v608
    %v833 = vpack.c.b16 %v613, %v609
    %v834 = vpack.c.b16 %v614, %v610
    %v835 = vpack.c.b16 %v619, %v615
    %v836 = vpack.c.b16 %v620, %v616
    %v837 = vpack.c.b16 %v621, %v617
    %v838 = vpack.c.b16 %v622, %v618
    %v839 = vpack.c.b16 %v627, %v623
    %v840 = vpack.c.b16 %v628, %v624
    %v841 = vpack.c.b16 %v629, %v625
    %v842 = vpack.c.b16 %v630, %v626
    %v843 = vpack.c.b16 %v635, %v631
    %v844 = vpack.c.b16 %v636, %v632
    %v845 = vpack.c.b16 %v637, %v633
    %v846 = vpack.c.b16 %v638, %v634
    %v847 = vpack.c.b16 %v643, %v639
    %v848 = vpack.c.b16 %v644, %v640
    %v849 = vpack.c.b16 %v645, %v641
    %v850 = vpack.c.b16 %v646, %v642
    %v851 = vpack.c.b16 %v651, %v647
    %v852 = vpack.c.b16 %v652, %v648
    %v853 = vpack.c.b16 %v653, %v649
    %v854 = vpack.c.b16 %v654, %v650
    %v855 = vpack.c.b16 %v659, %v655
    %v856 = vpack.c.b16 %v660, %v656
    %v857 = vpack.c.b16 %v661, %v657
    %v858 = vpack.c.b16 %v662, %v658
    %v859 = vpack.c.b16 %v667, %v663
    %v860 = vpack.c.b16 %v668, %v664
    %v861 = vpack.c.b16 %v669, %v665
    %v862 = vpack.c.b16 %v670, %v666
    %v863 = vpack.c.b16 %v675, %v671
    %v864 = vpack.c.b16 %v676, %v672
    %v865 = vpack.c.b16 %v677, %v673
    %v866 = vpack.c.b16 %v678, %v674
    %v867 = vpack.c.b16 %v683, %v679
    %v868 = vpack.c.b16 %v684, %v680
    %v869 = vpack.c.b16 %v685, %v681
    %v870 = vpack.c.b16 %v686, %v682
    %v871 = vpack.c.b16 %v691, %v687
    %v872 = vpack.c.b16 %v692, %v688
    %v873 = vpack.c.b16 %v693, %v689
    %v874 = vpack.c.b16 %v694, %v690
    %v875 = vpack.c.b16 %v699, %v695
    %v876 = vpack.c.b16 %v700, %v696
    %v877 = vpack.c.b16 %v701, %v697
    %v878 = vpack.c.b16 %v702, %v698
    %v879 = vpack.c.b16 %v707, %v703
    %v880 = vpack.c.b16 %v708, %v704
    %v881 = vpack.c.b16 %v709, %v705
    %v882 = vpack.c.b16 %v710, %v706
    %v883 = vpack.c.b16 %v715, %v711
    %v884 = vpack.c.b16 %v716, %v712
    %v885 = vpack.c.b16 %v717, %v713
    %v886 = vpack.c.b16 %v718, %v714
    %v887 = vpack.c.b16 %v723, %v719
    %v888 = vpack.c.b16 %v724, %v720
    %v889 = vpack.c.b16 %v725, %v721
    %v890 = vpack.c.b16 %v726, %v722
    %v891 = vpack.c.b16 %v731, %v727
    %v892 = vpack.c.b16 %v732, %v728
    %v893 = vpack.c.b16 %v733, %v729
    %v894 = vpack.c.b16 %v734, %v730
    %v895 = vpack.c.b16 %v739, %v735
    %v896 = vpack.c.b16 %v740, %v736
    %v897 = vpack.c.b16 %v741, %v737
    %v898 = vpack.c.b16 %v742, %v738
    %v899 = vpack.c.b16 %v747, %v743
    %v900 = vpack.c.b16 %v748, %v744
    %v901 = vpack.c.b16 %v749, %v745
    %v902 = vpack.c.b16 %v750, %v746
    %v903 = vpack.c.b16 %v755, %v751
    %v904 = vpack.c.b16 %v756, %v752
    %v905 = vpack.c.b16 %v757, %v753
    %v906 = vpack.c.b16 %v758, %v754
    %v907 = vpack.c.b16 %v763, %v759
    %v908 = vpack.c.b16 %v764, %v760
    %v909 = vpack.c.b16 %v765, %v761
    %v910 = vpack.c.b16 %v766, %v762
    %v911 = vpack.c.b16 %v771, %v767
    %v912 = vpack.c.b16 %v772, %v768
    %v913 = vpack.c.b16 %v773, %v769
    %v914 = vpack.c.b16 %v774, %v770
    %v915 = vpack.c.b16 %v779, %v775
    %v916 = vpack.c.b16 %v780, %v776
    %v917 = vpack.c.b16 %v781, %v777
    %v918 = vpack.c.b16 %v782, %v778
    %v919 = vpack.c.b16 %v787, %v783
    %v920 = vpack.c.b16 %v788, %v784
    %v921 = vpack.c.b16 %v789, %v785
    %v922 = vpack.c.b16 %v790, %v786
    %v923 = vpack.c.b16 %v795, %v791
    %v924 = vpack.c.b16 %v796, %v792
    %v925 = vpack.c.b16 %v797, %v793
    %v926 = vpack.c.b16 %v798, %v794
    %1055 = vmatprep.subr.bf16.mxu0 %v828
    %1056 = vmatpush1.bf16.msra.mxu0 %v827
    %1057 = vmatprep.subr.bf16.mxu0 %v824
    %1058 = vmatpush1.bf16.msra.mxu0 %v823
    %1059 = vmatprep.subr.bf16.mxu0 %v820
    %1060 = vmatpush1.bf16.msra.mxu0 %v819
    %1061 = vmatprep.subr.bf16.mxu0 %v816
    %1062 = vmatpush1.bf16.msra.mxu0 %v815
    %1063 = vmatprep.subr.bf16.mxu0 %v812
    %1064 = vmatpush1.bf16.msra.mxu0 %v811
    %1065 = vmatprep.subr.bf16.mxu0 %v808
    %1066 = vmatpush1.bf16.msra.mxu0 %v807
    %1067 = vmatprep.subr.bf16.mxu0 %v804
    %1068 = vmatpush1.bf16.msra.mxu0 %v803
    %1069 = vmatprep.subr.bf16.mxu0 %v800
    %1070 = vmatpush1.bf16.msra.mxu0 %v799
    %1071 = vmatprep.subr.bf16.mxu0 %v860
    %1072 = vmatpush2.bf16.msra.mxu0 %v859
    %1073 = vmatprep.subr.bf16.mxu0 %v856
    %1074 = vmatpush2.bf16.msra.mxu0 %v855
    %1075 = vmatprep.subr.bf16.mxu0 %v852
    %1076 = vmatpush2.bf16.msra.mxu0 %v851
    %1077 = vmatprep.subr.bf16.mxu0 %v848
    %1078 = vmatpush2.bf16.msra.mxu0 %v847
    %1079 = vmatprep.subr.bf16.mxu0 %v844
    %1080 = vmatpush2.bf16.msra.mxu0 %v843
    %1081 = vmatprep.subr.bf16.mxu0 %v840
    %1082 = vmatpush2.bf16.msra.mxu0 %v839
    %1083 = vmatprep.subr.bf16.mxu0 %v836
    %1084 = vmatpush2.bf16.msra.mxu0 %v835
    %1085 = vmatprep.subr.bf16.mxu0 %v832
    %1086 = vmatpush2.bf16.msra.mxu0 %v831
    %1087 = vmatprep.mubr.bf16.mxu0 %v283
    %1088 = vmatmul.mubr.bf16.gmra.mxu0 %v282
    %v1089 = vpop.f32.mrf.mxu0
    %v1090 = vadd.f32 0.0, %v1089
    %v1091 = vpop.f32.mrf.mxu0
    %v1092 = vadd.f32 0.0, %v1091
    %v1093 = vpop.f32.mrf.mxu0
    %v1094 = vadd.f32 0.0, %v1093
    %v1095 = vpop.f32.mrf.mxu0
    %v1096 = vadd.f32 0.0, %v1095
    %1097 = vdwg.mxu0
    %1098 = vmatprep.subr.bf16.mxu0 %v892
    %1099 = vmatpush1.bf16.msra.mxu0 %v891
    %1100 = vmatprep.subr.bf16.mxu0 %v888
    %1101 = vmatpush1.bf16.msra.mxu0 %v887
    %1102 = vmatprep.subr.bf16.mxu0 %v884
    %1103 = vmatpush1.bf16.msra.mxu0 %v883
    %1104 = vmatprep.subr.bf16.mxu0 %v880
    %1105 = vmatpush1.bf16.msra.mxu0 %v879
    %1106 = vmatprep.subr.bf16.mxu0 %v876
    %1107 = vmatpush1.bf16.msra.mxu0 %v875
    %1108 = vmatprep.subr.bf16.mxu0 %v872
    %1109 = vmatpush1.bf16.msra.mxu0 %v871
    %1110 = vmatprep.subr.bf16.mxu0 %v868
    %1111 = vmatpush1.bf16.msra.mxu0 %v867
    %1112 = vmatprep.subr.bf16.mxu0 %v864
    %1113 = vmatpush1.bf16.msra.mxu0 %v863
    %1114 = vmatprep.subr.bf16.mxu0 %v924
    %1115 = vmatpush2.bf16.msra.mxu0 %v923
    %1116 = vmatprep.subr.bf16.mxu0 %v920
    %1117 = vmatpush2.bf16.msra.mxu0 %v919
    %1118 = vmatprep.subr.bf16.mxu0 %v916
    %1119 = vmatpush2.bf16.msra.mxu0 %v915
    %1120 = vmatprep.subr.bf16.mxu0 %v912
    %1121 = vmatpush2.bf16.msra.mxu0 %v911
    %1122 = vmatprep.subr.bf16.mxu0 %v908
    %1123 = vmatpush2.bf16.msra.mxu0 %v907
    %1124 = vmatprep.subr.bf16.mxu0 %v904
    %1125 = vmatpush2.bf16.msra.mxu0 %v903
    %1126 = vmatprep.subr.bf16.mxu0 %v900
    %1127 = vmatpush2.bf16.msra.mxu0 %v899
    %1128 = vmatprep.subr.bf16.mxu0 %v896
    %1129 = vmatpush2.bf16.msra.mxu0 %v895
    %1130 = vmatprep.mubr.bf16.mxu0 %v285
    %1131 = vmatmul.mubr.bf16.gmra.mxu0 %v284
    %v1132 = vpop.f32.mrf.mxu0
    %v1133 = vadd.f32 %v1090, %v1132
    %v1134 = vpop.f32.mrf.mxu0
    %v1135 = vadd.f32 %v1092, %v1134
    %v1136 = vpop.f32.mrf.mxu0
    %v1137 = vadd.f32 %v1094, %v1136
    %v1138 = vpop.f32.mrf.mxu0
    %v1139 = vadd.f32 %v1096, %v1138
    %1140 = vdwg.mxu0
    %1141 = vmatprep.subr.bf16.mxu0 %v830
    %1142 = vmatpush1.bf16.msra.mxu0 %v829
    %1143 = vmatprep.subr.bf16.mxu0 %v826
    %1144 = vmatpush1.bf16.msra.mxu0 %v825
    %1145 = vmatprep.subr.bf16.mxu0 %v822
    %1146 = vmatpush1.bf16.msra.mxu0 %v821
    %1147 = vmatprep.subr.bf16.mxu0 %v818
    %1148 = vmatpush1.bf16.msra.mxu0 %v817
    %1149 = vmatprep.subr.bf16.mxu0 %v814
    %1150 = vmatpush1.bf16.msra.mxu0 %v813
    %1151 = vmatprep.subr.bf16.mxu0 %v810
    %1152 = vmatpush1.bf16.msra.mxu0 %v809
    %1153 = vmatprep.subr.bf16.mxu0 %v806
    %1154 = vmatpush1.bf16.msra.mxu0 %v805
    %1155 = vmatprep.subr.bf16.mxu0 %v802
    %1156 = vmatpush1.bf16.msra.mxu0 %v801
    %1157 = vmatprep.subr.bf16.mxu0 %v862
    %1158 = vmatpush2.bf16.msra.mxu0 %v861
    %1159 = vmatprep.subr.bf16.mxu0 %v858
    %1160 = vmatpush2.bf16.msra.mxu0 %v857
    %1161 = vmatprep.subr.bf16.mxu0 %v854
    %1162 = vmatpush2.bf16.msra.mxu0 %v853
    %1163 = vmatprep.subr.bf16.mxu0 %v850
    %1164 = vmatpush2.bf16.msra.mxu0 %v849
    %1165 = vmatprep.subr.bf16.mxu0 %v846
    %1166 = vmatpush2.bf16.msra.mxu0 %v845
    %1167 = vmatprep.subr.bf16.mxu0 %v842
    %1168 = vmatpush2.bf16.msra.mxu0 %v841
    %1169 = vmatprep.subr.bf16.mxu0 %v838
    %1170 = vmatpush2.bf16.msra.mxu0 %v837
    %1171 = vmatprep.subr.bf16.mxu0 %v834
    %1172 = vmatpush2.bf16.msra.mxu0 %v833
    %1173 = vmatprep.mubr.bf16.mxu0 %v283
    %1174 = vmatmul.mubr.bf16.gmra.mxu0 %v282
    %v1175 = vpop.f32.mrf.mxu0
    %v1176 = vadd.f32 0.0, %v1175
    %v1177 = vpop.f32.mrf.mxu0
    %v1178 = vadd.f32 0.0, %v1177
    %v1179 = vpop.f32.mrf.mxu0
    %v1180 = vadd.f32 0.0, %v1179
    %v1181 = vpop.f32.mrf.mxu0
    %v1182 = vadd.f32 0.0, %v1181
    %1183 = vdwg.mxu0
    %1184 = vmatprep.subr.bf16.mxu0 %v894
    %1185 = vmatpush1.bf16.msra.mxu0 %v893
    %1186 = vmatprep.subr.bf16.mxu0 %v890
    %1187 = vmatpush1.bf16.msra.mxu0 %v889
    %1188 = vmatprep.subr.bf16.mxu0 %v886
    %1189 = vmatpush1.bf16.msra.mxu0 %v885
    %1190 = vmatprep.subr.bf16.mxu0 %v882
    %1191 = vmatpush1.bf16.msra.mxu0 %v881
    %1192 = vmatprep.subr.bf16.mxu0 %v878
    %1193 = vmatpush1.bf16.msra.mxu0 %v877
    %1194 = vmatprep.subr.bf16.mxu0 %v874
    %1195 = vmatpush1.bf16.msra.mxu0 %v873
    %1196 = vmatprep.subr.bf16.mxu0 %v870
    %1197 = vmatpush1.bf16.msra.mxu0 %v869
    %1198 = vmatprep.subr.bf16.mxu0 %v866
    %1199 = vmatpush1.bf16.msra.mxu0 %v865
    %1200 = vmatprep.subr.bf16.mxu0 %v926
    %1201 = vmatpush2.bf16.msra.mxu0 %v925
    %1202 = vmatprep.subr.bf16.mxu0 %v922
    %1203 = vmatpush2.bf16.msra.mxu0 %v921
    %1204 = vmatprep.subr.bf16.mxu0 %v918
    %1205 = vmatpush2.bf16.msra.mxu0 %v917
    %1206 = vmatprep.subr.bf16.mxu0 %v914
    %1207 = vmatpush2.bf16.msra.mxu0 %v913
    %1208 = vmatprep.subr.bf16.mxu0 %v910
    %1209 = vmatpush2.bf16.msra.mxu0 %v909
    %1210 = vmatprep.subr.bf16.mxu0 %v906
    %1211 = vmatpush2.bf16.msra.mxu0 %v905
    %1212 = vmatprep.subr.bf16.mxu0 %v902
    %1213 = vmatpush2.bf16.msra.mxu0 %v901
    %1214 = vmatprep.subr.bf16.mxu0 %v898
    %1215 = vmatpush2.bf16.msra.mxu0 %v897
    %1216 = vmatprep.mubr.bf16.mxu0 %v285
    %1217 = vmatmul.mubr.bf16.gmra.mxu0 %v284
    %v1218 = vpop.f32.mrf.mxu0
    %v1219 = vadd.f32 %v1176, %v1218
    %v1220 = vpop.f32.mrf.mxu0
    %v1221 = vadd.f32 %v1178, %v1220
    %v1222 = vpop.f32.mrf.mxu0
    %v1223 = vadd.f32 %v1180, %v1222
    %v1224 = vpop.f32.mrf.mxu0
    %v1225 = vadd.f32 %v1182, %v1224
    %1226 = vdwg.mxu0
    %v1227 = vpack.c.bf16 %v1137, %v1133
    %v1228 = vpack.c.bf16 %v1139, %v1135
    %v1229 = vpack.c.bf16 %v1223, %v1219
    %v1230 = vpack.c.bf16 %v1225, %v1221
    %v1233 = vunpack.c.l.s4 1966171168
    %v1234 = vunpack.c.0.s8 %v1233
    %v1235 = vlaneseq
    %v1236 = vshrl.u32 %v1235, 7
    %v1237 = vsub.s32 %v1234, %v1236
    %v1238 = vrot.slane %v414, %v1237
    %v1239 = vcombine.high %v1238, %v1238
    %v1241 = vunpack.c.l.s4 1966171168
    %v1242 = vunpack.c.0.s8 %v1241
    %v1243 = vlaneseq
    %v1244 = vshrl.u32 %v1243, 7
    %v1245 = vsub.s32 %v1242, %v1244
    %v1246 = vrot.slane %v1238, %v1245
    %v1248 = vunpack.c.l.s4 1966171168
    %v1249 = vunpack.c.0.s8 %v1248
    %v1250 = vlaneseq
    %v1251 = vshrl.u32 %v1250, 7
    %v1252 = vsub.s32 %v1249, %v1251
    %v1253 = vrot.slane %v1239, %v1252
    %v1254 = vcombine.high %v1246, %v1246
    %v1255 = vcombine.high %v1253, %v1253
    %v1257 = vpack.i.b16 %v1246, %v1246
    %v1259 = vlaneseq
    %v1260 = vshrl.u32 %v1259, 7
    %v1261 = vsub.s32 0, %v1260
    %v1262 = vrot.slane %v1257, %v1261
    %v1264 = vpack.i.b16 %v1253, %v1253
    %v1266 = vlaneseq
    %v1267 = vshrl.u32 %v1266, 7
    %v1268 = vsub.s32 0, %v1267
    %v1269 = vrot.slane %v1264, %v1268
    %v1271 = vpack.i.b16 %v1254, %v1254
    %v1273 = vlaneseq
    %v1274 = vshrl.u32 %v1273, 7
    %v1275 = vsub.s32 0, %v1274
    %v1276 = vrot.slane %v1271, %v1275
    %v1278 = vpack.i.b16 %v1255, %v1255
    %v1280 = vlaneseq
    %v1281 = vshrl.u32 %v1280, 7
    %v1282 = vsub.s32 0, %v1281
    %v1283 = vrot.slane %v1278, %v1282
    %v1284 = vadd.bf16 %v1227, %v1262
    %v1285 = vadd.bf16 %v1228, %v1269
    %v1286 = vadd.bf16 %v1229, %v1276
    %v1287 = vadd.bf16 %v1230, %v1283
    %v1288 = vmax.bf16 %v1284, 0
    %v1289 = vmax.bf16 %v1285, 0
    %v1290 = vmax.bf16 %v1286, 0
    %v1291 = vmax.bf16 %v1287, 0
    %v1292 = vld [vmem:[#allocation4] sm:$0xff]
    %v1293 = vld [vmem:[#allocation4 + $0x8] sm:$0xff]
    %v1294 = vld [vmem:[#allocation4 + $0x10] sm:$0xff]
    %v1295 = vld [vmem:[#allocation4 + $0x18] sm:$0xff]
    %v1296 = vld [vmem:[#allocation4 + $0x20] sm:$0xff]
    %v1297 = vld [vmem:[#allocation4 + $0x28] sm:$0xff]
    %v1298 = vld [vmem:[#allocation4 + $0x30] sm:$0xff]
    %v1299 = vld [vmem:[#allocation4 + $0x38] sm:$0xff]
    %v1300 = vld [vmem:[#allocation4 + $0x40] sm:$0xff]
    %v1301 = vld [vmem:[#allocation4 + $0x48] sm:$0xff]
    %v1302 = vld [vmem:[#allocation4 + $0x50] sm:$0xff]
    %v1303 = vld [vmem:[#allocation4 + $0x58] sm:$0xff]
    %v1304 = vld [vmem:[#allocation4 + $0x60] sm:$0xff]
    %v1305 = vld [vmem:[#allocation4 + $0x68] sm:$0xff]
    %v1306 = vld [vmem:[#allocation4 + $0x70] sm:$0xff]
    %v1307 = vld [vmem:[#allocation4 + $0x78] sm:$0xff]
    %v1308 = vld [vmem:[#allocation4 + $0x80] sm:$0xff]
    %v1309 = vld [vmem:[#allocation4 + $0x88] sm:$0xff]
    %v1310 = vld [vmem:[#allocation4 + $0x90] sm:$0xff]
    %v1311 = vld [vmem:[#allocation4 + $0x98] sm:$0xff]
    %v1312 = vld [vmem:[#allocation4 + $0xa0] sm:$0xff]
    %v1313 = vld [vmem:[#allocation4 + $0xa8] sm:$0xff]
    %v1314 = vld [vmem:[#allocation4 + $0xb0] sm:$0xff]
    %v1315 = vld [vmem:[#allocation4 + $0xb8] sm:$0xff]
    %v1316 = vld [vmem:[#allocation4 + $0xc0] sm:$0xff]
    %v1317 = vld [vmem:[#allocation4 + $0xc8] sm:$0xff]
    %v1318 = vld [vmem:[#allocation4 + $0xd0] sm:$0xff]
    %v1319 = vld [vmem:[#allocation4 + $0xd8] sm:$0xff]
    %v1320 = vld [vmem:[#allocation4 + $0xe0] sm:$0xff]
    %v1321 = vld [vmem:[#allocation4 + $0xe8] sm:$0xff]
    %v1322 = vld [vmem:[#allocation4 + $0xf0] sm:$0xff]
    %v1323 = vld [vmem:[#allocation4 + $0xf8] sm:$0xff]
    %v1324 = vld [vmem:[#allocation4 + $0x100] sm:$0xff]
    %v1325 = vld [vmem:[#allocation4 + $0x108] sm:$0xff]
    %v1326 = vld [vmem:[#allocation4 + $0x110] sm:$0xff]
    %v1327 = vld [vmem:[#allocation4 + $0x118] sm:$0xff]
    %v1328 = vld [vmem:[#allocation4 + $0x120] sm:$0xff]
    %v1329 = vld [vmem:[#allocation4 + $0x128] sm:$0xff]
    %v1330 = vld [vmem:[#allocation4 + $0x130] sm:$0xff]
    %v1331 = vld [vmem:[#allocation4 + $0x138] sm:$0xff]
    %v1332 = vld [vmem:[#allocation4 + $0x140] sm:$0xff]
    %v1333 = vld [vmem:[#allocation4 + $0x148] sm:$0xff]
    %v1334 = vld [vmem:[#allocation4 + $0x150] sm:$0xff]
    %v1335 = vld [vmem:[#allocation4 + $0x158] sm:$0xff]
    %v1336 = vld [vmem:[#allocation4 + $0x160] sm:$0xff]
    %v1337 = vld [vmem:[#allocation4 + $0x168] sm:$0xff]
    %v1338 = vld [vmem:[#allocation4 + $0x170] sm:$0xff]
    %v1339 = vld [vmem:[#allocation4 + $0x178] sm:$0xff]
    %v1340 = vld [vmem:[#allocation4 + $0x180] sm:$0xff]
    %v1341 = vld [vmem:[#allocation4 + $0x188] sm:$0xff]
    %v1342 = vld [vmem:[#allocation4 + $0x190] sm:$0xff]
    %v1343 = vld [vmem:[#allocation4 + $0x198] sm:$0xff]
    %v1344 = vld [vmem:[#allocation4 + $0x1a0] sm:$0xff]
    %v1345 = vld [vmem:[#allocation4 + $0x1a8] sm:$0xff]
    %v1346 = vld [vmem:[#allocation4 + $0x1b0] sm:$0xff]
    %v1347 = vld [vmem:[#allocation4 + $0x1b8] sm:$0xff]
    %v1348 = vld [vmem:[#allocation4 + $0x1c0] sm:$0xff]
    %v1349 = vld [vmem:[#allocation4 + $0x1c8] sm:$0xff]
    %v1350 = vld [vmem:[#allocation4 + $0x1d0] sm:$0xff]
    %v1351 = vld [vmem:[#allocation4 + $0x1d8] sm:$0xff]
    %v1352 = vld [vmem:[#allocation4 + $0x1e0] sm:$0xff]
    %v1353 = vld [vmem:[#allocation4 + $0x1e8] sm:$0xff]
    %v1354 = vld [vmem:[#allocation4 + $0x1f0] sm:$0xff]
    %v1355 = vld [vmem:[#allocation4 + $0x1f8] sm:$0xff]
    %v1356 = vld [vmem:[#allocation4 + $0x200] sm:$0xff]
    %v1357 = vld [vmem:[#allocation4 + $0x208] sm:$0xff]
    %v1358 = vld [vmem:[#allocation4 + $0x210] sm:$0xff]
    %v1359 = vld [vmem:[#allocation4 + $0x218] sm:$0xff]
    %v1360 = vld [vmem:[#allocation4 + $0x220] sm:$0xff]
    %v1361 = vld [vmem:[#allocation4 + $0x228] sm:$0xff]
    %v1362 = vld [vmem:[#allocation4 + $0x230] sm:$0xff]
    %v1363 = vld [vmem:[#allocation4 + $0x238] sm:$0xff]
    %v1364 = vld [vmem:[#allocation4 + $0x240] sm:$0xff]
    %v1365 = vld [vmem:[#allocation4 + $0x248] sm:$0xff]
    %v1366 = vld [vmem:[#allocation4 + $0x250] sm:$0xff]
    %v1367 = vld [vmem:[#allocation4 + $0x258] sm:$0xff]
    %v1368 = vld [vmem:[#allocation4 + $0x260] sm:$0xff]
    %v1369 = vld [vmem:[#allocation4 + $0x268] sm:$0xff]
    %v1370 = vld [vmem:[#allocation4 + $0x270] sm:$0xff]
    %v1371 = vld [vmem:[#allocation4 + $0x278] sm:$0xff]
    %v1372 = vld [vmem:[#allocation4 + $0x280] sm:$0xff]
    %v1373 = vld [vmem:[#allocation4 + $0x288] sm:$0xff]
    %v1374 = vld [vmem:[#allocation4 + $0x290] sm:$0xff]
    %v1375 = vld [vmem:[#allocation4 + $0x298] sm:$0xff]
    %v1376 = vld [vmem:[#allocation4 + $0x2a0] sm:$0xff]
    %v1377 = vld [vmem:[#allocation4 + $0x2a8] sm:$0xff]
    %v1378 = vld [vmem:[#allocation4 + $0x2b0] sm:$0xff]
    %v1379 = vld [vmem:[#allocation4 + $0x2b8] sm:$0xff]
    %v1380 = vld [vmem:[#allocation4 + $0x2c0] sm:$0xff]
    %v1381 = vld [vmem:[#allocation4 + $0x2c8] sm:$0xff]
    %v1382 = vld [vmem:[#allocation4 + $0x2d0] sm:$0xff]
    %v1383 = vld [vmem:[#allocation4 + $0x2d8] sm:$0xff]
    %v1384 = vld [vmem:[#allocation4 + $0x2e0] sm:$0xff]
    %v1385 = vld [vmem:[#allocation4 + $0x2e8] sm:$0xff]
    %v1386 = vld [vmem:[#allocation4 + $0x2f0] sm:$0xff]
    %v1387 = vld [vmem:[#allocation4 + $0x2f8] sm:$0xff]
    %v1388 = vld [vmem:[#allocation4 + $0x300] sm:$0xff]
    %v1389 = vld [vmem:[#allocation4 + $0x308] sm:$0xff]
    %v1390 = vld [vmem:[#allocation4 + $0x310] sm:$0xff]
    %v1391 = vld [vmem:[#allocation4 + $0x318] sm:$0xff]
    %v1392 = vld [vmem:[#allocation4 + $0x320] sm:$0xff]
    %v1393 = vld [vmem:[#allocation4 + $0x328] sm:$0xff]
    %v1394 = vld [vmem:[#allocation4 + $0x330] sm:$0xff]
    %v1395 = vld [vmem:[#allocation4 + $0x338] sm:$0xff]
    %v1396 = vld [vmem:[#allocation4 + $0x340] sm:$0xff]
    %v1397 = vld [vmem:[#allocation4 + $0x348] sm:$0xff]
    %v1398 = vld [vmem:[#allocation4 + $0x350] sm:$0xff]
    %v1399 = vld [vmem:[#allocation4 + $0x358] sm:$0xff]
    %v1400 = vld [vmem:[#allocation4 + $0x360] sm:$0xff]
    %v1401 = vld [vmem:[#allocation4 + $0x368] sm:$0xff]
    %v1402 = vld [vmem:[#allocation4 + $0x370] sm:$0xff]
    %v1403 = vld [vmem:[#allocation4 + $0x378] sm:$0xff]
    %v1404 = vld [vmem:[#allocation4 + $0x380] sm:$0xff]
    %v1405 = vld [vmem:[#allocation4 + $0x388] sm:$0xff]
    %v1406 = vld [vmem:[#allocation4 + $0x390] sm:$0xff]
    %v1407 = vld [vmem:[#allocation4 + $0x398] sm:$0xff]
    %v1408 = vld [vmem:[#allocation4 + $0x3a0] sm:$0xff]
    %v1409 = vld [vmem:[#allocation4 + $0x3a8] sm:$0xff]
    %v1410 = vld [vmem:[#allocation4 + $0x3b0] sm:$0xff]
    %v1411 = vld [vmem:[#allocation4 + $0x3b8] sm:$0xff]
    %v1412 = vld [vmem:[#allocation4 + $0x3c0] sm:$0xff]
    %v1413 = vld [vmem:[#allocation4 + $0x3c8] sm:$0xff]
    %v1414 = vld [vmem:[#allocation4 + $0x3d0] sm:$0xff]
    %v1415 = vld [vmem:[#allocation4 + $0x3d8] sm:$0xff]
    %v1416 = vld [vmem:[#allocation4 + $0x3e0] sm:$0xff]
    %v1417 = vld [vmem:[#allocation4 + $0x3e8] sm:$0xff]
    %v1418 = vld [vmem:[#allocation4 + $0x3f0] sm:$0xff]
    %v1419 = vld [vmem:[#allocation4 + $0x3f8] sm:$0xff]
    %v1420 = vld [vmem:[%s6] sm:$0xf]
    %v1549 = vunpack.c.l.b16 %v1292
    %v1550 = vunpack.c.h.b16 %v1292
    %v1551 = vunpack.c.l.b16 %v1293
    %v1552 = vunpack.c.h.b16 %v1293
    %v1553 = vunpack.c.l.b16 %v1294
    %v1554 = vunpack.c.h.b16 %v1294
    %v1555 = vunpack.c.l.b16 %v1295
    %v1556 = vunpack.c.h.b16 %v1295
    %v1557 = vunpack.c.l.b16 %v1296
    %v1558 = vunpack.c.h.b16 %v1296
    %v1559 = vunpack.c.l.b16 %v1297
    %v1560 = vunpack.c.h.b16 %v1297
    %v1561 = vunpack.c.l.b16 %v1298
    %v1562 = vunpack.c.h.b16 %v1298
    %v1563 = vunpack.c.l.b16 %v1299
    %v1564 = vunpack.c.h.b16 %v1299
    %v1565 = vunpack.c.l.b16 %v1300
    %v1566 = vunpack.c.h.b16 %v1300
    %v1567 = vunpack.c.l.b16 %v1301
    %v1568 = vunpack.c.h.b16 %v1301
    %v1569 = vunpack.c.l.b16 %v1302
    %v1570 = vunpack.c.h.b16 %v1302
    %v1571 = vunpack.c.l.b16 %v1303
    %v1572 = vunpack.c.h.b16 %v1303
    %v1573 = vunpack.c.l.b16 %v1304
    %v1574 = vunpack.c.h.b16 %v1304
    %v1575 = vunpack.c.l.b16 %v1305
    %v1576 = vunpack.c.h.b16 %v1305
    %v1577 = vunpack.c.l.b16 %v1306
    %v1578 = vunpack.c.h.b16 %v1306
    %v1579 = vunpack.c.l.b16 %v1307
    %v1580 = vunpack.c.h.b16 %v1307
    %v1581 = vunpack.c.l.b16 %v1308
    %v1582 = vunpack.c.h.b16 %v1308
    %v1583 = vunpack.c.l.b16 %v1309
    %v1584 = vunpack.c.h.b16 %v1309
    %v1585 = vunpack.c.l.b16 %v1310
    %v1586 = vunpack.c.h.b16 %v1310
    %v1587 = vunpack.c.l.b16 %v1311
    %v1588 = vunpack.c.h.b16 %v1311
    %v1589 = vunpack.c.l.b16 %v1312
    %v1590 = vunpack.c.h.b16 %v1312
    %v1591 = vunpack.c.l.b16 %v1313
    %v1592 = vunpack.c.h.b16 %v1313
    %v1593 = vunpack.c.l.b16 %v1314
    %v1594 = vunpack.c.h.b16 %v1314
    %v1595 = vunpack.c.l.b16 %v1315
    %v1596 = vunpack.c.h.b16 %v1315
    %v1597 = vunpack.c.l.b16 %v1316
    %v1598 = vunpack.c.h.b16 %v1316
    %v1599 = vunpack.c.l.b16 %v1317
    %v1600 = vunpack.c.h.b16 %v1317
    %v1601 = vunpack.c.l.b16 %v1318
    %v1602 = vunpack.c.h.b16 %v1318
    %v1603 = vunpack.c.l.b16 %v1319
    %v1604 = vunpack.c.h.b16 %v1319
    %v1605 = vunpack.c.l.b16 %v1320
    %v1606 = vunpack.c.h.b16 %v1320
    %v1607 = vunpack.c.l.b16 %v1321
    %v1608 = vunpack.c.h.b16 %v1321
    %v1609 = vunpack.c.l.b16 %v1322
    %v1610 = vunpack.c.h.b16 %v1322
    %v1611 = vunpack.c.l.b16 %v1323
    %v1612 = vunpack.c.h.b16 %v1323
    %v1613 = vunpack.c.l.b16 %v1324
    %v1614 = vunpack.c.h.b16 %v1324
    %v1615 = vunpack.c.l.b16 %v1325
    %v1616 = vunpack.c.h.b16 %v1325
    %v1617 = vunpack.c.l.b16 %v1326
    %v1618 = vunpack.c.h.b16 %v1326
    %v1619 = vunpack.c.l.b16 %v1327
    %v1620 = vunpack.c.h.b16 %v1327
    %v1621 = vunpack.c.l.b16 %v1328
    %v1622 = vunpack.c.h.b16 %v1328
    %v1623 = vunpack.c.l.b16 %v1329
    %v1624 = vunpack.c.h.b16 %v1329
    %v1625 = vunpack.c.l.b16 %v1330
    %v1626 = vunpack.c.h.b16 %v1330
    %v1627 = vunpack.c.l.b16 %v1331
    %v1628 = vunpack.c.h.b16 %v1331
    %v1629 = vunpack.c.l.b16 %v1332
    %v1630 = vunpack.c.h.b16 %v1332
    %v1631 = vunpack.c.l.b16 %v1333
    %v1632 = vunpack.c.h.b16 %v1333
    %v1633 = vunpack.c.l.b16 %v1334
    %v1634 = vunpack.c.h.b16 %v1334
    %v1635 = vunpack.c.l.b16 %v1335
    %v1636 = vunpack.c.h.b16 %v1335
    %v1637 = vunpack.c.l.b16 %v1336
    %v1638 = vunpack.c.h.b16 %v1336
    %v1639 = vunpack.c.l.b16 %v1337
    %v1640 = vunpack.c.h.b16 %v1337
    %v1641 = vunpack.c.l.b16 %v1338
    %v1642 = vunpack.c.h.b16 %v1338
    %v1643 = vunpack.c.l.b16 %v1339
    %v1644 = vunpack.c.h.b16 %v1339
    %v1645 = vunpack.c.l.b16 %v1340
    %v1646 = vunpack.c.h.b16 %v1340
    %v1647 = vunpack.c.l.b16 %v1341
    %v1648 = vunpack.c.h.b16 %v1341
    %v1649 = vunpack.c.l.b16 %v1342
    %v1650 = vunpack.c.h.b16 %v1342
    %v1651 = vunpack.c.l.b16 %v1343
    %v1652 = vunpack.c.h.b16 %v1343
    %v1653 = vunpack.c.l.b16 %v1344
    %v1654 = vunpack.c.h.b16 %v1344
    %v1655 = vunpack.c.l.b16 %v1345
    %v1656 = vunpack.c.h.b16 %v1345
    %v1657 = vunpack.c.l.b16 %v1346
    %v1658 = vunpack.c.h.b16 %v1346
    %v1659 = vunpack.c.l.b16 %v1347
    %v1660 = vunpack.c.h.b16 %v1347
    %v1661 = vunpack.c.l.b16 %v1348
    %v1662 = vunpack.c.h.b16 %v1348
    %v1663 = vunpack.c.l.b16 %v1349
    %v1664 = vunpack.c.h.b16 %v1349
    %v1665 = vunpack.c.l.b16 %v1350
    %v1666 = vunpack.c.h.b16 %v1350
    %v1667 = vunpack.c.l.b16 %v1351
    %v1668 = vunpack.c.h.b16 %v1351
    %v1669 = vunpack.c.l.b16 %v1352
    %v1670 = vunpack.c.h.b16 %v1352
    %v1671 = vunpack.c.l.b16 %v1353
    %v1672 = vunpack.c.h.b16 %v1353
    %v1673 = vunpack.c.l.b16 %v1354
    %v1674 = vunpack.c.h.b16 %v1354
    %v1675 = vunpack.c.l.b16 %v1355
    %v1676 = vunpack.c.h.b16 %v1355
    %v1677 = vunpack.c.l.b16 %v1356
    %v1678 = vunpack.c.h.b16 %v1356
    %v1679 = vunpack.c.l.b16 %v1357
    %v1680 = vunpack.c.h.b16 %v1357
    %v1681 = vunpack.c.l.b16 %v1358
    %v1682 = vunpack.c.h.b16 %v1358
    %v1683 = vunpack.c.l.b16 %v1359
    %v1684 = vunpack.c.h.b16 %v1359
    %v1685 = vunpack.c.l.b16 %v1360
    %v1686 = vunpack.c.h.b16 %v1360
    %v1687 = vunpack.c.l.b16 %v1361
    %v1688 = vunpack.c.h.b16 %v1361
    %v1689 = vunpack.c.l.b16 %v1362
    %v1690 = vunpack.c.h.b16 %v1362
    %v1691 = vunpack.c.l.b16 %v1363
    %v1692 = vunpack.c.h.b16 %v1363
    %v1693 = vunpack.c.l.b16 %v1364
    %v1694 = vunpack.c.h.b16 %v1364
    %v1695 = vunpack.c.l.b16 %v1365
    %v1696 = vunpack.c.h.b16 %v1365
    %v1697 = vunpack.c.l.b16 %v1366
    %v1698 = vunpack.c.h.b16 %v1366
    %v1699 = vunpack.c.l.b16 %v1367
    %v1700 = vunpack.c.h.b16 %v1367
    %v1701 = vunpack.c.l.b16 %v1368
    %v1702 = vunpack.c.h.b16 %v1368
    %v1703 = vunpack.c.l.b16 %v1369
    %v1704 = vunpack.c.h.b16 %v1369
    %v1705 = vunpack.c.l.b16 %v1370
    %v1706 = vunpack.c.h.b16 %v1370
    %v1707 = vunpack.c.l.b16 %v1371
    %v1708 = vunpack.c.h.b16 %v1371
    %v1709 = vunpack.c.l.b16 %v1372
    %v1710 = vunpack.c.h.b16 %v1372
    %v1711 = vunpack.c.l.b16 %v1373
    %v1712 = vunpack.c.h.b16 %v1373
    %v1713 = vunpack.c.l.b16 %v1374
    %v1714 = vunpack.c.h.b16 %v1374
    %v1715 = vunpack.c.l.b16 %v1375
    %v1716 = vunpack.c.h.b16 %v1375
    %v1717 = vunpack.c.l.b16 %v1376
    %v1718 = vunpack.c.h.b16 %v1376
    %v1719 = vunpack.c.l.b16 %v1377
    %v1720 = vunpack.c.h.b16 %v1377
    %v1721 = vunpack.c.l.b16 %v1378
    %v1722 = vunpack.c.h.b16 %v1378
    %v1723 = vunpack.c.l.b16 %v1379
    %v1724 = vunpack.c.h.b16 %v1379
    %v1725 = vunpack.c.l.b16 %v1380
    %v1726 = vunpack.c.h.b16 %v1380
    %v1727 = vunpack.c.l.b16 %v1381
    %v1728 = vunpack.c.h.b16 %v1381
    %v1729 = vunpack.c.l.b16 %v1382
    %v1730 = vunpack.c.h.b16 %v1382
    %v1731 = vunpack.c.l.b16 %v1383
    %v1732 = vunpack.c.h.b16 %v1383
    %v1733 = vunpack.c.l.b16 %v1384
    %v1734 = vunpack.c.h.b16 %v1384
    %v1735 = vunpack.c.l.b16 %v1385
    %v1736 = vunpack.c.h.b16 %v1385
    %v1737 = vunpack.c.l.b16 %v1386
    %v1738 = vunpack.c.h.b16 %v1386
    %v1739 = vunpack.c.l.b16 %v1387
    %v1740 = vunpack.c.h.b16 %v1387
    %v1741 = vunpack.c.l.b16 %v1388
    %v1742 = vunpack.c.h.b16 %v1388
    %v1743 = vunpack.c.l.b16 %v1389
    %v1744 = vunpack.c.h.b16 %v1389
    %v1745 = vunpack.c.l.b16 %v1390
    %v1746 = vunpack.c.h.b16 %v1390
    %v1747 = vunpack.c.l.b16 %v1391
    %v1748 = vunpack.c.h.b16 %v1391
    %v1749 = vunpack.c.l.b16 %v1392
    %v1750 = vunpack.c.h.b16 %v1392
    %v1751 = vunpack.c.l.b16 %v1393
    %v1752 = vunpack.c.h.b16 %v1393
    %v1753 = vunpack.c.l.b16 %v1394
    %v1754 = vunpack.c.h.b16 %v1394
    %v1755 = vunpack.c.l.b16 %v1395
    %v1756 = vunpack.c.h.b16 %v1395
    %v1757 = vunpack.c.l.b16 %v1396
    %v1758 = vunpack.c.h.b16 %v1396
    %v1759 = vunpack.c.l.b16 %v1397
    %v1760 = vunpack.c.h.b16 %v1397
    %v1761 = vunpack.c.l.b16 %v1398
    %v1762 = vunpack.c.h.b16 %v1398
    %v1763 = vunpack.c.l.b16 %v1399
    %v1764 = vunpack.c.h.b16 %v1399
    %v1765 = vunpack.c.l.b16 %v1400
    %v1766 = vunpack.c.h.b16 %v1400
    %v1767 = vunpack.c.l.b16 %v1401
    %v1768 = vunpack.c.h.b16 %v1401
    %v1769 = vunpack.c.l.b16 %v1402
    %v1770 = vunpack.c.h.b16 %v1402
    %v1771 = vunpack.c.l.b16 %v1403
    %v1772 = vunpack.c.h.b16 %v1403
    %v1773 = vunpack.c.l.b16 %v1404
    %v1774 = vunpack.c.h.b16 %v1404
    %v1775 = vunpack.c.l.b16 %v1405
    %v1776 = vunpack.c.h.b16 %v1405
    %v1777 = vunpack.c.l.b16 %v1406
    %v1778 = vunpack.c.h.b16 %v1406
    %v1779 = vunpack.c.l.b16 %v1407
    %v1780 = vunpack.c.h.b16 %v1407
    %v1781 = vunpack.c.l.b16 %v1408
    %v1782 = vunpack.c.h.b16 %v1408
    %v1783 = vunpack.c.l.b16 %v1409
    %v1784 = vunpack.c.h.b16 %v1409
    %v1785 = vunpack.c.l.b16 %v1410
    %v1786 = vunpack.c.h.b16 %v1410
    %v1787 = vunpack.c.l.b16 %v1411
    %v1788 = vunpack.c.h.b16 %v1411
    %v1789 = vunpack.c.l.b16 %v1412
    %v1790 = vunpack.c.h.b16 %v1412
    %v1791 = vunpack.c.l.b16 %v1413
    %v1792 = vunpack.c.h.b16 %v1413
    %v1793 = vunpack.c.l.b16 %v1414
    %v1794 = vunpack.c.h.b16 %v1414
    %v1795 = vunpack.c.l.b16 %v1415
    %v1796 = vunpack.c.h.b16 %v1415
    %v1797 = vunpack.c.l.b16 %v1416
    %v1798 = vunpack.c.h.b16 %v1416
    %v1799 = vunpack.c.l.b16 %v1417
    %v1800 = vunpack.c.h.b16 %v1417
    %v1801 = vunpack.c.l.b16 %v1418
    %v1802 = vunpack.c.h.b16 %v1418
    %v1803 = vunpack.c.l.b16 %v1419
    %v1804 = vunpack.c.h.b16 %v1419
    %v1805 = vpack.c.b16 %v1553, %v1549
    %v1806 = vpack.c.b16 %v1554, %v1550
    %v1807 = vpack.c.b16 %v1555, %v1551
    %v1808 = vpack.c.b16 %v1556, %v1552
    %v1809 = vpack.c.b16 %v1561, %v1557
    %v1810 = vpack.c.b16 %v1562, %v1558
    %v1811 = vpack.c.b16 %v1563, %v1559
    %v1812 = vpack.c.b16 %v1564, %v1560
    %v1813 = vpack.c.b16 %v1569, %v1565
    %v1814 = vpack.c.b16 %v1570, %v1566
    %v1815 = vpack.c.b16 %v1571, %v1567
    %v1816 = vpack.c.b16 %v1572, %v1568
    %v1817 = vpack.c.b16 %v1577, %v1573
    %v1818 = vpack.c.b16 %v1578, %v1574
    %v1819 = vpack.c.b16 %v1579, %v1575
    %v1820 = vpack.c.b16 %v1580, %v1576
    %v1821 = vpack.c.b16 %v1585, %v1581
    %v1822 = vpack.c.b16 %v1586, %v1582
    %v1823 = vpack.c.b16 %v1587, %v1583
    %v1824 = vpack.c.b16 %v1588, %v1584
    %v1825 = vpack.c.b16 %v1593, %v1589
    %v1826 = vpack.c.b16 %v1594, %v1590
    %v1827 = vpack.c.b16 %v1595, %v1591
    %v1828 = vpack.c.b16 %v1596, %v1592
    %v1829 = vpack.c.b16 %v1601, %v1597
    %v1830 = vpack.c.b16 %v1602, %v1598
    %v1831 = vpack.c.b16 %v1603, %v1599
    %v1832 = vpack.c.b16 %v1604, %v1600
    %v1833 = vpack.c.b16 %v1609, %v1605
    %v1834 = vpack.c.b16 %v1610, %v1606
    %v1835 = vpack.c.b16 %v1611, %v1607
    %v1836 = vpack.c.b16 %v1612, %v1608
    %v1837 = vpack.c.b16 %v1617, %v1613
    %v1838 = vpack.c.b16 %v1618, %v1614
    %v1839 = vpack.c.b16 %v1619, %v1615
    %v1840 = vpack.c.b16 %v1620, %v1616
    %v1841 = vpack.c.b16 %v1625, %v1621
    %v1842 = vpack.c.b16 %v1626, %v1622
    %v1843 = vpack.c.b16 %v1627, %v1623
    %v1844 = vpack.c.b16 %v1628, %v1624
    %v1845 = vpack.c.b16 %v1633, %v1629
    %v1846 = vpack.c.b16 %v1634, %v1630
    %v1847 = vpack.c.b16 %v1635, %v1631
    %v1848 = vpack.c.b16 %v1636, %v1632
    %v1849 = vpack.c.b16 %v1641, %v1637
    %v1850 = vpack.c.b16 %v1642, %v1638
    %v1851 = vpack.c.b16 %v1643, %v1639
    %v1852 = vpack.c.b16 %v1644, %v1640
    %v1853 = vpack.c.b16 %v1649, %v1645
    %v1854 = vpack.c.b16 %v1650, %v1646
    %v1855 = vpack.c.b16 %v1651, %v1647
    %v1856 = vpack.c.b16 %v1652, %v1648
    %v1857 = vpack.c.b16 %v1657, %v1653
    %v1858 = vpack.c.b16 %v1658, %v1654
    %v1859 = vpack.c.b16 %v1659, %v1655
    %v1860 = vpack.c.b16 %v1660, %v1656
    %v1861 = vpack.c.b16 %v1665, %v1661
    %v1862 = vpack.c.b16 %v1666, %v1662
    %v1863 = vpack.c.b16 %v1667, %v1663
    %v1864 = vpack.c.b16 %v1668, %v1664
    %v1865 = vpack.c.b16 %v1673, %v1669
    %v1866 = vpack.c.b16 %v1674, %v1670
    %v1867 = vpack.c.b16 %v1675, %v1671
    %v1868 = vpack.c.b16 %v1676, %v1672
    %v1869 = vpack.c.b16 %v1681, %v1677
    %v1870 = vpack.c.b16 %v1682, %v1678
    %v1871 = vpack.c.b16 %v1683, %v1679
    %v1872 = vpack.c.b16 %v1684, %v1680
    %v1873 = vpack.c.b16 %v1689, %v1685
    %v1874 = vpack.c.b16 %v1690, %v1686
    %v1875 = vpack.c.b16 %v1691, %v1687
    %v1876 = vpack.c.b16 %v1692, %v1688
    %v1877 = vpack.c.b16 %v1697, %v1693
    %v1878 = vpack.c.b16 %v1698, %v1694
    %v1879 = vpack.c.b16 %v1699, %v1695
    %v1880 = vpack.c.b16 %v1700, %v1696
    %v1881 = vpack.c.b16 %v1705, %v1701
    %v1882 = vpack.c.b16 %v1706, %v1702
    %v1883 = vpack.c.b16 %v1707, %v1703
    %v1884 = vpack.c.b16 %v1708, %v1704
    %v1885 = vpack.c.b16 %v1713, %v1709
    %v1886 = vpack.c.b16 %v1714, %v1710
    %v1887 = vpack.c.b16 %v1715, %v1711
    %v1888 = vpack.c.b16 %v1716, %v1712
    %v1889 = vpack.c.b16 %v1721, %v1717
    %v1890 = vpack.c.b16 %v1722, %v1718
    %v1891 = vpack.c.b16 %v1723, %v1719
    %v1892 = vpack.c.b16 %v1724, %v1720
    %v1893 = vpack.c.b16 %v1729, %v1725
    %v1894 = vpack.c.b16 %v1730, %v1726
    %v1895 = vpack.c.b16 %v1731, %v1727
    %v1896 = vpack.c.b16 %v1732, %v1728
    %v1897 = vpack.c.b16 %v1737, %v1733
    %v1898 = vpack.c.b16 %v1738, %v1734
    %v1899 = vpack.c.b16 %v1739, %v1735
    %v1900 = vpack.c.b16 %v1740, %v1736
    %v1901 = vpack.c.b16 %v1745, %v1741
    %v1902 = vpack.c.b16 %v1746, %v1742
    %v1903 = vpack.c.b16 %v1747, %v1743
    %v1904 = vpack.c.b16 %v1748, %v1744
    %v1905 = vpack.c.b16 %v1753, %v1749
    %v1906 = vpack.c.b16 %v1754, %v1750
    %v1907 = vpack.c.b16 %v1755, %v1751
    %v1908 = vpack.c.b16 %v1756, %v1752
    %v1909 = vpack.c.b16 %v1761, %v1757
    %v1910 = vpack.c.b16 %v1762, %v1758
    %v1911 = vpack.c.b16 %v1763, %v1759
    %v1912 = vpack.c.b16 %v1764, %v1760
    %v1913 = vpack.c.b16 %v1769, %v1765
    %v1914 = vpack.c.b16 %v1770, %v1766
    %v1915 = vpack.c.b16 %v1771, %v1767
    %v1916 = vpack.c.b16 %v1772, %v1768
    %v1917 = vpack.c.b16 %v1777, %v1773
    %v1918 = vpack.c.b16 %v1778, %v1774
    %v1919 = vpack.c.b16 %v1779, %v1775
    %v1920 = vpack.c.b16 %v1780, %v1776
    %v1921 = vpack.c.b16 %v1785, %v1781
    %v1922 = vpack.c.b16 %v1786, %v1782
    %v1923 = vpack.c.b16 %v1787, %v1783
    %v1924 = vpack.c.b16 %v1788, %v1784
    %v1925 = vpack.c.b16 %v1793, %v1789
    %v1926 = vpack.c.b16 %v1794, %v1790
    %v1927 = vpack.c.b16 %v1795, %v1791
    %v1928 = vpack.c.b16 %v1796, %v1792
    %v1929 = vpack.c.b16 %v1801, %v1797
    %v1930 = vpack.c.b16 %v1802, %v1798
    %v1931 = vpack.c.b16 %v1803, %v1799
    %v1932 = vpack.c.b16 %v1804, %v1800
    %2061 = vmatprep.subr.bf16.mxu0 %v1834
    %2062 = vmatpush1.bf16.msra.mxu0 %v1833
    %2063 = vmatprep.subr.bf16.mxu0 %v1830
    %2064 = vmatpush1.bf16.msra.mxu0 %v1829
    %2065 = vmatprep.subr.bf16.mxu0 %v1826
    %2066 = vmatpush1.bf16.msra.mxu0 %v1825
    %2067 = vmatprep.subr.bf16.mxu0 %v1822
    %2068 = vmatpush1.bf16.msra.mxu0 %v1821
    %2069 = vmatprep.subr.bf16.mxu0 %v1818
    %2070 = vmatpush1.bf16.msra.mxu0 %v1817
    %2071 = vmatprep.subr.bf16.mxu0 %v1814
    %2072 = vmatpush1.bf16.msra.mxu0 %v1813
    %2073 = vmatprep.subr.bf16.mxu0 %v1810
    %2074 = vmatpush1.bf16.msra.mxu0 %v1809
    %2075 = vmatprep.subr.bf16.mxu0 %v1806
    %2076 = vmatpush1.bf16.msra.mxu0 %v1805
    %2077 = vmatprep.subr.bf16.mxu0 %v1866
    %2078 = vmatpush2.bf16.msra.mxu0 %v1865
    %2079 = vmatprep.subr.bf16.mxu0 %v1862
    %2080 = vmatpush2.bf16.msra.mxu0 %v1861
    %2081 = vmatprep.subr.bf16.mxu0 %v1858
    %2082 = vmatpush2.bf16.msra.mxu0 %v1857
    %2083 = vmatprep.subr.bf16.mxu0 %v1854
    %2084 = vmatpush2.bf16.msra.mxu0 %v1853
    %2085 = vmatprep.subr.bf16.mxu0 %v1850
    %2086 = vmatpush2.bf16.msra.mxu0 %v1849
    %2087 = vmatprep.subr.bf16.mxu0 %v1846
    %2088 = vmatpush2.bf16.msra.mxu0 %v1845
    %2089 = vmatprep.subr.bf16.mxu0 %v1842
    %2090 = vmatpush2.bf16.msra.mxu0 %v1841
    %2091 = vmatprep.subr.bf16.mxu0 %v1838
    %2092 = vmatpush2.bf16.msra.mxu0 %v1837
    %2093 = vmatprep.mubr.bf16.mxu0 %v1289
    %2094 = vmatmul.mubr.bf16.gmra.mxu0 %v1288
    %v2095 = vpop.f32.mrf.mxu0
    %v2096 = vadd.f32 0.0, %v2095
    %v2097 = vpop.f32.mrf.mxu0
    %v2098 = vadd.f32 0.0, %v2097
    %v2099 = vpop.f32.mrf.mxu0
    %v2100 = vadd.f32 0.0, %v2099
    %v2101 = vpop.f32.mrf.mxu0
    %v2102 = vadd.f32 0.0, %v2101
    %2103 = vdwg.mxu0
    %2104 = vmatprep.subr.bf16.mxu0 %v1898
    %2105 = vmatpush1.bf16.msra.mxu0 %v1897
    %2106 = vmatprep.subr.bf16.mxu0 %v1894
    %2107 = vmatpush1.bf16.msra.mxu0 %v1893
    %2108 = vmatprep.subr.bf16.mxu0 %v1890
    %2109 = vmatpush1.bf16.msra.mxu0 %v1889
    %2110 = vmatprep.subr.bf16.mxu0 %v1886
    %2111 = vmatpush1.bf16.msra.mxu0 %v1885
    %2112 = vmatprep.subr.bf16.mxu0 %v1882
    %2113 = vmatpush1.bf16.msra.mxu0 %v1881
    %2114 = vmatprep.subr.bf16.mxu0 %v1878
    %2115 = vmatpush1.bf16.msra.mxu0 %v1877
    %2116 = vmatprep.subr.bf16.mxu0 %v1874
    %2117 = vmatpush1.bf16.msra.mxu0 %v1873
    %2118 = vmatprep.subr.bf16.mxu0 %v1870
    %2119 = vmatpush1.bf16.msra.mxu0 %v1869
    %2120 = vmatprep.subr.bf16.mxu0 %v1930
    %2121 = vmatpush2.bf16.msra.mxu0 %v1929
    %2122 = vmatprep.subr.bf16.mxu0 %v1926
    %2123 = vmatpush2.bf16.msra.mxu0 %v1925
    %2124 = vmatprep.subr.bf16.mxu0 %v1922
    %2125 = vmatpush2.bf16.msra.mxu0 %v1921
    %2126 = vmatprep.subr.bf16.mxu0 %v1918
    %2127 = vmatpush2.bf16.msra.mxu0 %v1917
    %2128 = vmatprep.subr.bf16.mxu0 %v1914
    %2129 = vmatpush2.bf16.msra.mxu0 %v1913
    %2130 = vmatprep.subr.bf16.mxu0 %v1910
    %2131 = vmatpush2.bf16.msra.mxu0 %v1909
    %2132 = vmatprep.subr.bf16.mxu0 %v1906
    %2133 = vmatpush2.bf16.msra.mxu0 %v1905
    %2134 = vmatprep.subr.bf16.mxu0 %v1902
    %2135 = vmatpush2.bf16.msra.mxu0 %v1901
    %2136 = vmatprep.mubr.bf16.mxu0 %v1291
    %2137 = vmatmul.mubr.bf16.gmra.mxu0 %v1290
    %v2138 = vpop.f32.mrf.mxu0
    %v2139 = vadd.f32 %v2096, %v2138
    %v2140 = vpop.f32.mrf.mxu0
    %v2141 = vadd.f32 %v2098, %v2140
    %v2142 = vpop.f32.mrf.mxu0
    %v2143 = vadd.f32 %v2100, %v2142
    %v2144 = vpop.f32.mrf.mxu0
    %v2145 = vadd.f32 %v2102, %v2144
    %2146 = vdwg.mxu0
    %2147 = vmatprep.subr.bf16.mxu0 %v1836
    %2148 = vmatpush1.bf16.msra.mxu0 %v1835
    %2149 = vmatprep.subr.bf16.mxu0 %v1832
    %2150 = vmatpush1.bf16.msra.mxu0 %v1831
    %2151 = vmatprep.subr.bf16.mxu0 %v1828
    %2152 = vmatpush1.bf16.msra.mxu0 %v1827
    %2153 = vmatprep.subr.bf16.mxu0 %v1824
    %2154 = vmatpush1.bf16.msra.mxu0 %v1823
    %2155 = vmatprep.subr.bf16.mxu0 %v1820
    %2156 = vmatpush1.bf16.msra.mxu0 %v1819
    %2157 = vmatprep.subr.bf16.mxu0 %v1816
    %2158 = vmatpush1.bf16.msra.mxu0 %v1815
    %2159 = vmatprep.subr.bf16.mxu0 %v1812
    %2160 = vmatpush1.bf16.msra.mxu0 %v1811
    %2161 = vmatprep.subr.bf16.mxu0 %v1808
    %2162 = vmatpush1.bf16.msra.mxu0 %v1807
    %2163 = vmatprep.subr.bf16.mxu0 %v1868
    %2164 = vmatpush2.bf16.msra.mxu0 %v1867
    %2165 = vmatprep.subr.bf16.mxu0 %v1864
    %2166 = vmatpush2.bf16.msra.mxu0 %v1863
    %2167 = vmatprep.subr.bf16.mxu0 %v1860
    %2168 = vmatpush2.bf16.msra.mxu0 %v1859
    %2169 = vmatprep.subr.bf16.mxu0 %v1856
    %2170 = vmatpush2.bf16.msra.mxu0 %v1855
    %2171 = vmatprep.subr.bf16.mxu0 %v1852
    %2172 = vmatpush2.bf16.msra.mxu0 %v1851
    %2173 = vmatprep.subr.bf16.mxu0 %v1848
    %2174 = vmatpush2.bf16.msra.mxu0 %v1847
    %2175 = vmatprep.subr.bf16.mxu0 %v1844
    %2176 = vmatpush2.bf16.msra.mxu0 %v1843
    %2177 = vmatprep.subr.bf16.mxu0 %v1840
    %2178 = vmatpush2.bf16.msra.mxu0 %v1839
    %2179 = vmatprep.mubr.bf16.mxu0 %v1289
    %2180 = vmatmul.mubr.bf16.gmra.mxu0 %v1288
    %v2181 = vpop.f32.mrf.mxu0
    %v2182 = vadd.f32 0.0, %v2181
    %v2183 = vpop.f32.mrf.mxu0
    %v2184 = vadd.f32 0.0, %v2183
    %v2185 = vpop.f32.mrf.mxu0
    %v2186 = vadd.f32 0.0, %v2185
    %v2187 = vpop.f32.mrf.mxu0
    %v2188 = vadd.f32 0.0, %v2187
    %2189 = vdwg.mxu0
    %2190 = vmatprep.subr.bf16.mxu0 %v1900
    %2191 = vmatpush1.bf16.msra.mxu0 %v1899
    %2192 = vmatprep.subr.bf16.mxu0 %v1896
    %2193 = vmatpush1.bf16.msra.mxu0 %v1895
    %2194 = vmatprep.subr.bf16.mxu0 %v1892
    %2195 = vmatpush1.bf16.msra.mxu0 %v1891
    %2196 = vmatprep.subr.bf16.mxu0 %v1888
    %2197 = vmatpush1.bf16.msra.mxu0 %v1887
    %2198 = vmatprep.subr.bf16.mxu0 %v1884
    %2199 = vmatpush1.bf16.msra.mxu0 %v1883
    %2200 = vmatprep.subr.bf16.mxu0 %v1880
    %2201 = vmatpush1.bf16.msra.mxu0 %v1879
    %2202 = vmatprep.subr.bf16.mxu0 %v1876
    %2203 = vmatpush1.bf16.msra.mxu0 %v1875
    %2204 = vmatprep.subr.bf16.mxu0 %v1872
    %2205 = vmatpush1.bf16.msra.mxu0 %v1871
    %2206 = vmatprep.subr.bf16.mxu0 %v1932
    %2207 = vmatpush2.bf16.msra.mxu0 %v1931
    %2208 = vmatprep.subr.bf16.mxu0 %v1928
    %2209 = vmatpush2.bf16.msra.mxu0 %v1927
    %2210 = vmatprep.subr.bf16.mxu0 %v1924
    %2211 = vmatpush2.bf16.msra.mxu0 %v1923
    %2212 = vmatprep.subr.bf16.mxu0 %v1920
    %2213 = vmatpush2.bf16.msra.mxu0 %v1919
    %2214 = vmatprep.subr.bf16.mxu0 %v1916
    %2215 = vmatpush2.bf16.msra.mxu0 %v1915
    %2216 = vmatprep.subr.bf16.mxu0 %v1912
    %2217 = vmatpush2.bf16.msra.mxu0 %v1911
    %2218 = vmatprep.subr.bf16.mxu0 %v1908
    %2219 = vmatpush2.bf16.msra.mxu0 %v1907
    %2220 = vmatprep.subr.bf16.mxu0 %v1904
    %2221 = vmatpush2.bf16.msra.mxu0 %v1903
    %2222 = vmatprep.mubr.bf16.mxu0 %v1291
    %2223 = vmatmul.mubr.bf16.gmra.mxu0 %v1290
    %v2224 = vpop.f32.mrf.mxu0
    %v2225 = vadd.f32 %v2182, %v2224
    %v2226 = vpop.f32.mrf.mxu0
    %v2227 = vadd.f32 %v2184, %v2226
    %v2228 = vpop.f32.mrf.mxu0
    %v2229 = vadd.f32 %v2186, %v2228
    %v2230 = vpop.f32.mrf.mxu0
    %v2231 = vadd.f32 %v2188, %v2230
    %2232 = vdwg.mxu0
    %v2233 = vpack.c.bf16 %v2143, %v2139
    %v2234 = vpack.c.bf16 %v2145, %v2141
    %v2235 = vpack.c.bf16 %v2229, %v2225
    %v2236 = vpack.c.bf16 %v2231, %v2227
    %v2239 = vunpack.c.l.s4 1966171168
    %v2240 = vunpack.c.0.s8 %v2239
    %v2241 = vlaneseq
    %v2242 = vshrl.u32 %v2241, 7
    %v2243 = vsub.s32 %v2240, %v2242
    %v2244 = vrot.slane %v1420, %v2243
    %v2245 = vcombine.high %v2244, %v2244
    %v2247 = vunpack.c.l.s4 1966171168
    %v2248 = vunpack.c.0.s8 %v2247
    %v2249 = vlaneseq
    %v2250 = vshrl.u32 %v2249, 7
    %v2251 = vsub.s32 %v2248, %v2250
    %v2252 = vrot.slane %v2244, %v2251
    %v2254 = vunpack.c.l.s4 1966171168
    %v2255 = vunpack.c.0.s8 %v2254
    %v2256 = vlaneseq
    %v2257 = vshrl.u32 %v2256, 7
    %v2258 = vsub.s32 %v2255, %v2257
    %v2259 = vrot.slane %v2245, %v2258
    %v2260 = vcombine.high %v2252, %v2252
    %v2261 = vcombine.high %v2259, %v2259
    %v2263 = vpack.i.b16 %v2252, %v2252
    %v2265 = vlaneseq
    %v2266 = vshrl.u32 %v2265, 7
    %v2267 = vsub.s32 0, %v2266
    %v2268 = vrot.slane %v2263, %v2267
    %v2270 = vpack.i.b16 %v2259, %v2259
    %v2272 = vlaneseq
    %v2273 = vshrl.u32 %v2272, 7
    %v2274 = vsub.s32 0, %v2273
    %v2275 = vrot.slane %v2270, %v2274
    %v2277 = vpack.i.b16 %v2260, %v2260
    %v2279 = vlaneseq
    %v2280 = vshrl.u32 %v2279, 7
    %v2281 = vsub.s32 0, %v2280
    %v2282 = vrot.slane %v2277, %v2281
    %v2284 = vpack.i.b16 %v2261, %v2261
    %v2286 = vlaneseq
    %v2287 = vshrl.u32 %v2286, 7
    %v2288 = vsub.s32 0, %v2287
    %v2289 = vrot.slane %v2284, %v2288
    %v2290 = vadd.bf16 %v2233, %v2268
    %v2291 = vadd.bf16 %v2234, %v2275
    %v2292 = vadd.bf16 %v2235, %v2282
    %v2293 = vadd.bf16 %v2236, %v2289
    %v2294 = vmax.bf16 %v2290, 0
    %v2295 = vmax.bf16 %v2291, 0
    %v2296 = vmax.bf16 %v2292, 0
    %v2297 = vmax.bf16 %v2293, 0
    %v2298 = vld [vmem:[#allocation6] sm:$0xff]
    %v2299 = vld [vmem:[#allocation6 + $0x8] sm:$0xff]
    %v2300 = vld [vmem:[#allocation6 + $0x10] sm:$0xff]
    %v2301 = vld [vmem:[#allocation6 + $0x18] sm:$0xff]
    %v2302 = vld [vmem:[#allocation6 + $0x20] sm:$0xff]
    %v2303 = vld [vmem:[#allocation6 + $0x28] sm:$0xff]
    %v2304 = vld [vmem:[#allocation6 + $0x30] sm:$0xff]
    %v2305 = vld [vmem:[#allocation6 + $0x38] sm:$0xff]
    %v2306 = vld [vmem:[#allocation6 + $0x40] sm:$0xff]
    %v2307 = vld [vmem:[#allocation6 + $0x48] sm:$0xff]
    %v2308 = vld [vmem:[#allocation6 + $0x50] sm:$0xff]
    %v2309 = vld [vmem:[#allocation6 + $0x58] sm:$0xff]
    %v2310 = vld [vmem:[#allocation6 + $0x60] sm:$0xff]
    %v2311 = vld [vmem:[#allocation6 + $0x68] sm:$0xff]
    %v2312 = vld [vmem:[#allocation6 + $0x70] sm:$0xff]
    %v2313 = vld [vmem:[#allocation6 + $0x78] sm:$0xff]
    %v2314 = vld [vmem:[#allocation6 + $0x80] sm:$0xff]
    %v2315 = vld [vmem:[#allocation6 + $0x88] sm:$0xff]
    %v2316 = vld [vmem:[#allocation6 + $0x90] sm:$0xff]
    %v2317 = vld [vmem:[#allocation6 + $0x98] sm:$0xff]
    %v2318 = vld [vmem:[#allocation6 + $0xa0] sm:$0xff]
    %v2319 = vld [vmem:[#allocation6 + $0xa8] sm:$0xff]
    %v2320 = vld [vmem:[#allocation6 + $0xb0] sm:$0xff]
    %v2321 = vld [vmem:[#allocation6 + $0xb8] sm:$0xff]
    %v2322 = vld [vmem:[#allocation6 + $0xc0] sm:$0xff]
    %v2323 = vld [vmem:[#allocation6 + $0xc8] sm:$0xff]
    %v2324 = vld [vmem:[#allocation6 + $0xd0] sm:$0xff]
    %v2325 = vld [vmem:[#allocation6 + $0xd8] sm:$0xff]
    %v2326 = vld [vmem:[#allocation6 + $0xe0] sm:$0xff]
    %v2327 = vld [vmem:[#allocation6 + $0xe8] sm:$0xff]
    %v2328 = vld [vmem:[#allocation6 + $0xf0] sm:$0xff]
    %v2329 = vld [vmem:[#allocation6 + $0xf8] sm:$0xff]
    %v2330 = vld [vmem:[#allocation6 + $0x100] sm:$0xff]
    %v2331 = vld [vmem:[#allocation6 + $0x108] sm:$0xff]
    %v2332 = vld [vmem:[#allocation6 + $0x110] sm:$0xff]
    %v2333 = vld [vmem:[#allocation6 + $0x118] sm:$0xff]
    %v2334 = vld [vmem:[#allocation6 + $0x120] sm:$0xff]
    %v2335 = vld [vmem:[#allocation6 + $0x128] sm:$0xff]
    %v2336 = vld [vmem:[#allocation6 + $0x130] sm:$0xff]
    %v2337 = vld [vmem:[#allocation6 + $0x138] sm:$0xff]
    %v2338 = vld [vmem:[#allocation6 + $0x140] sm:$0xff]
    %v2339 = vld [vmem:[#allocation6 + $0x148] sm:$0xff]
    %v2340 = vld [vmem:[#allocation6 + $0x150] sm:$0xff]
    %v2341 = vld [vmem:[#allocation6 + $0x158] sm:$0xff]
    %v2342 = vld [vmem:[#allocation6 + $0x160] sm:$0xff]
    %v2343 = vld [vmem:[#allocation6 + $0x168] sm:$0xff]
    %v2344 = vld [vmem:[#allocation6 + $0x170] sm:$0xff]
    %v2345 = vld [vmem:[#allocation6 + $0x178] sm:$0xff]
    %v2346 = vld [vmem:[#allocation6 + $0x180] sm:$0xff]
    %v2347 = vld [vmem:[#allocation6 + $0x188] sm:$0xff]
    %v2348 = vld [vmem:[#allocation6 + $0x190] sm:$0xff]
    %v2349 = vld [vmem:[#allocation6 + $0x198] sm:$0xff]
    %v2350 = vld [vmem:[#allocation6 + $0x1a0] sm:$0xff]
    %v2351 = vld [vmem:[#allocation6 + $0x1a8] sm:$0xff]
    %v2352 = vld [vmem:[#allocation6 + $0x1b0] sm:$0xff]
    %v2353 = vld [vmem:[#allocation6 + $0x1b8] sm:$0xff]
    %v2354 = vld [vmem:[#allocation6 + $0x1c0] sm:$0xff]
    %v2355 = vld [vmem:[#allocation6 + $0x1c8] sm:$0xff]
    %v2356 = vld [vmem:[#allocation6 + $0x1d0] sm:$0xff]
    %v2357 = vld [vmem:[#allocation6 + $0x1d8] sm:$0xff]
    %v2358 = vld [vmem:[#allocation6 + $0x1e0] sm:$0xff]
    %v2359 = vld [vmem:[#allocation6 + $0x1e8] sm:$0xff]
    %v2360 = vld [vmem:[#allocation6 + $0x1f0] sm:$0xff]
    %v2361 = vld [vmem:[#allocation6 + $0x1f8] sm:$0xff]
    %v2362 = vld [vmem:[#allocation6 + $0x200] sm:$0xff]
    %v2363 = vld [vmem:[#allocation6 + $0x208] sm:$0xff]
    %v2364 = vld [vmem:[#allocation6 + $0x210] sm:$0xff]
    %v2365 = vld [vmem:[#allocation6 + $0x218] sm:$0xff]
    %v2366 = vld [vmem:[#allocation6 + $0x220] sm:$0xff]
    %v2367 = vld [vmem:[#allocation6 + $0x228] sm:$0xff]
    %v2368 = vld [vmem:[#allocation6 + $0x230] sm:$0xff]
    %v2369 = vld [vmem:[#allocation6 + $0x238] sm:$0xff]
    %v2370 = vld [vmem:[#allocation6 + $0x240] sm:$0xff]
    %v2371 = vld [vmem:[#allocation6 + $0x248] sm:$0xff]
    %v2372 = vld [vmem:[#allocation6 + $0x250] sm:$0xff]
    %v2373 = vld [vmem:[#allocation6 + $0x258] sm:$0xff]
    %v2374 = vld [vmem:[#allocation6 + $0x260] sm:$0xff]
    %v2375 = vld [vmem:[#allocation6 + $0x268] sm:$0xff]
    %v2376 = vld [vmem:[#allocation6 + $0x270] sm:$0xff]
    %v2377 = vld [vmem:[#allocation6 + $0x278] sm:$0xff]
    %v2378 = vld [vmem:[#allocation6 + $0x280] sm:$0xff]
    %v2379 = vld [vmem:[#allocation6 + $0x288] sm:$0xff]
    %v2380 = vld [vmem:[#allocation6 + $0x290] sm:$0xff]
    %v2381 = vld [vmem:[#allocation6 + $0x298] sm:$0xff]
    %v2382 = vld [vmem:[#allocation6 + $0x2a0] sm:$0xff]
    %v2383 = vld [vmem:[#allocation6 + $0x2a8] sm:$0xff]
    %v2384 = vld [vmem:[#allocation6 + $0x2b0] sm:$0xff]
    %v2385 = vld [vmem:[#allocation6 + $0x2b8] sm:$0xff]
    %v2386 = vld [vmem:[#allocation6 + $0x2c0] sm:$0xff]
    %v2387 = vld [vmem:[#allocation6 + $0x2c8] sm:$0xff]
    %v2388 = vld [vmem:[#allocation6 + $0x2d0] sm:$0xff]
    %v2389 = vld [vmem:[#allocation6 + $0x2d8] sm:$0xff]
    %v2390 = vld [vmem:[#allocation6 + $0x2e0] sm:$0xff]
    %v2391 = vld [vmem:[#allocation6 + $0x2e8] sm:$0xff]
    %v2392 = vld [vmem:[#allocation6 + $0x2f0] sm:$0xff]
    %v2393 = vld [vmem:[#allocation6 + $0x2f8] sm:$0xff]
    %v2394 = vld [vmem:[#allocation6 + $0x300] sm:$0xff]
    %v2395 = vld [vmem:[#allocation6 + $0x308] sm:$0xff]
    %v2396 = vld [vmem:[#allocation6 + $0x310] sm:$0xff]
    %v2397 = vld [vmem:[#allocation6 + $0x318] sm:$0xff]
    %v2398 = vld [vmem:[#allocation6 + $0x320] sm:$0xff]
    %v2399 = vld [vmem:[#allocation6 + $0x328] sm:$0xff]
    %v2400 = vld [vmem:[#allocation6 + $0x330] sm:$0xff]
    %v2401 = vld [vmem:[#allocation6 + $0x338] sm:$0xff]
    %v2402 = vld [vmem:[#allocation6 + $0x340] sm:$0xff]
    %v2403 = vld [vmem:[#allocation6 + $0x348] sm:$0xff]
    %v2404 = vld [vmem:[#allocation6 + $0x350] sm:$0xff]
    %v2405 = vld [vmem:[#allocation6 + $0x358] sm:$0xff]
    %v2406 = vld [vmem:[#allocation6 + $0x360] sm:$0xff]
    %v2407 = vld [vmem:[#allocation6 + $0x368] sm:$0xff]
    %v2408 = vld [vmem:[#allocation6 + $0x370] sm:$0xff]
    %v2409 = vld [vmem:[#allocation6 + $0x378] sm:$0xff]
    %v2410 = vld [vmem:[#allocation6 + $0x380] sm:$0xff]
    %v2411 = vld [vmem:[#allocation6 + $0x388] sm:$0xff]
    %v2412 = vld [vmem:[#allocation6 + $0x390] sm:$0xff]
    %v2413 = vld [vmem:[#allocation6 + $0x398] sm:$0xff]
    %v2414 = vld [vmem:[#allocation6 + $0x3a0] sm:$0xff]
    %v2415 = vld [vmem:[#allocation6 + $0x3a8] sm:$0xff]
    %v2416 = vld [vmem:[#allocation6 + $0x3b0] sm:$0xff]
    %v2417 = vld [vmem:[#allocation6 + $0x3b8] sm:$0xff]
    %v2418 = vld [vmem:[#allocation6 + $0x3c0] sm:$0xff]
    %v2419 = vld [vmem:[#allocation6 + $0x3c8] sm:$0xff]
    %v2420 = vld [vmem:[#allocation6 + $0x3d0] sm:$0xff]
    %v2421 = vld [vmem:[#allocation6 + $0x3d8] sm:$0xff]
    %v2422 = vld [vmem:[#allocation6 + $0x3e0] sm:$0xff]
    %v2423 = vld [vmem:[#allocation6 + $0x3e8] sm:$0xff]
    %v2424 = vld [vmem:[#allocation6 + $0x3f0] sm:$0xff]
    %v2425 = vld [vmem:[#allocation6 + $0x3f8] sm:$0xff]
    %v2426 = vld [vmem:[%s8] sm:$0xf]
    %v2555 = vunpack.c.l.b16 %v2298
    %v2556 = vunpack.c.h.b16 %v2298
    %v2557 = vunpack.c.l.b16 %v2299
    %v2558 = vunpack.c.h.b16 %v2299
    %v2559 = vunpack.c.l.b16 %v2300
    %v2560 = vunpack.c.h.b16 %v2300
    %v2561 = vunpack.c.l.b16 %v2301
    %v2562 = vunpack.c.h.b16 %v2301
    %v2563 = vunpack.c.l.b16 %v2302
    %v2564 = vunpack.c.h.b16 %v2302
    %v2565 = vunpack.c.l.b16 %v2303
    %v2566 = vunpack.c.h.b16 %v2303
    %v2567 = vunpack.c.l.b16 %v2304
    %v2568 = vunpack.c.h.b16 %v2304
    %v2569 = vunpack.c.l.b16 %v2305
    %v2570 = vunpack.c.h.b16 %v2305
    %v2571 = vunpack.c.l.b16 %v2306
    %v2572 = vunpack.c.h.b16 %v2306
    %v2573 = vunpack.c.l.b16 %v2307
    %v2574 = vunpack.c.h.b16 %v2307
    %v2575 = vunpack.c.l.b16 %v2308
    %v2576 = vunpack.c.h.b16 %v2308
    %v2577 = vunpack.c.l.b16 %v2309
    %v2578 = vunpack.c.h.b16 %v2309
    %v2579 = vunpack.c.l.b16 %v2310
    %v2580 = vunpack.c.h.b16 %v2310
    %v2581 = vunpack.c.l.b16 %v2311
    %v2582 = vunpack.c.h.b16 %v2311
    %v2583 = vunpack.c.l.b16 %v2312
    %v2584 = vunpack.c.h.b16 %v2312
    %v2585 = vunpack.c.l.b16 %v2313
    %v2586 = vunpack.c.h.b16 %v2313
    %v2587 = vunpack.c.l.b16 %v2314
    %v2588 = vunpack.c.h.b16 %v2314
    %v2589 = vunpack.c.l.b16 %v2315
    %v2590 = vunpack.c.h.b16 %v2315
    %v2591 = vunpack.c.l.b16 %v2316
    %v2592 = vunpack.c.h.b16 %v2316
    %v2593 = vunpack.c.l.b16 %v2317
    %v2594 = vunpack.c.h.b16 %v2317
    %v2595 = vunpack.c.l.b16 %v2318
    %v2596 = vunpack.c.h.b16 %v2318
    %v2597 = vunpack.c.l.b16 %v2319
    %v2598 = vunpack.c.h.b16 %v2319
    %v2599 = vunpack.c.l.b16 %v2320
    %v2600 = vunpack.c.h.b16 %v2320
    %v2601 = vunpack.c.l.b16 %v2321
    %v2602 = vunpack.c.h.b16 %v2321
    %v2603 = vunpack.c.l.b16 %v2322
    %v2604 = vunpack.c.h.b16 %v2322
    %v2605 = vunpack.c.l.b16 %v2323
    %v2606 = vunpack.c.h.b16 %v2323
    %v2607 = vunpack.c.l.b16 %v2324
    %v2608 = vunpack.c.h.b16 %v2324
    %v2609 = vunpack.c.l.b16 %v2325
    %v2610 = vunpack.c.h.b16 %v2325
    %v2611 = vunpack.c.l.b16 %v2326
    %v2612 = vunpack.c.h.b16 %v2326
    %v2613 = vunpack.c.l.b16 %v2327
    %v2614 = vunpack.c.h.b16 %v2327
    %v2615 = vunpack.c.l.b16 %v2328
    %v2616 = vunpack.c.h.b16 %v2328
    %v2617 = vunpack.c.l.b16 %v2329
    %v2618 = vunpack.c.h.b16 %v2329
    %v2619 = vunpack.c.l.b16 %v2330
    %v2620 = vunpack.c.h.b16 %v2330
    %v2621 = vunpack.c.l.b16 %v2331
    %v2622 = vunpack.c.h.b16 %v2331
    %v2623 = vunpack.c.l.b16 %v2332
    %v2624 = vunpack.c.h.b16 %v2332
    %v2625 = vunpack.c.l.b16 %v2333
    %v2626 = vunpack.c.h.b16 %v2333
    %v2627 = vunpack.c.l.b16 %v2334
    %v2628 = vunpack.c.h.b16 %v2334
    %v2629 = vunpack.c.l.b16 %v2335
    %v2630 = vunpack.c.h.b16 %v2335
    %v2631 = vunpack.c.l.b16 %v2336
    %v2632 = vunpack.c.h.b16 %v2336
    %v2633 = vunpack.c.l.b16 %v2337
    %v2634 = vunpack.c.h.b16 %v2337
    %v2635 = vunpack.c.l.b16 %v2338
    %v2636 = vunpack.c.h.b16 %v2338
    %v2637 = vunpack.c.l.b16 %v2339
    %v2638 = vunpack.c.h.b16 %v2339
    %v2639 = vunpack.c.l.b16 %v2340
    %v2640 = vunpack.c.h.b16 %v2340
    %v2641 = vunpack.c.l.b16 %v2341
    %v2642 = vunpack.c.h.b16 %v2341
    %v2643 = vunpack.c.l.b16 %v2342
    %v2644 = vunpack.c.h.b16 %v2342
    %v2645 = vunpack.c.l.b16 %v2343
    %v2646 = vunpack.c.h.b16 %v2343
    %v2647 = vunpack.c.l.b16 %v2344
    %v2648 = vunpack.c.h.b16 %v2344
    %v2649 = vunpack.c.l.b16 %v2345
    %v2650 = vunpack.c.h.b16 %v2345
    %v2651 = vunpack.c.l.b16 %v2346
    %v2652 = vunpack.c.h.b16 %v2346
    %v2653 = vunpack.c.l.b16 %v2347
    %v2654 = vunpack.c.h.b16 %v2347
    %v2655 = vunpack.c.l.b16 %v2348
    %v2656 = vunpack.c.h.b16 %v2348
    %v2657 = vunpack.c.l.b16 %v2349
    %v2658 = vunpack.c.h.b16 %v2349
    %v2659 = vunpack.c.l.b16 %v2350
    %v2660 = vunpack.c.h.b16 %v2350
    %v2661 = vunpack.c.l.b16 %v2351
    %v2662 = vunpack.c.h.b16 %v2351
    %v2663 = vunpack.c.l.b16 %v2352
    %v2664 = vunpack.c.h.b16 %v2352
    %v2665 = vunpack.c.l.b16 %v2353
    %v2666 = vunpack.c.h.b16 %v2353
    %v2667 = vunpack.c.l.b16 %v2354
    %v2668 = vunpack.c.h.b16 %v2354
    %v2669 = vunpack.c.l.b16 %v2355
    %v2670 = vunpack.c.h.b16 %v2355
    %v2671 = vunpack.c.l.b16 %v2356
    %v2672 = vunpack.c.h.b16 %v2356
    %v2673 = vunpack.c.l.b16 %v2357
    %v2674 = vunpack.c.h.b16 %v2357
    %v2675 = vunpack.c.l.b16 %v2358
    %v2676 = vunpack.c.h.b16 %v2358
    %v2677 = vunpack.c.l.b16 %v2359
    %v2678 = vunpack.c.h.b16 %v2359
    %v2679 = vunpack.c.l.b16 %v2360
    %v2680 = vunpack.c.h.b16 %v2360
    %v2681 = vunpack.c.l.b16 %v2361
    %v2682 = vunpack.c.h.b16 %v2361
    %v2683 = vunpack.c.l.b16 %v2362
    %v2684 = vunpack.c.h.b16 %v2362
    %v2685 = vunpack.c.l.b16 %v2363
    %v2686 = vunpack.c.h.b16 %v2363
    %v2687 = vunpack.c.l.b16 %v2364
    %v2688 = vunpack.c.h.b16 %v2364
    %v2689 = vunpack.c.l.b16 %v2365
    %v2690 = vunpack.c.h.b16 %v2365
    %v2691 = vunpack.c.l.b16 %v2366
    %v2692 = vunpack.c.h.b16 %v2366
    %v2693 = vunpack.c.l.b16 %v2367
    %v2694 = vunpack.c.h.b16 %v2367
    %v2695 = vunpack.c.l.b16 %v2368
    %v2696 = vunpack.c.h.b16 %v2368
    %v2697 = vunpack.c.l.b16 %v2369
    %v2698 = vunpack.c.h.b16 %v2369
    %v2699 = vunpack.c.l.b16 %v2370
    %v2700 = vunpack.c.h.b16 %v2370
    %v2701 = vunpack.c.l.b16 %v2371
    %v2702 = vunpack.c.h.b16 %v2371
    %v2703 = vunpack.c.l.b16 %v2372
    %v2704 = vunpack.c.h.b16 %v2372
    %v2705 = vunpack.c.l.b16 %v2373
    %v2706 = vunpack.c.h.b16 %v2373
    %v2707 = vunpack.c.l.b16 %v2374
    %v2708 = vunpack.c.h.b16 %v2374
    %v2709 = vunpack.c.l.b16 %v2375
    %v2710 = vunpack.c.h.b16 %v2375
    %v2711 = vunpack.c.l.b16 %v2376
    %v2712 = vunpack.c.h.b16 %v2376
    %v2713 = vunpack.c.l.b16 %v2377
    %v2714 = vunpack.c.h.b16 %v2377
    %v2715 = vunpack.c.l.b16 %v2378
    %v2716 = vunpack.c.h.b16 %v2378
    %v2717 = vunpack.c.l.b16 %v2379
    %v2718 = vunpack.c.h.b16 %v2379
    %v2719 = vunpack.c.l.b16 %v2380
    %v2720 = vunpack.c.h.b16 %v2380
    %v2721 = vunpack.c.l.b16 %v2381
    %v2722 = vunpack.c.h.b16 %v2381
    %v2723 = vunpack.c.l.b16 %v2382
    %v2724 = vunpack.c.h.b16 %v2382
    %v2725 = vunpack.c.l.b16 %v2383
    %v2726 = vunpack.c.h.b16 %v2383
    %v2727 = vunpack.c.l.b16 %v2384
    %v2728 = vunpack.c.h.b16 %v2384
    %v2729 = vunpack.c.l.b16 %v2385
    %v2730 = vunpack.c.h.b16 %v2385
    %v2731 = vunpack.c.l.b16 %v2386
    %v2732 = vunpack.c.h.b16 %v2386
    %v2733 = vunpack.c.l.b16 %v2387
    %v2734 = vunpack.c.h.b16 %v2387
    %v2735 = vunpack.c.l.b16 %v2388
    %v2736 = vunpack.c.h.b16 %v2388
    %v2737 = vunpack.c.l.b16 %v2389
    %v2738 = vunpack.c.h.b16 %v2389
    %v2739 = vunpack.c.l.b16 %v2390
    %v2740 = vunpack.c.h.b16 %v2390
    %v2741 = vunpack.c.l.b16 %v2391
    %v2742 = vunpack.c.h.b16 %v2391
    %v2743 = vunpack.c.l.b16 %v2392
    %v2744 = vunpack.c.h.b16 %v2392
    %v2745 = vunpack.c.l.b16 %v2393
    %v2746 = vunpack.c.h.b16 %v2393
    %v2747 = vunpack.c.l.b16 %v2394
    %v2748 = vunpack.c.h.b16 %v2394
    %v2749 = vunpack.c.l.b16 %v2395
    %v2750 = vunpack.c.h.b16 %v2395
    %v2751 = vunpack.c.l.b16 %v2396
    %v2752 = vunpack.c.h.b16 %v2396
    %v2753 = vunpack.c.l.b16 %v2397
    %v2754 = vunpack.c.h.b16 %v2397
    %v2755 = vunpack.c.l.b16 %v2398
    %v2756 = vunpack.c.h.b16 %v2398
    %v2757 = vunpack.c.l.b16 %v2399
    %v2758 = vunpack.c.h.b16 %v2399
    %v2759 = vunpack.c.l.b16 %v2400
    %v2760 = vunpack.c.h.b16 %v2400
    %v2761 = vunpack.c.l.b16 %v2401
    %v2762 = vunpack.c.h.b16 %v2401
    %v2763 = vunpack.c.l.b16 %v2402
    %v2764 = vunpack.c.h.b16 %v2402
    %v2765 = vunpack.c.l.b16 %v2403
    %v2766 = vunpack.c.h.b16 %v2403
    %v2767 = vunpack.c.l.b16 %v2404
    %v2768 = vunpack.c.h.b16 %v2404
    %v2769 = vunpack.c.l.b16 %v2405
    %v2770 = vunpack.c.h.b16 %v2405
    %v2771 = vunpack.c.l.b16 %v2406
    %v2772 = vunpack.c.h.b16 %v2406
    %v2773 = vunpack.c.l.b16 %v2407
    %v2774 = vunpack.c.h.b16 %v2407
    %v2775 = vunpack.c.l.b16 %v2408
    %v2776 = vunpack.c.h.b16 %v2408
    %v2777 = vunpack.c.l.b16 %v2409
    %v2778 = vunpack.c.h.b16 %v2409
    %v2779 = vunpack.c.l.b16 %v2410
    %v2780 = vunpack.c.h.b16 %v2410
    %v2781 = vunpack.c.l.b16 %v2411
    %v2782 = vunpack.c.h.b16 %v2411
    %v2783 = vunpack.c.l.b16 %v2412
    %v2784 = vunpack.c.h.b16 %v2412
    %v2785 = vunpack.c.l.b16 %v2413
    %v2786 = vunpack.c.h.b16 %v2413
    %v2787 = vunpack.c.l.b16 %v2414
    %v2788 = vunpack.c.h.b16 %v2414
    %v2789 = vunpack.c.l.b16 %v2415
    %v2790 = vunpack.c.h.b16 %v2415
    %v2791 = vunpack.c.l.b16 %v2416
    %v2792 = vunpack.c.h.b16 %v2416
    %v2793 = vunpack.c.l.b16 %v2417
    %v2794 = vunpack.c.h.b16 %v2417
    %v2795 = vunpack.c.l.b16 %v2418
    %v2796 = vunpack.c.h.b16 %v2418
    %v2797 = vunpack.c.l.b16 %v2419
    %v2798 = vunpack.c.h.b16 %v2419
    %v2799 = vunpack.c.l.b16 %v2420
    %v2800 = vunpack.c.h.b16 %v2420
    %v2801 = vunpack.c.l.b16 %v2421
    %v2802 = vunpack.c.h.b16 %v2421
    %v2803 = vunpack.c.l.b16 %v2422
    %v2804 = vunpack.c.h.b16 %v2422
    %v2805 = vunpack.c.l.b16 %v2423
    %v2806 = vunpack.c.h.b16 %v2423
    %v2807 = vunpack.c.l.b16 %v2424
    %v2808 = vunpack.c.h.b16 %v2424
    %v2809 = vunpack.c.l.b16 %v2425
    %v2810 = vunpack.c.h.b16 %v2425
    %v2811 = vpack.c.b16 %v2559, %v2555
    %v2812 = vpack.c.b16 %v2560, %v2556
    %v2813 = vpack.c.b16 %v2561, %v2557
    %v2814 = vpack.c.b16 %v2562, %v2558
    %v2815 = vpack.c.b16 %v2567, %v2563
    %v2816 = vpack.c.b16 %v2568, %v2564
    %v2817 = vpack.c.b16 %v2569, %v2565
    %v2818 = vpack.c.b16 %v2570, %v2566
    %v2819 = vpack.c.b16 %v2575, %v2571
    %v2820 = vpack.c.b16 %v2576, %v2572
    %v2821 = vpack.c.b16 %v2577, %v2573
    %v2822 = vpack.c.b16 %v2578, %v2574
    %v2823 = vpack.c.b16 %v2583, %v2579
    %v2824 = vpack.c.b16 %v2584, %v2580
    %v2825 = vpack.c.b16 %v2585, %v2581
    %v2826 = vpack.c.b16 %v2586, %v2582
    %v2827 = vpack.c.b16 %v2591, %v2587
    %v2828 = vpack.c.b16 %v2592, %v2588
    %v2829 = vpack.c.b16 %v2593, %v2589
    %v2830 = vpack.c.b16 %v2594, %v2590
    %v2831 = vpack.c.b16 %v2599, %v2595
    %v2832 = vpack.c.b16 %v2600, %v2596
    %v2833 = vpack.c.b16 %v2601, %v2597
    %v2834 = vpack.c.b16 %v2602, %v2598
    %v2835 = vpack.c.b16 %v2607, %v2603
    %v2836 = vpack.c.b16 %v2608, %v2604
    %v2837 = vpack.c.b16 %v2609, %v2605
    %v2838 = vpack.c.b16 %v2610, %v2606
    %v2839 = vpack.c.b16 %v2615, %v2611
    %v2840 = vpack.c.b16 %v2616, %v2612
    %v2841 = vpack.c.b16 %v2617, %v2613
    %v2842 = vpack.c.b16 %v2618, %v2614
    %v2843 = vpack.c.b16 %v2623, %v2619
    %v2844 = vpack.c.b16 %v2624, %v2620
    %v2845 = vpack.c.b16 %v2625, %v2621
    %v2846 = vpack.c.b16 %v2626, %v2622
    %v2847 = vpack.c.b16 %v2631, %v2627
    %v2848 = vpack.c.b16 %v2632, %v2628
    %v2849 = vpack.c.b16 %v2633, %v2629
    %v2850 = vpack.c.b16 %v2634, %v2630
    %v2851 = vpack.c.b16 %v2639, %v2635
    %v2852 = vpack.c.b16 %v2640, %v2636
    %v2853 = vpack.c.b16 %v2641, %v2637
    %v2854 = vpack.c.b16 %v2642, %v2638
    %v2855 = vpack.c.b16 %v2647, %v2643
    %v2856 = vpack.c.b16 %v2648, %v2644
    %v2857 = vpack.c.b16 %v2649, %v2645
    %v2858 = vpack.c.b16 %v2650, %v2646
    %v2859 = vpack.c.b16 %v2655, %v2651
    %v2860 = vpack.c.b16 %v2656, %v2652
    %v2861 = vpack.c.b16 %v2657, %v2653
    %v2862 = vpack.c.b16 %v2658, %v2654
    %v2863 = vpack.c.b16 %v2663, %v2659
    %v2864 = vpack.c.b16 %v2664, %v2660
    %v2865 = vpack.c.b16 %v2665, %v2661
    %v2866 = vpack.c.b16 %v2666, %v2662
    %v2867 = vpack.c.b16 %v2671, %v2667
    %v2868 = vpack.c.b16 %v2672, %v2668
    %v2869 = vpack.c.b16 %v2673, %v2669
    %v2870 = vpack.c.b16 %v2674, %v2670
    %v2871 = vpack.c.b16 %v2679, %v2675
    %v2872 = vpack.c.b16 %v2680, %v2676
    %v2873 = vpack.c.b16 %v2681, %v2677
    %v2874 = vpack.c.b16 %v2682, %v2678
    %v2875 = vpack.c.b16 %v2687, %v2683
    %v2876 = vpack.c.b16 %v2688, %v2684
    %v2877 = vpack.c.b16 %v2689, %v2685
    %v2878 = vpack.c.b16 %v2690, %v2686
    %v2879 = vpack.c.b16 %v2695, %v2691
    %v2880 = vpack.c.b16 %v2696, %v2692
    %v2881 = vpack.c.b16 %v2697, %v2693
    %v2882 = vpack.c.b16 %v2698, %v2694
    %v2883 = vpack.c.b16 %v2703, %v2699
    %v2884 = vpack.c.b16 %v2704, %v2700
    %v2885 = vpack.c.b16 %v2705, %v2701
    %v2886 = vpack.c.b16 %v2706, %v2702
    %v2887 = vpack.c.b16 %v2711, %v2707
    %v2888 = vpack.c.b16 %v2712, %v2708
    %v2889 = vpack.c.b16 %v2713, %v2709
    %v2890 = vpack.c.b16 %v2714, %v2710
    %v2891 = vpack.c.b16 %v2719, %v2715
    %v2892 = vpack.c.b16 %v2720, %v2716
    %v2893 = vpack.c.b16 %v2721, %v2717
    %v2894 = vpack.c.b16 %v2722, %v2718
    %v2895 = vpack.c.b16 %v2727, %v2723
    %v2896 = vpack.c.b16 %v2728, %v2724
    %v2897 = vpack.c.b16 %v2729, %v2725
    %v2898 = vpack.c.b16 %v2730, %v2726
    %v2899 = vpack.c.b16 %v2735, %v2731
    %v2900 = vpack.c.b16 %v2736, %v2732
    %v2901 = vpack.c.b16 %v2737, %v2733
    %v2902 = vpack.c.b16 %v2738, %v2734
    %v2903 = vpack.c.b16 %v2743, %v2739
    %v2904 = vpack.c.b16 %v2744, %v2740
    %v2905 = vpack.c.b16 %v2745, %v2741
    %v2906 = vpack.c.b16 %v2746, %v2742
    %v2907 = vpack.c.b16 %v2751, %v2747
    %v2908 = vpack.c.b16 %v2752, %v2748
    %v2909 = vpack.c.b16 %v2753, %v2749
    %v2910 = vpack.c.b16 %v2754, %v2750
    %v2911 = vpack.c.b16 %v2759, %v2755
    %v2912 = vpack.c.b16 %v2760, %v2756
    %v2913 = vpack.c.b16 %v2761, %v2757
    %v2914 = vpack.c.b16 %v2762, %v2758
    %v2915 = vpack.c.b16 %v2767, %v2763
    %v2916 = vpack.c.b16 %v2768, %v2764
    %v2917 = vpack.c.b16 %v2769, %v2765
    %v2918 = vpack.c.b16 %v2770, %v2766
    %v2919 = vpack.c.b16 %v2775, %v2771
    %v2920 = vpack.c.b16 %v2776, %v2772
    %v2921 = vpack.c.b16 %v2777, %v2773
    %v2922 = vpack.c.b16 %v2778, %v2774
    %v2923 = vpack.c.b16 %v2783, %v2779
    %v2924 = vpack.c.b16 %v2784, %v2780
    %v2925 = vpack.c.b16 %v2785, %v2781
    %v2926 = vpack.c.b16 %v2786, %v2782
    %v2927 = vpack.c.b16 %v2791, %v2787
    %v2928 = vpack.c.b16 %v2792, %v2788
    %v2929 = vpack.c.b16 %v2793, %v2789
    %v2930 = vpack.c.b16 %v2794, %v2790
    %v2931 = vpack.c.b16 %v2799, %v2795
    %v2932 = vpack.c.b16 %v2800, %v2796
    %v2933 = vpack.c.b16 %v2801, %v2797
    %v2934 = vpack.c.b16 %v2802, %v2798
    %v2935 = vpack.c.b16 %v2807, %v2803
    %v2936 = vpack.c.b16 %v2808, %v2804
    %v2937 = vpack.c.b16 %v2809, %v2805
    %v2938 = vpack.c.b16 %v2810, %v2806
    %3067 = vmatprep.subr.bf16.mxu0 %v2840
    %3068 = vmatpush1.bf16.msra.mxu0 %v2839
    %3069 = vmatprep.subr.bf16.mxu0 %v2836
    %3070 = vmatpush1.bf16.msra.mxu0 %v2835
    %3071 = vmatprep.subr.bf16.mxu0 %v2832
    %3072 = vmatpush1.bf16.msra.mxu0 %v2831
    %3073 = vmatprep.subr.bf16.mxu0 %v2828
    %3074 = vmatpush1.bf16.msra.mxu0 %v2827
    %3075 = vmatprep.subr.bf16.mxu0 %v2824
    %3076 = vmatpush1.bf16.msra.mxu0 %v2823
    %3077 = vmatprep.subr.bf16.mxu0 %v2820
    %3078 = vmatpush1.bf16.msra.mxu0 %v2819
    %3079 = vmatprep.subr.bf16.mxu0 %v2816
    %3080 = vmatpush1.bf16.msra.mxu0 %v2815
    %3081 = vmatprep.subr.bf16.mxu0 %v2812
    %3082 = vmatpush1.bf16.msra.mxu0 %v2811
    %3083 = vmatprep.subr.bf16.mxu0 %v2872
    %3084 = vmatpush2.bf16.msra.mxu0 %v2871
    %3085 = vmatprep.subr.bf16.mxu0 %v2868
    %3086 = vmatpush2.bf16.msra.mxu0 %v2867
    %3087 = vmatprep.subr.bf16.mxu0 %v2864
    %3088 = vmatpush2.bf16.msra.mxu0 %v2863
    %3089 = vmatprep.subr.bf16.mxu0 %v2860
    %3090 = vmatpush2.bf16.msra.mxu0 %v2859
    %3091 = vmatprep.subr.bf16.mxu0 %v2856
    %3092 = vmatpush2.bf16.msra.mxu0 %v2855
    %3093 = vmatprep.subr.bf16.mxu0 %v2852
    %3094 = vmatpush2.bf16.msra.mxu0 %v2851
    %3095 = vmatprep.subr.bf16.mxu0 %v2848
    %3096 = vmatpush2.bf16.msra.mxu0 %v2847
    %3097 = vmatprep.subr.bf16.mxu0 %v2844
    %3098 = vmatpush2.bf16.msra.mxu0 %v2843
    %3099 = vmatprep.mubr.bf16.mxu0 %v2295
    %3100 = vmatmul.mubr.bf16.gmra.mxu0 %v2294
    %v3101 = vpop.f32.mrf.mxu0
    %v3102 = vadd.f32 0.0, %v3101
    %v3103 = vpop.f32.mrf.mxu0
    %v3104 = vadd.f32 0.0, %v3103
    %v3105 = vpop.f32.mrf.mxu0
    %v3106 = vadd.f32 0.0, %v3105
    %v3107 = vpop.f32.mrf.mxu0
    %v3108 = vadd.f32 0.0, %v3107
    %3109 = vdwg.mxu0
    %3110 = vmatprep.subr.bf16.mxu0 %v2904
    %3111 = vmatpush1.bf16.msra.mxu0 %v2903
    %3112 = vmatprep.subr.bf16.mxu0 %v2900
    %3113 = vmatpush1.bf16.msra.mxu0 %v2899
    %3114 = vmatprep.subr.bf16.mxu0 %v2896
    %3115 = vmatpush1.bf16.msra.mxu0 %v2895
    %3116 = vmatprep.subr.bf16.mxu0 %v2892
    %3117 = vmatpush1.bf16.msra.mxu0 %v2891
    %3118 = vmatprep.subr.bf16.mxu0 %v2888
    %3119 = vmatpush1.bf16.msra.mxu0 %v2887
    %3120 = vmatprep.subr.bf16.mxu0 %v2884
    %3121 = vmatpush1.bf16.msra.mxu0 %v2883
    %3122 = vmatprep.subr.bf16.mxu0 %v2880
    %3123 = vmatpush1.bf16.msra.mxu0 %v2879
    %3124 = vmatprep.subr.bf16.mxu0 %v2876
    %3125 = vmatpush1.bf16.msra.mxu0 %v2875
    %3126 = vmatprep.subr.bf16.mxu0 %v2936
    %3127 = vmatpush2.bf16.msra.mxu0 %v2935
    %3128 = vmatprep.subr.bf16.mxu0 %v2932
    %3129 = vmatpush2.bf16.msra.mxu0 %v2931
    %3130 = vmatprep.subr.bf16.mxu0 %v2928
    %3131 = vmatpush2.bf16.msra.mxu0 %v2927
    %3132 = vmatprep.subr.bf16.mxu0 %v2924
    %3133 = vmatpush2.bf16.msra.mxu0 %v2923
    %3134 = vmatprep.subr.bf16.mxu0 %v2920
    %3135 = vmatpush2.bf16.msra.mxu0 %v2919
    %3136 = vmatprep.subr.bf16.mxu0 %v2916
    %3137 = vmatpush2.bf16.msra.mxu0 %v2915
    %3138 = vmatprep.subr.bf16.mxu0 %v2912
    %3139 = vmatpush2.bf16.msra.mxu0 %v2911
    %3140 = vmatprep.subr.bf16.mxu0 %v2908
    %3141 = vmatpush2.bf16.msra.mxu0 %v2907
    %3142 = vmatprep.mubr.bf16.mxu0 %v2297
    %3143 = vmatmul.mubr.bf16.gmra.mxu0 %v2296
    %v3144 = vpop.f32.mrf.mxu0
    %v3145 = vadd.f32 %v3102, %v3144
    %v3146 = vpop.f32.mrf.mxu0
    %v3147 = vadd.f32 %v3104, %v3146
    %v3148 = vpop.f32.mrf.mxu0
    %v3149 = vadd.f32 %v3106, %v3148
    %v3150 = vpop.f32.mrf.mxu0
    %v3151 = vadd.f32 %v3108, %v3150
    %3152 = vdwg.mxu0
    %3153 = vmatprep.subr.bf16.mxu0 %v2842
    %3154 = vmatpush1.bf16.msra.mxu0 %v2841
    %3155 = vmatprep.subr.bf16.mxu0 %v2838
    %3156 = vmatpush1.bf16.msra.mxu0 %v2837
    %3157 = vmatprep.subr.bf16.mxu0 %v2834
    %3158 = vmatpush1.bf16.msra.mxu0 %v2833
    %3159 = vmatprep.subr.bf16.mxu0 %v2830
    %3160 = vmatpush1.bf16.msra.mxu0 %v2829
    %3161 = vmatprep.subr.bf16.mxu0 %v2826
    %3162 = vmatpush1.bf16.msra.mxu0 %v2825
    %3163 = vmatprep.subr.bf16.mxu0 %v2822
    %3164 = vmatpush1.bf16.msra.mxu0 %v2821
    %3165 = vmatprep.subr.bf16.mxu0 %v2818
    %3166 = vmatpush1.bf16.msra.mxu0 %v2817
    %3167 = vmatprep.subr.bf16.mxu0 %v2814
    %3168 = vmatpush1.bf16.msra.mxu0 %v2813
    %3169 = vmatprep.subr.bf16.mxu0 %v2874
    %3170 = vmatpush2.bf16.msra.mxu0 %v2873
    %3171 = vmatprep.subr.bf16.mxu0 %v2870
    %3172 = vmatpush2.bf16.msra.mxu0 %v2869
    %3173 = vmatprep.subr.bf16.mxu0 %v2866
    %3174 = vmatpush2.bf16.msra.mxu0 %v2865
    %3175 = vmatprep.subr.bf16.mxu0 %v2862
    %3176 = vmatpush2.bf16.msra.mxu0 %v2861
    %3177 = vmatprep.subr.bf16.mxu0 %v2858
    %3178 = vmatpush2.bf16.msra.mxu0 %v2857
    %3179 = vmatprep.subr.bf16.mxu0 %v2854
    %3180 = vmatpush2.bf16.msra.mxu0 %v2853
    %3181 = vmatprep.subr.bf16.mxu0 %v2850
    %3182 = vmatpush2.bf16.msra.mxu0 %v2849
    %3183 = vmatprep.subr.bf16.mxu0 %v2846
    %3184 = vmatpush2.bf16.msra.mxu0 %v2845
    %3185 = vmatprep.mubr.bf16.mxu0 %v2295
    %3186 = vmatmul.mubr.bf16.gmra.mxu0 %v2294
    %v3187 = vpop.f32.mrf.mxu0
    %v3188 = vadd.f32 0.0, %v3187
    %v3189 = vpop.f32.mrf.mxu0
    %v3190 = vadd.f32 0.0, %v3189
    %v3191 = vpop.f32.mrf.mxu0
    %v3192 = vadd.f32 0.0, %v3191
    %v3193 = vpop.f32.mrf.mxu0
    %v3194 = vadd.f32 0.0, %v3193
    %3195 = vdwg.mxu0
    %3196 = vmatprep.subr.bf16.mxu0 %v2906
    %3197 = vmatpush1.bf16.msra.mxu0 %v2905
    %3198 = vmatprep.subr.bf16.mxu0 %v2902
    %3199 = vmatpush1.bf16.msra.mxu0 %v2901
    %3200 = vmatprep.subr.bf16.mxu0 %v2898
    %3201 = vmatpush1.bf16.msra.mxu0 %v2897
    %3202 = vmatprep.subr.bf16.mxu0 %v2894
    %3203 = vmatpush1.bf16.msra.mxu0 %v2893
    %3204 = vmatprep.subr.bf16.mxu0 %v2890
    %3205 = vmatpush1.bf16.msra.mxu0 %v2889
    %3206 = vmatprep.subr.bf16.mxu0 %v2886
    %3207 = vmatpush1.bf16.msra.mxu0 %v2885
    %3208 = vmatprep.subr.bf16.mxu0 %v2882
    %3209 = vmatpush1.bf16.msra.mxu0 %v2881
    %3210 = vmatprep.subr.bf16.mxu0 %v2878
    %3211 = vmatpush1.bf16.msra.mxu0 %v2877
    %3212 = vmatprep.subr.bf16.mxu0 %v2938
    %3213 = vmatpush2.bf16.msra.mxu0 %v2937
    %3214 = vmatprep.subr.bf16.mxu0 %v2934
    %3215 = vmatpush2.bf16.msra.mxu0 %v2933
    %3216 = vmatprep.subr.bf16.mxu0 %v2930
    %3217 = vmatpush2.bf16.msra.mxu0 %v2929
    %3218 = vmatprep.subr.bf16.mxu0 %v2926
    %3219 = vmatpush2.bf16.msra.mxu0 %v2925
    %3220 = vmatprep.subr.bf16.mxu0 %v2922
    %3221 = vmatpush2.bf16.msra.mxu0 %v2921
    %3222 = vmatprep.subr.bf16.mxu0 %v2918
    %3223 = vmatpush2.bf16.msra.mxu0 %v2917
    %3224 = vmatprep.subr.bf16.mxu0 %v2914
    %3225 = vmatpush2.bf16.msra.mxu0 %v2913
    %3226 = vmatprep.subr.bf16.mxu0 %v2910
    %3227 = vmatpush2.bf16.msra.mxu0 %v2909
    %3228 = vmatprep.mubr.bf16.mxu0 %v2297
    %3229 = vmatmul.mubr.bf16.gmra.mxu0 %v2296
    %v3230 = vpop.f32.mrf.mxu0
    %v3231 = vadd.f32 %v3188, %v3230
    %v3232 = vpop.f32.mrf.mxu0
    %v3233 = vadd.f32 %v3190, %v3232
    %v3234 = vpop.f32.mrf.mxu0
    %v3235 = vadd.f32 %v3192, %v3234
    %v3236 = vpop.f32.mrf.mxu0
    %v3237 = vadd.f32 %v3194, %v3236
    %3238 = vdwg.mxu0
    %v3239 = vpack.c.bf16 %v3149, %v3145
    %v3240 = vpack.c.bf16 %v3151, %v3147
    %v3241 = vpack.c.bf16 %v3235, %v3231
    %v3242 = vpack.c.bf16 %v3237, %v3233
    %v3245 = vunpack.c.l.s4 1966171168
    %v3246 = vunpack.c.0.s8 %v3245
    %v3247 = vlaneseq
    %v3248 = vshrl.u32 %v3247, 7
    %v3249 = vsub.s32 %v3246, %v3248
    %v3250 = vrot.slane %v2426, %v3249
    %v3251 = vcombine.high %v3250, %v3250
    %v3253 = vunpack.c.l.s4 1966171168
    %v3254 = vunpack.c.0.s8 %v3253
    %v3255 = vlaneseq
    %v3256 = vshrl.u32 %v3255, 7
    %v3257 = vsub.s32 %v3254, %v3256
    %v3258 = vrot.slane %v3250, %v3257
    %v3260 = vunpack.c.l.s4 1966171168
    %v3261 = vunpack.c.0.s8 %v3260
    %v3262 = vlaneseq
    %v3263 = vshrl.u32 %v3262, 7
    %v3264 = vsub.s32 %v3261, %v3263
    %v3265 = vrot.slane %v3251, %v3264
    %v3266 = vcombine.high %v3258, %v3258
    %v3267 = vcombine.high %v3265, %v3265
    %v3269 = vpack.i.b16 %v3258, %v3258
    %v3271 = vlaneseq
    %v3272 = vshrl.u32 %v3271, 7
    %v3273 = vsub.s32 0, %v3272
    %v3274 = vrot.slane %v3269, %v3273
    %v3276 = vpack.i.b16 %v3265, %v3265
    %v3278 = vlaneseq
    %v3279 = vshrl.u32 %v3278, 7
    %v3280 = vsub.s32 0, %v3279
    %v3281 = vrot.slane %v3276, %v3280
    %v3283 = vpack.i.b16 %v3266, %v3266
    %v3285 = vlaneseq
    %v3286 = vshrl.u32 %v3285, 7
    %v3287 = vsub.s32 0, %v3286
    %v3288 = vrot.slane %v3283, %v3287
    %v3290 = vpack.i.b16 %v3267, %v3267
    %v3292 = vlaneseq
    %v3293 = vshrl.u32 %v3292, 7
    %v3294 = vsub.s32 0, %v3293
    %v3295 = vrot.slane %v3290, %v3294
    %v3296 = vadd.bf16 %v3239, %v3274
    %v3297 = vadd.bf16 %v3240, %v3281
    %v3298 = vadd.bf16 %v3241, %v3288
    %v3299 = vadd.bf16 %v3242, %v3295
    %v3300 = vmax.bf16 %v3296, 0
    %v3301 = vmax.bf16 %v3297, 0
    %v3302 = vmax.bf16 %v3298, 0
    %v3303 = vmax.bf16 %v3299, 0
    %v3304 = vld [vmem:[#allocation7] sm:$0xff]
    %v3305 = vld [vmem:[#allocation7 + $0x8] sm:$0xff]
    %v3306 = vld [vmem:[#allocation7 + $0x10] sm:$0xff]
    %v3307 = vld [vmem:[#allocation7 + $0x18] sm:$0xff]
    %v3308 = vld [vmem:[#allocation7 + $0x20] sm:$0xff]
    %v3309 = vld [vmem:[#allocation7 + $0x28] sm:$0xff]
    %v3310 = vld [vmem:[#allocation7 + $0x30] sm:$0xff]
    %v3311 = vld [vmem:[#allocation7 + $0x38] sm:$0xff]
    %v3312 = vld [vmem:[#allocation7 + $0x40] sm:$0xff]
    %v3313 = vld [vmem:[#allocation7 + $0x48] sm:$0xff]
    %v3314 = vld [vmem:[#allocation7 + $0x50] sm:$0xff]
    %v3315 = vld [vmem:[#allocation7 + $0x58] sm:$0xff]
    %v3316 = vld [vmem:[#allocation7 + $0x60] sm:$0xff]
    %v3317 = vld [vmem:[#allocation7 + $0x68] sm:$0xff]
    %v3318 = vld [vmem:[#allocation7 + $0x70] sm:$0xff]
    %v3319 = vld [vmem:[#allocation7 + $0x78] sm:$0xff]
    %v3320 = vld [vmem:[#allocation7 + $0x80] sm:$0xff]
    %v3321 = vld [vmem:[#allocation7 + $0x88] sm:$0xff]
    %v3322 = vld [vmem:[#allocation7 + $0x90] sm:$0xff]
    %v3323 = vld [vmem:[#allocation7 + $0x98] sm:$0xff]
    %v3324 = vld [vmem:[#allocation7 + $0xa0] sm:$0xff]
    %v3325 = vld [vmem:[#allocation7 + $0xa8] sm:$0xff]
    %v3326 = vld [vmem:[#allocation7 + $0xb0] sm:$0xff]
    %v3327 = vld [vmem:[#allocation7 + $0xb8] sm:$0xff]
    %v3328 = vld [vmem:[#allocation7 + $0xc0] sm:$0xff]
    %v3329 = vld [vmem:[#allocation7 + $0xc8] sm:$0xff]
    %v3330 = vld [vmem:[#allocation7 + $0xd0] sm:$0xff]
    %v3331 = vld [vmem:[#allocation7 + $0xd8] sm:$0xff]
    %v3332 = vld [vmem:[#allocation7 + $0xe0] sm:$0xff]
    %v3333 = vld [vmem:[#allocation7 + $0xe8] sm:$0xff]
    %v3334 = vld [vmem:[#allocation7 + $0xf0] sm:$0xff]
    %v3335 = vld [vmem:[#allocation7 + $0xf8] sm:$0xff]
    %v3336 = vld [vmem:[#allocation7 + $0x100] sm:$0xff]
    %v3337 = vld [vmem:[#allocation7 + $0x108] sm:$0xff]
    %v3338 = vld [vmem:[#allocation7 + $0x110] sm:$0xff]
    %v3339 = vld [vmem:[#allocation7 + $0x118] sm:$0xff]
    %v3340 = vld [vmem:[#allocation7 + $0x120] sm:$0xff]
    %v3341 = vld [vmem:[#allocation7 + $0x128] sm:$0xff]
    %v3342 = vld [vmem:[#allocation7 + $0x130] sm:$0xff]
    %v3343 = vld [vmem:[#allocation7 + $0x138] sm:$0xff]
    %v3344 = vld [vmem:[#allocation7 + $0x140] sm:$0xff]
    %v3345 = vld [vmem:[#allocation7 + $0x148] sm:$0xff]
    %v3346 = vld [vmem:[#allocation7 + $0x150] sm:$0xff]
    %v3347 = vld [vmem:[#allocation7 + $0x158] sm:$0xff]
    %v3348 = vld [vmem:[#allocation7 + $0x160] sm:$0xff]
    %v3349 = vld [vmem:[#allocation7 + $0x168] sm:$0xff]
    %v3350 = vld [vmem:[#allocation7 + $0x170] sm:$0xff]
    %v3351 = vld [vmem:[#allocation7 + $0x178] sm:$0xff]
    %v3352 = vld [vmem:[#allocation7 + $0x180] sm:$0xff]
    %v3353 = vld [vmem:[#allocation7 + $0x188] sm:$0xff]
    %v3354 = vld [vmem:[#allocation7 + $0x190] sm:$0xff]
    %v3355 = vld [vmem:[#allocation7 + $0x198] sm:$0xff]
    %v3356 = vld [vmem:[#allocation7 + $0x1a0] sm:$0xff]
    %v3357 = vld [vmem:[#allocation7 + $0x1a8] sm:$0xff]
    %v3358 = vld [vmem:[#allocation7 + $0x1b0] sm:$0xff]
    %v3359 = vld [vmem:[#allocation7 + $0x1b8] sm:$0xff]
    %v3360 = vld [vmem:[#allocation7 + $0x1c0] sm:$0xff]
    %v3361 = vld [vmem:[#allocation7 + $0x1c8] sm:$0xff]
    %v3362 = vld [vmem:[#allocation7 + $0x1d0] sm:$0xff]
    %v3363 = vld [vmem:[#allocation7 + $0x1d8] sm:$0xff]
    %v3364 = vld [vmem:[#allocation7 + $0x1e0] sm:$0xff]
    %v3365 = vld [vmem:[#allocation7 + $0x1e8] sm:$0xff]
    %v3366 = vld [vmem:[#allocation7 + $0x1f0] sm:$0xff]
    %v3367 = vld [vmem:[#allocation7 + $0x1f8] sm:$0xff]
    %v3368 = vld [vmem:[#allocation7 + $0x200] sm:$0xff]
    %v3369 = vld [vmem:[#allocation7 + $0x208] sm:$0xff]
    %v3370 = vld [vmem:[#allocation7 + $0x210] sm:$0xff]
    %v3371 = vld [vmem:[#allocation7 + $0x218] sm:$0xff]
    %v3372 = vld [vmem:[#allocation7 + $0x220] sm:$0xff]
    %v3373 = vld [vmem:[#allocation7 + $0x228] sm:$0xff]
    %v3374 = vld [vmem:[#allocation7 + $0x230] sm:$0xff]
    %v3375 = vld [vmem:[#allocation7 + $0x238] sm:$0xff]
    %v3376 = vld [vmem:[#allocation7 + $0x240] sm:$0xff]
    %v3377 = vld [vmem:[#allocation7 + $0x248] sm:$0xff]
    %v3378 = vld [vmem:[#allocation7 + $0x250] sm:$0xff]
    %v3379 = vld [vmem:[#allocation7 + $0x258] sm:$0xff]
    %v3380 = vld [vmem:[#allocation7 + $0x260] sm:$0xff]
    %v3381 = vld [vmem:[#allocation7 + $0x268] sm:$0xff]
    %v3382 = vld [vmem:[#allocation7 + $0x270] sm:$0xff]
    %v3383 = vld [vmem:[#allocation7 + $0x278] sm:$0xff]
    %v3384 = vld [vmem:[#allocation7 + $0x280] sm:$0xff]
    %v3385 = vld [vmem:[#allocation7 + $0x288] sm:$0xff]
    %v3386 = vld [vmem:[#allocation7 + $0x290] sm:$0xff]
    %v3387 = vld [vmem:[#allocation7 + $0x298] sm:$0xff]
    %v3388 = vld [vmem:[#allocation7 + $0x2a0] sm:$0xff]
    %v3389 = vld [vmem:[#allocation7 + $0x2a8] sm:$0xff]
    %v3390 = vld [vmem:[#allocation7 + $0x2b0] sm:$0xff]
    %v3391 = vld [vmem:[#allocation7 + $0x2b8] sm:$0xff]
    %v3392 = vld [vmem:[#allocation7 + $0x2c0] sm:$0xff]
    %v3393 = vld [vmem:[#allocation7 + $0x2c8] sm:$0xff]
    %v3394 = vld [vmem:[#allocation7 + $0x2d0] sm:$0xff]
    %v3395 = vld [vmem:[#allocation7 + $0x2d8] sm:$0xff]
    %v3396 = vld [vmem:[#allocation7 + $0x2e0] sm:$0xff]
    %v3397 = vld [vmem:[#allocation7 + $0x2e8] sm:$0xff]
    %v3398 = vld [vmem:[#allocation7 + $0x2f0] sm:$0xff]
    %v3399 = vld [vmem:[#allocation7 + $0x2f8] sm:$0xff]
    %v3400 = vld [vmem:[#allocation7 + $0x300] sm:$0xff]
    %v3401 = vld [vmem:[#allocation7 + $0x308] sm:$0xff]
    %v3402 = vld [vmem:[#allocation7 + $0x310] sm:$0xff]
    %v3403 = vld [vmem:[#allocation7 + $0x318] sm:$0xff]
    %v3404 = vld [vmem:[#allocation7 + $0x320] sm:$0xff]
    %v3405 = vld [vmem:[#allocation7 + $0x328] sm:$0xff]
    %v3406 = vld [vmem:[#allocation7 + $0x330] sm:$0xff]
    %v3407 = vld [vmem:[#allocation7 + $0x338] sm:$0xff]
    %v3408 = vld [vmem:[#allocation7 + $0x340] sm:$0xff]
    %v3409 = vld [vmem:[#allocation7 + $0x348] sm:$0xff]
    %v3410 = vld [vmem:[#allocation7 + $0x350] sm:$0xff]
    %v3411 = vld [vmem:[#allocation7 + $0x358] sm:$0xff]
    %v3412 = vld [vmem:[#allocation7 + $0x360] sm:$0xff]
    %v3413 = vld [vmem:[#allocation7 + $0x368] sm:$0xff]
    %v3414 = vld [vmem:[#allocation7 + $0x370] sm:$0xff]
    %v3415 = vld [vmem:[#allocation7 + $0x378] sm:$0xff]
    %v3416 = vld [vmem:[#allocation7 + $0x380] sm:$0xff]
    %v3417 = vld [vmem:[#allocation7 + $0x388] sm:$0xff]
    %v3418 = vld [vmem:[#allocation7 + $0x390] sm:$0xff]
    %v3419 = vld [vmem:[#allocation7 + $0x398] sm:$0xff]
    %v3420 = vld [vmem:[#allocation7 + $0x3a0] sm:$0xff]
    %v3421 = vld [vmem:[#allocation7 + $0x3a8] sm:$0xff]
    %v3422 = vld [vmem:[#allocation7 + $0x3b0] sm:$0xff]
    %v3423 = vld [vmem:[#allocation7 + $0x3b8] sm:$0xff]
    %v3424 = vld [vmem:[#allocation7 + $0x3c0] sm:$0xff]
    %v3425 = vld [vmem:[#allocation7 + $0x3c8] sm:$0xff]
    %v3426 = vld [vmem:[#allocation7 + $0x3d0] sm:$0xff]
    %v3427 = vld [vmem:[#allocation7 + $0x3d8] sm:$0xff]
    %v3428 = vld [vmem:[#allocation7 + $0x3e0] sm:$0xff]
    %v3429 = vld [vmem:[#allocation7 + $0x3e8] sm:$0xff]
    %v3430 = vld [vmem:[#allocation7 + $0x3f0] sm:$0xff]
    %v3431 = vld [vmem:[#allocation7 + $0x3f8] sm:$0xff]
    %v3432 = vld [vmem:[%s10] sm:$0xf]
    %v3561 = vunpack.c.l.b16 %v3304
    %v3562 = vunpack.c.h.b16 %v3304
    %v3563 = vunpack.c.l.b16 %v3305
    %v3564 = vunpack.c.h.b16 %v3305
    %v3565 = vunpack.c.l.b16 %v3306
    %v3566 = vunpack.c.h.b16 %v3306
    %v3567 = vunpack.c.l.b16 %v3307
    %v3568 = vunpack.c.h.b16 %v3307
    %v3569 = vunpack.c.l.b16 %v3308
    %v3570 = vunpack.c.h.b16 %v3308
    %v3571 = vunpack.c.l.b16 %v3309
    %v3572 = vunpack.c.h.b16 %v3309
    %v3573 = vunpack.c.l.b16 %v3310
    %v3574 = vunpack.c.h.b16 %v3310
    %v3575 = vunpack.c.l.b16 %v3311
    %v3576 = vunpack.c.h.b16 %v3311
    %v3577 = vunpack.c.l.b16 %v3312
    %v3578 = vunpack.c.h.b16 %v3312
    %v3579 = vunpack.c.l.b16 %v3313
    %v3580 = vunpack.c.h.b16 %v3313
    %v3581 = vunpack.c.l.b16 %v3314
    %v3582 = vunpack.c.h.b16 %v3314
    %v3583 = vunpack.c.l.b16 %v3315
    %v3584 = vunpack.c.h.b16 %v3315
    %v3585 = vunpack.c.l.b16 %v3316
    %v3586 = vunpack.c.h.b16 %v3316
    %v3587 = vunpack.c.l.b16 %v3317
    %v3588 = vunpack.c.h.b16 %v3317
    %v3589 = vunpack.c.l.b16 %v3318
    %v3590 = vunpack.c.h.b16 %v3318
    %v3591 = vunpack.c.l.b16 %v3319
    %v3592 = vunpack.c.h.b16 %v3319
    %v3593 = vunpack.c.l.b16 %v3320
    %v3594 = vunpack.c.h.b16 %v3320
    %v3595 = vunpack.c.l.b16 %v3321
    %v3596 = vunpack.c.h.b16 %v3321
    %v3597 = vunpack.c.l.b16 %v3322
    %v3598 = vunpack.c.h.b16 %v3322
    %v3599 = vunpack.c.l.b16 %v3323
    %v3600 = vunpack.c.h.b16 %v3323
    %v3601 = vunpack.c.l.b16 %v3324
    %v3602 = vunpack.c.h.b16 %v3324
    %v3603 = vunpack.c.l.b16 %v3325
    %v3604 = vunpack.c.h.b16 %v3325
    %v3605 = vunpack.c.l.b16 %v3326
    %v3606 = vunpack.c.h.b16 %v3326
    %v3607 = vunpack.c.l.b16 %v3327
    %v3608 = vunpack.c.h.b16 %v3327
    %v3609 = vunpack.c.l.b16 %v3328
    %v3610 = vunpack.c.h.b16 %v3328
    %v3611 = vunpack.c.l.b16 %v3329
    %v3612 = vunpack.c.h.b16 %v3329
    %v3613 = vunpack.c.l.b16 %v3330
    %v3614 = vunpack.c.h.b16 %v3330
    %v3615 = vunpack.c.l.b16 %v3331
    %v3616 = vunpack.c.h.b16 %v3331
    %v3617 = vunpack.c.l.b16 %v3332
    %v3618 = vunpack.c.h.b16 %v3332
    %v3619 = vunpack.c.l.b16 %v3333
    %v3620 = vunpack.c.h.b16 %v3333
    %v3621 = vunpack.c.l.b16 %v3334
    %v3622 = vunpack.c.h.b16 %v3334
    %v3623 = vunpack.c.l.b16 %v3335
    %v3624 = vunpack.c.h.b16 %v3335
    %v3625 = vunpack.c.l.b16 %v3336
    %v3626 = vunpack.c.h.b16 %v3336
    %v3627 = vunpack.c.l.b16 %v3337
    %v3628 = vunpack.c.h.b16 %v3337
    %v3629 = vunpack.c.l.b16 %v3338
    %v3630 = vunpack.c.h.b16 %v3338
    %v3631 = vunpack.c.l.b16 %v3339
    %v3632 = vunpack.c.h.b16 %v3339
    %v3633 = vunpack.c.l.b16 %v3340
    %v3634 = vunpack.c.h.b16 %v3340
    %v3635 = vunpack.c.l.b16 %v3341
    %v3636 = vunpack.c.h.b16 %v3341
    %v3637 = vunpack.c.l.b16 %v3342
    %v3638 = vunpack.c.h.b16 %v3342
    %v3639 = vunpack.c.l.b16 %v3343
    %v3640 = vunpack.c.h.b16 %v3343
    %v3641 = vunpack.c.l.b16 %v3344
    %v3642 = vunpack.c.h.b16 %v3344
    %v3643 = vunpack.c.l.b16 %v3345
    %v3644 = vunpack.c.h.b16 %v3345
    %v3645 = vunpack.c.l.b16 %v3346
    %v3646 = vunpack.c.h.b16 %v3346
    %v3647 = vunpack.c.l.b16 %v3347
    %v3648 = vunpack.c.h.b16 %v3347
    %v3649 = vunpack.c.l.b16 %v3348
    %v3650 = vunpack.c.h.b16 %v3348
    %v3651 = vunpack.c.l.b16 %v3349
    %v3652 = vunpack.c.h.b16 %v3349
    %v3653 = vunpack.c.l.b16 %v3350
    %v3654 = vunpack.c.h.b16 %v3350
    %v3655 = vunpack.c.l.b16 %v3351
    %v3656 = vunpack.c.h.b16 %v3351
    %v3657 = vunpack.c.l.b16 %v3352
    %v3658 = vunpack.c.h.b16 %v3352
    %v3659 = vunpack.c.l.b16 %v3353
    %v3660 = vunpack.c.h.b16 %v3353
    %v3661 = vunpack.c.l.b16 %v3354
    %v3662 = vunpack.c.h.b16 %v3354
    %v3663 = vunpack.c.l.b16 %v3355
    %v3664 = vunpack.c.h.b16 %v3355
    %v3665 = vunpack.c.l.b16 %v3356
    %v3666 = vunpack.c.h.b16 %v3356
    %v3667 = vunpack.c.l.b16 %v3357
    %v3668 = vunpack.c.h.b16 %v3357
    %v3669 = vunpack.c.l.b16 %v3358
    %v3670 = vunpack.c.h.b16 %v3358
    %v3671 = vunpack.c.l.b16 %v3359
    %v3672 = vunpack.c.h.b16 %v3359
    %v3673 = vunpack.c.l.b16 %v3360
    %v3674 = vunpack.c.h.b16 %v3360
    %v3675 = vunpack.c.l.b16 %v3361
    %v3676 = vunpack.c.h.b16 %v3361
    %v3677 = vunpack.c.l.b16 %v3362
    %v3678 = vunpack.c.h.b16 %v3362
    %v3679 = vunpack.c.l.b16 %v3363
    %v3680 = vunpack.c.h.b16 %v3363
    %v3681 = vunpack.c.l.b16 %v3364
    %v3682 = vunpack.c.h.b16 %v3364
    %v3683 = vunpack.c.l.b16 %v3365
    %v3684 = vunpack.c.h.b16 %v3365
    %v3685 = vunpack.c.l.b16 %v3366
    %v3686 = vunpack.c.h.b16 %v3366
    %v3687 = vunpack.c.l.b16 %v3367
    %v3688 = vunpack.c.h.b16 %v3367
    %v3689 = vunpack.c.l.b16 %v3368
    %v3690 = vunpack.c.h.b16 %v3368
    %v3691 = vunpack.c.l.b16 %v3369
    %v3692 = vunpack.c.h.b16 %v3369
    %v3693 = vunpack.c.l.b16 %v3370
    %v3694 = vunpack.c.h.b16 %v3370
    %v3695 = vunpack.c.l.b16 %v3371
    %v3696 = vunpack.c.h.b16 %v3371
    %v3697 = vunpack.c.l.b16 %v3372
    %v3698 = vunpack.c.h.b16 %v3372
    %v3699 = vunpack.c.l.b16 %v3373
    %v3700 = vunpack.c.h.b16 %v3373
    %v3701 = vunpack.c.l.b16 %v3374
    %v3702 = vunpack.c.h.b16 %v3374
    %v3703 = vunpack.c.l.b16 %v3375
    %v3704 = vunpack.c.h.b16 %v3375
    %v3705 = vunpack.c.l.b16 %v3376
    %v3706 = vunpack.c.h.b16 %v3376
    %v3707 = vunpack.c.l.b16 %v3377
    %v3708 = vunpack.c.h.b16 %v3377
    %v3709 = vunpack.c.l.b16 %v3378
    %v3710 = vunpack.c.h.b16 %v3378
    %v3711 = vunpack.c.l.b16 %v3379
    %v3712 = vunpack.c.h.b16 %v3379
    %v3713 = vunpack.c.l.b16 %v3380
    %v3714 = vunpack.c.h.b16 %v3380
    %v3715 = vunpack.c.l.b16 %v3381
    %v3716 = vunpack.c.h.b16 %v3381
    %v3717 = vunpack.c.l.b16 %v3382
    %v3718 = vunpack.c.h.b16 %v3382
    %v3719 = vunpack.c.l.b16 %v3383
    %v3720 = vunpack.c.h.b16 %v3383
    %v3721 = vunpack.c.l.b16 %v3384
    %v3722 = vunpack.c.h.b16 %v3384
    %v3723 = vunpack.c.l.b16 %v3385
    %v3724 = vunpack.c.h.b16 %v3385
    %v3725 = vunpack.c.l.b16 %v3386
    %v3726 = vunpack.c.h.b16 %v3386
    %v3727 = vunpack.c.l.b16 %v3387
    %v3728 = vunpack.c.h.b16 %v3387
    %v3729 = vunpack.c.l.b16 %v3388
    %v3730 = vunpack.c.h.b16 %v3388
    %v3731 = vunpack.c.l.b16 %v3389
    %v3732 = vunpack.c.h.b16 %v3389
    %v3733 = vunpack.c.l.b16 %v3390
    %v3734 = vunpack.c.h.b16 %v3390
    %v3735 = vunpack.c.l.b16 %v3391
    %v3736 = vunpack.c.h.b16 %v3391
    %v3737 = vunpack.c.l.b16 %v3392
    %v3738 = vunpack.c.h.b16 %v3392
    %v3739 = vunpack.c.l.b16 %v3393
    %v3740 = vunpack.c.h.b16 %v3393
    %v3741 = vunpack.c.l.b16 %v3394
    %v3742 = vunpack.c.h.b16 %v3394
    %v3743 = vunpack.c.l.b16 %v3395
    %v3744 = vunpack.c.h.b16 %v3395
    %v3745 = vunpack.c.l.b16 %v3396
    %v3746 = vunpack.c.h.b16 %v3396
    %v3747 = vunpack.c.l.b16 %v3397
    %v3748 = vunpack.c.h.b16 %v3397
    %v3749 = vunpack.c.l.b16 %v3398
    %v3750 = vunpack.c.h.b16 %v3398
    %v3751 = vunpack.c.l.b16 %v3399
    %v3752 = vunpack.c.h.b16 %v3399
    %v3753 = vunpack.c.l.b16 %v3400
    %v3754 = vunpack.c.h.b16 %v3400
    %v3755 = vunpack.c.l.b16 %v3401
    %v3756 = vunpack.c.h.b16 %v3401
    %v3757 = vunpack.c.l.b16 %v3402
    %v3758 = vunpack.c.h.b16 %v3402
    %v3759 = vunpack.c.l.b16 %v3403
    %v3760 = vunpack.c.h.b16 %v3403
    %v3761 = vunpack.c.l.b16 %v3404
    %v3762 = vunpack.c.h.b16 %v3404
    %v3763 = vunpack.c.l.b16 %v3405
    %v3764 = vunpack.c.h.b16 %v3405
    %v3765 = vunpack.c.l.b16 %v3406
    %v3766 = vunpack.c.h.b16 %v3406
    %v3767 = vunpack.c.l.b16 %v3407
    %v3768 = vunpack.c.h.b16 %v3407
    %v3769 = vunpack.c.l.b16 %v3408
    %v3770 = vunpack.c.h.b16 %v3408
    %v3771 = vunpack.c.l.b16 %v3409
    %v3772 = vunpack.c.h.b16 %v3409
    %v3773 = vunpack.c.l.b16 %v3410
    %v3774 = vunpack.c.h.b16 %v3410
    %v3775 = vunpack.c.l.b16 %v3411
    %v3776 = vunpack.c.h.b16 %v3411
    %v3777 = vunpack.c.l.b16 %v3412
    %v3778 = vunpack.c.h.b16 %v3412
    %v3779 = vunpack.c.l.b16 %v3413
    %v3780 = vunpack.c.h.b16 %v3413
    %v3781 = vunpack.c.l.b16 %v3414
    %v3782 = vunpack.c.h.b16 %v3414
    %v3783 = vunpack.c.l.b16 %v3415
    %v3784 = vunpack.c.h.b16 %v3415
    %v3785 = vunpack.c.l.b16 %v3416
    %v3786 = vunpack.c.h.b16 %v3416
    %v3787 = vunpack.c.l.b16 %v3417
    %v3788 = vunpack.c.h.b16 %v3417
    %v3789 = vunpack.c.l.b16 %v3418
    %v3790 = vunpack.c.h.b16 %v3418
    %v3791 = vunpack.c.l.b16 %v3419
    %v3792 = vunpack.c.h.b16 %v3419
    %v3793 = vunpack.c.l.b16 %v3420
    %v3794 = vunpack.c.h.b16 %v3420
    %v3795 = vunpack.c.l.b16 %v3421
    %v3796 = vunpack.c.h.b16 %v3421
    %v3797 = vunpack.c.l.b16 %v3422
    %v3798 = vunpack.c.h.b16 %v3422
    %v3799 = vunpack.c.l.b16 %v3423
    %v3800 = vunpack.c.h.b16 %v3423
    %v3801 = vunpack.c.l.b16 %v3424
    %v3802 = vunpack.c.h.b16 %v3424
    %v3803 = vunpack.c.l.b16 %v3425
    %v3804 = vunpack.c.h.b16 %v3425
    %v3805 = vunpack.c.l.b16 %v3426
    %v3806 = vunpack.c.h.b16 %v3426
    %v3807 = vunpack.c.l.b16 %v3427
    %v3808 = vunpack.c.h.b16 %v3427
    %v3809 = vunpack.c.l.b16 %v3428
    %v3810 = vunpack.c.h.b16 %v3428
    %v3811 = vunpack.c.l.b16 %v3429
    %v3812 = vunpack.c.h.b16 %v3429
    %v3813 = vunpack.c.l.b16 %v3430
    %v3814 = vunpack.c.h.b16 %v3430
    %v3815 = vunpack.c.l.b16 %v3431
    %v3816 = vunpack.c.h.b16 %v3431
    %v3817 = vpack.c.b16 %v3565, %v3561
    %v3818 = vpack.c.b16 %v3566, %v3562
    %v3819 = vpack.c.b16 %v3567, %v3563
    %v3820 = vpack.c.b16 %v3568, %v3564
    %v3821 = vpack.c.b16 %v3573, %v3569
    %v3822 = vpack.c.b16 %v3574, %v3570
    %v3823 = vpack.c.b16 %v3575, %v3571
    %v3824 = vpack.c.b16 %v3576, %v3572
    %v3825 = vpack.c.b16 %v3581, %v3577
    %v3826 = vpack.c.b16 %v3582, %v3578
    %v3827 = vpack.c.b16 %v3583, %v3579
    %v3828 = vpack.c.b16 %v3584, %v3580
    %v3829 = vpack.c.b16 %v3589, %v3585
    %v3830 = vpack.c.b16 %v3590, %v3586
    %v3831 = vpack.c.b16 %v3591, %v3587
    %v3832 = vpack.c.b16 %v3592, %v3588
    %v3833 = vpack.c.b16 %v3597, %v3593
    %v3834 = vpack.c.b16 %v3598, %v3594
    %v3835 = vpack.c.b16 %v3599, %v3595
    %v3836 = vpack.c.b16 %v3600, %v3596
    %v3837 = vpack.c.b16 %v3605, %v3601
    %v3838 = vpack.c.b16 %v3606, %v3602
    %v3839 = vpack.c.b16 %v3607, %v3603
    %v3840 = vpack.c.b16 %v3608, %v3604
    %v3841 = vpack.c.b16 %v3613, %v3609
    %v3842 = vpack.c.b16 %v3614, %v3610
    %v3843 = vpack.c.b16 %v3615, %v3611
    %v3844 = vpack.c.b16 %v3616, %v3612
    %v3845 = vpack.c.b16 %v3621, %v3617
    %v3846 = vpack.c.b16 %v3622, %v3618
    %v3847 = vpack.c.b16 %v3623, %v3619
    %v3848 = vpack.c.b16 %v3624, %v3620
    %v3849 = vpack.c.b16 %v3629, %v3625
    %v3850 = vpack.c.b16 %v3630, %v3626
    %v3851 = vpack.c.b16 %v3631, %v3627
    %v3852 = vpack.c.b16 %v3632, %v3628
    %v3853 = vpack.c.b16 %v3637, %v3633
    %v3854 = vpack.c.b16 %v3638, %v3634
    %v3855 = vpack.c.b16 %v3639, %v3635
    %v3856 = vpack.c.b16 %v3640, %v3636
    %v3857 = vpack.c.b16 %v3645, %v3641
    %v3858 = vpack.c.b16 %v3646, %v3642
    %v3859 = vpack.c.b16 %v3647, %v3643
    %v3860 = vpack.c.b16 %v3648, %v3644
    %v3861 = vpack.c.b16 %v3653, %v3649
    %v3862 = vpack.c.b16 %v3654, %v3650
    %v3863 = vpack.c.b16 %v3655, %v3651
    %v3864 = vpack.c.b16 %v3656, %v3652
    %v3865 = vpack.c.b16 %v3661, %v3657
    %v3866 = vpack.c.b16 %v3662, %v3658
    %v3867 = vpack.c.b16 %v3663, %v3659
    %v3868 = vpack.c.b16 %v3664, %v3660
    %v3869 = vpack.c.b16 %v3669, %v3665
    %v3870 = vpack.c.b16 %v3670, %v3666
    %v3871 = vpack.c.b16 %v3671, %v3667
    %v3872 = vpack.c.b16 %v3672, %v3668
    %v3873 = vpack.c.b16 %v3677, %v3673
    %v3874 = vpack.c.b16 %v3678, %v3674
    %v3875 = vpack.c.b16 %v3679, %v3675
    %v3876 = vpack.c.b16 %v3680, %v3676
    %v3877 = vpack.c.b16 %v3685, %v3681
    %v3878 = vpack.c.b16 %v3686, %v3682
    %v3879 = vpack.c.b16 %v3687, %v3683
    %v3880 = vpack.c.b16 %v3688, %v3684
    %v3881 = vpack.c.b16 %v3693, %v3689
    %v3882 = vpack.c.b16 %v3694, %v3690
    %v3883 = vpack.c.b16 %v3695, %v3691
    %v3884 = vpack.c.b16 %v3696, %v3692
    %v3885 = vpack.c.b16 %v3701, %v3697
    %v3886 = vpack.c.b16 %v3702, %v3698
    %v3887 = vpack.c.b16 %v3703, %v3699
    %v3888 = vpack.c.b16 %v3704, %v3700
    %v3889 = vpack.c.b16 %v3709, %v3705
    %v3890 = vpack.c.b16 %v3710, %v3706
    %v3891 = vpack.c.b16 %v3711, %v3707
    %v3892 = vpack.c.b16 %v3712, %v3708
    %v3893 = vpack.c.b16 %v3717, %v3713
    %v3894 = vpack.c.b16 %v3718, %v3714
    %v3895 = vpack.c.b16 %v3719, %v3715
    %v3896 = vpack.c.b16 %v3720, %v3716
    %v3897 = vpack.c.b16 %v3725, %v3721
    %v3898 = vpack.c.b16 %v3726, %v3722
    %v3899 = vpack.c.b16 %v3727, %v3723
    %v3900 = vpack.c.b16 %v3728, %v3724
    %v3901 = vpack.c.b16 %v3733, %v3729
    %v3902 = vpack.c.b16 %v3734, %v3730
    %v3903 = vpack.c.b16 %v3735, %v3731
    %v3904 = vpack.c.b16 %v3736, %v3732
    %v3905 = vpack.c.b16 %v3741, %v3737
    %v3906 = vpack.c.b16 %v3742, %v3738
    %v3907 = vpack.c.b16 %v3743, %v3739
    %v3908 = vpack.c.b16 %v3744, %v3740
    %v3909 = vpack.c.b16 %v3749, %v3745
    %v3910 = vpack.c.b16 %v3750, %v3746
    %v3911 = vpack.c.b16 %v3751, %v3747
    %v3912 = vpack.c.b16 %v3752, %v3748
    %v3913 = vpack.c.b16 %v3757, %v3753
    %v3914 = vpack.c.b16 %v3758, %v3754
    %v3915 = vpack.c.b16 %v3759, %v3755
    %v3916 = vpack.c.b16 %v3760, %v3756
    %v3917 = vpack.c.b16 %v3765, %v3761
    %v3918 = vpack.c.b16 %v3766, %v3762
    %v3919 = vpack.c.b16 %v3767, %v3763
    %v3920 = vpack.c.b16 %v3768, %v3764
    %v3921 = vpack.c.b16 %v3773, %v3769
    %v3922 = vpack.c.b16 %v3774, %v3770
    %v3923 = vpack.c.b16 %v3775, %v3771
    %v3924 = vpack.c.b16 %v3776, %v3772
    %v3925 = vpack.c.b16 %v3781, %v3777
    %v3926 = vpack.c.b16 %v3782, %v3778
    %v3927 = vpack.c.b16 %v3783, %v3779
    %v3928 = vpack.c.b16 %v3784, %v3780
    %v3929 = vpack.c.b16 %v3789, %v3785
    %v3930 = vpack.c.b16 %v3790, %v3786
    %v3931 = vpack.c.b16 %v3791, %v3787
    %v3932 = vpack.c.b16 %v3792, %v3788
    %v3933 = vpack.c.b16 %v3797, %v3793
    %v3934 = vpack.c.b16 %v3798, %v3794
    %v3935 = vpack.c.b16 %v3799, %v3795
    %v3936 = vpack.c.b16 %v3800, %v3796
    %v3937 = vpack.c.b16 %v3805, %v3801
    %v3938 = vpack.c.b16 %v3806, %v3802
    %v3939 = vpack.c.b16 %v3807, %v3803
    %v3940 = vpack.c.b16 %v3808, %v3804
    %v3941 = vpack.c.b16 %v3813, %v3809
    %v3942 = vpack.c.b16 %v3814, %v3810
    %v3943 = vpack.c.b16 %v3815, %v3811
    %v3944 = vpack.c.b16 %v3816, %v3812
    %4073 = vmatprep.subr.bf16.mxu0 %v3846
    %4074 = vmatpush1.bf16.msra.mxu0 %v3845
    %4075 = vmatprep.subr.bf16.mxu0 %v3842
    %4076 = vmatpush1.bf16.msra.mxu0 %v3841
    %4077 = vmatprep.subr.bf16.mxu0 %v3838
    %4078 = vmatpush1.bf16.msra.mxu0 %v3837
    %4079 = vmatprep.subr.bf16.mxu0 %v3834
    %4080 = vmatpush1.bf16.msra.mxu0 %v3833
    %4081 = vmatprep.subr.bf16.mxu0 %v3830
    %4082 = vmatpush1.bf16.msra.mxu0 %v3829
    %4083 = vmatprep.subr.bf16.mxu0 %v3826
    %4084 = vmatpush1.bf16.msra.mxu0 %v3825
    %4085 = vmatprep.subr.bf16.mxu0 %v3822
    %4086 = vmatpush1.bf16.msra.mxu0 %v3821
    %4087 = vmatprep.subr.bf16.mxu0 %v3818
    %4088 = vmatpush1.bf16.msra.mxu0 %v3817
    %4089 = vmatprep.subr.bf16.mxu0 %v3878
    %4090 = vmatpush2.bf16.msra.mxu0 %v3877
    %4091 = vmatprep.subr.bf16.mxu0 %v3874
    %4092 = vmatpush2.bf16.msra.mxu0 %v3873
    %4093 = vmatprep.subr.bf16.mxu0 %v3870
    %4094 = vmatpush2.bf16.msra.mxu0 %v3869
    %4095 = vmatprep.subr.bf16.mxu0 %v3866
    %4096 = vmatpush2.bf16.msra.mxu0 %v3865
    %4097 = vmatprep.subr.bf16.mxu0 %v3862
    %4098 = vmatpush2.bf16.msra.mxu0 %v3861
    %4099 = vmatprep.subr.bf16.mxu0 %v3858
    %4100 = vmatpush2.bf16.msra.mxu0 %v3857
    %4101 = vmatprep.subr.bf16.mxu0 %v3854
    %4102 = vmatpush2.bf16.msra.mxu0 %v3853
    %4103 = vmatprep.subr.bf16.mxu0 %v3850
    %4104 = vmatpush2.bf16.msra.mxu0 %v3849
    %4105 = vmatprep.mubr.bf16.mxu0 %v3301
    %4106 = vmatmul.mubr.bf16.gmra.mxu0 %v3300
    %v4107 = vpop.f32.mrf.mxu0
    %v4108 = vadd.f32 0.0, %v4107
    %v4109 = vpop.f32.mrf.mxu0
    %v4110 = vadd.f32 0.0, %v4109
    %v4111 = vpop.f32.mrf.mxu0
    %v4112 = vadd.f32 0.0, %v4111
    %v4113 = vpop.f32.mrf.mxu0
    %v4114 = vadd.f32 0.0, %v4113
    %4115 = vdwg.mxu0
    %4116 = vmatprep.subr.bf16.mxu0 %v3910
    %4117 = vmatpush1.bf16.msra.mxu0 %v3909
    %4118 = vmatprep.subr.bf16.mxu0 %v3906
    %4119 = vmatpush1.bf16.msra.mxu0 %v3905
    %4120 = vmatprep.subr.bf16.mxu0 %v3902
    %4121 = vmatpush1.bf16.msra.mxu0 %v3901
    %4122 = vmatprep.subr.bf16.mxu0 %v3898
    %4123 = vmatpush1.bf16.msra.mxu0 %v3897
    %4124 = vmatprep.subr.bf16.mxu0 %v3894
    %4125 = vmatpush1.bf16.msra.mxu0 %v3893
    %4126 = vmatprep.subr.bf16.mxu0 %v3890
    %4127 = vmatpush1.bf16.msra.mxu0 %v3889
    %4128 = vmatprep.subr.bf16.mxu0 %v3886
    %4129 = vmatpush1.bf16.msra.mxu0 %v3885
    %4130 = vmatprep.subr.bf16.mxu0 %v3882
    %4131 = vmatpush1.bf16.msra.mxu0 %v3881
    %4132 = vmatprep.subr.bf16.mxu0 %v3942
    %4133 = vmatpush2.bf16.msra.mxu0 %v3941
    %4134 = vmatprep.subr.bf16.mxu0 %v3938
    %4135 = vmatpush2.bf16.msra.mxu0 %v3937
    %4136 = vmatprep.subr.bf16.mxu0 %v3934
    %4137 = vmatpush2.bf16.msra.mxu0 %v3933
    %4138 = vmatprep.subr.bf16.mxu0 %v3930
    %4139 = vmatpush2.bf16.msra.mxu0 %v3929
    %4140 = vmatprep.subr.bf16.mxu0 %v3926
    %4141 = vmatpush2.bf16.msra.mxu0 %v3925
    %4142 = vmatprep.subr.bf16.mxu0 %v3922
    %4143 = vmatpush2.bf16.msra.mxu0 %v3921
    %4144 = vmatprep.subr.bf16.mxu0 %v3918
    %4145 = vmatpush2.bf16.msra.mxu0 %v3917
    %4146 = vmatprep.subr.bf16.mxu0 %v3914
    %4147 = vmatpush2.bf16.msra.mxu0 %v3913
    %4148 = vmatprep.mubr.bf16.mxu0 %v3303
    %4149 = vmatmul.mubr.bf16.gmra.mxu0 %v3302
    %v4150 = vpop.f32.mrf.mxu0
    %v4151 = vadd.f32 %v4108, %v4150
    %v4152 = vpop.f32.mrf.mxu0
    %v4153 = vadd.f32 %v4110, %v4152
    %v4154 = vpop.f32.mrf.mxu0
    %v4155 = vadd.f32 %v4112, %v4154
    %v4156 = vpop.f32.mrf.mxu0
    %v4157 = vadd.f32 %v4114, %v4156
    %4158 = vdwg.mxu0
    %4159 = vmatprep.subr.bf16.mxu0 %v3848
    %4160 = vmatpush1.bf16.msra.mxu0 %v3847
    %4161 = vmatprep.subr.bf16.mxu0 %v3844
    %4162 = vmatpush1.bf16.msra.mxu0 %v3843
    %4163 = vmatprep.subr.bf16.mxu0 %v3840
    %4164 = vmatpush1.bf16.msra.mxu0 %v3839
    %4165 = vmatprep.subr.bf16.mxu0 %v3836
    %4166 = vmatpush1.bf16.msra.mxu0 %v3835
    %4167 = vmatprep.subr.bf16.mxu0 %v3832
    %4168 = vmatpush1.bf16.msra.mxu0 %v3831
    %4169 = vmatprep.subr.bf16.mxu0 %v3828
    %4170 = vmatpush1.bf16.msra.mxu0 %v3827
    %4171 = vmatprep.subr.bf16.mxu0 %v3824
    %4172 = vmatpush1.bf16.msra.mxu0 %v3823
    %4173 = vmatprep.subr.bf16.mxu0 %v3820
    %4174 = vmatpush1.bf16.msra.mxu0 %v3819
    %4175 = vmatprep.subr.bf16.mxu0 %v3880
    %4176 = vmatpush2.bf16.msra.mxu0 %v3879
    %4177 = vmatprep.subr.bf16.mxu0 %v3876
    %4178 = vmatpush2.bf16.msra.mxu0 %v3875
    %4179 = vmatprep.subr.bf16.mxu0 %v3872
    %4180 = vmatpush2.bf16.msra.mxu0 %v3871
    %4181 = vmatprep.subr.bf16.mxu0 %v3868
    %4182 = vmatpush2.bf16.msra.mxu0 %v3867
    %4183 = vmatprep.subr.bf16.mxu0 %v3864
    %4184 = vmatpush2.bf16.msra.mxu0 %v3863
    %4185 = vmatprep.subr.bf16.mxu0 %v3860
    %4186 = vmatpush2.bf16.msra.mxu0 %v3859
    %4187 = vmatprep.subr.bf16.mxu0 %v3856
    %4188 = vmatpush2.bf16.msra.mxu0 %v3855
    %4189 = vmatprep.subr.bf16.mxu0 %v3852
    %4190 = vmatpush2.bf16.msra.mxu0 %v3851
    %4191 = vmatprep.mubr.bf16.mxu0 %v3301
    %4192 = vmatmul.mubr.bf16.gmra.mxu0 %v3300
    %v4193 = vpop.f32.mrf.mxu0
    %v4194 = vadd.f32 0.0, %v4193
    %v4195 = vpop.f32.mrf.mxu0
    %v4196 = vadd.f32 0.0, %v4195
    %v4197 = vpop.f32.mrf.mxu0
    %v4198 = vadd.f32 0.0, %v4197
    %v4199 = vpop.f32.mrf.mxu0
    %v4200 = vadd.f32 0.0, %v4199
    %4201 = vdwg.mxu0
    %4202 = vmatprep.subr.bf16.mxu0 %v3912
    %4203 = vmatpush1.bf16.msra.mxu0 %v3911
    %4204 = vmatprep.subr.bf16.mxu0 %v3908
    %4205 = vmatpush1.bf16.msra.mxu0 %v3907
    %4206 = vmatprep.subr.bf16.mxu0 %v3904
    %4207 = vmatpush1.bf16.msra.mxu0 %v3903
    %4208 = vmatprep.subr.bf16.mxu0 %v3900
    %4209 = vmatpush1.bf16.msra.mxu0 %v3899
    %4210 = vmatprep.subr.bf16.mxu0 %v3896
    %4211 = vmatpush1.bf16.msra.mxu0 %v3895
    %4212 = vmatprep.subr.bf16.mxu0 %v3892
    %4213 = vmatpush1.bf16.msra.mxu0 %v3891
    %4214 = vmatprep.subr.bf16.mxu0 %v3888
    %4215 = vmatpush1.bf16.msra.mxu0 %v3887
    %4216 = vmatprep.subr.bf16.mxu0 %v3884
    %4217 = vmatpush1.bf16.msra.mxu0 %v3883
    %4218 = vmatprep.subr.bf16.mxu0 %v3944
    %4219 = vmatpush2.bf16.msra.mxu0 %v3943
    %4220 = vmatprep.subr.bf16.mxu0 %v3940
    %4221 = vmatpush2.bf16.msra.mxu0 %v3939
    %4222 = vmatprep.subr.bf16.mxu0 %v3936
    %4223 = vmatpush2.bf16.msra.mxu0 %v3935
    %4224 = vmatprep.subr.bf16.mxu0 %v3932
    %4225 = vmatpush2.bf16.msra.mxu0 %v3931
    %4226 = vmatprep.subr.bf16.mxu0 %v3928
    %4227 = vmatpush2.bf16.msra.mxu0 %v3927
    %4228 = vmatprep.subr.bf16.mxu0 %v3924
    %4229 = vmatpush2.bf16.msra.mxu0 %v3923
    %4230 = vmatprep.subr.bf16.mxu0 %v3920
    %4231 = vmatpush2.bf16.msra.mxu0 %v3919
    %4232 = vmatprep.subr.bf16.mxu0 %v3916
    %4233 = vmatpush2.bf16.msra.mxu0 %v3915
    %4234 = vmatprep.mubr.bf16.mxu0 %v3303
    %4235 = vmatmul.mubr.bf16.gmra.mxu0 %v3302
    %v4236 = vpop.f32.mrf.mxu0
    %v4237 = vadd.f32 %v4194, %v4236
    %v4238 = vpop.f32.mrf.mxu0
    %v4239 = vadd.f32 %v4196, %v4238
    %v4240 = vpop.f32.mrf.mxu0
    %v4241 = vadd.f32 %v4198, %v4240
    %v4242 = vpop.f32.mrf.mxu0
    %v4243 = vadd.f32 %v4200, %v4242
    %4244 = vdwg.mxu0
    %v4245 = vpack.c.bf16 %v4155, %v4151
    %v4246 = vpack.c.bf16 %v4157, %v4153
    %v4247 = vpack.c.bf16 %v4241, %v4237
    %v4248 = vpack.c.bf16 %v4243, %v4239
    %v4251 = vunpack.c.l.s4 1966171168
    %v4252 = vunpack.c.0.s8 %v4251
    %v4253 = vlaneseq
    %v4254 = vshrl.u32 %v4253, 7
    %v4255 = vsub.s32 %v4252, %v4254
    %v4256 = vrot.slane %v3432, %v4255
    %v4257 = vcombine.high %v4256, %v4256
    %v4259 = vunpack.c.l.s4 1966171168
    %v4260 = vunpack.c.0.s8 %v4259
    %v4261 = vlaneseq
    %v4262 = vshrl.u32 %v4261, 7
    %v4263 = vsub.s32 %v4260, %v4262
    %v4264 = vrot.slane %v4256, %v4263
    %v4266 = vunpack.c.l.s4 1966171168
    %v4267 = vunpack.c.0.s8 %v4266
    %v4268 = vlaneseq
    %v4269 = vshrl.u32 %v4268, 7
    %v4270 = vsub.s32 %v4267, %v4269
    %v4271 = vrot.slane %v4257, %v4270
    %v4272 = vcombine.high %v4264, %v4264
    %v4273 = vcombine.high %v4271, %v4271
    %v4275 = vpack.i.b16 %v4264, %v4264
    %v4277 = vlaneseq
    %v4278 = vshrl.u32 %v4277, 7
    %v4279 = vsub.s32 0, %v4278
    %v4280 = vrot.slane %v4275, %v4279
    %v4282 = vpack.i.b16 %v4271, %v4271
    %v4284 = vlaneseq
    %v4285 = vshrl.u32 %v4284, 7
    %v4286 = vsub.s32 0, %v4285
    %v4287 = vrot.slane %v4282, %v4286
    %v4289 = vpack.i.b16 %v4272, %v4272
    %v4291 = vlaneseq
    %v4292 = vshrl.u32 %v4291, 7
    %v4293 = vsub.s32 0, %v4292
    %v4294 = vrot.slane %v4289, %v4293
    %v4296 = vpack.i.b16 %v4273, %v4273
    %v4298 = vlaneseq
    %v4299 = vshrl.u32 %v4298, 7
    %v4300 = vsub.s32 0, %v4299
    %v4301 = vrot.slane %v4296, %v4300
    %v4302 = vadd.bf16 %v4245, %v4280
    %v4303 = vadd.bf16 %v4246, %v4287
    %v4304 = vadd.bf16 %v4247, %v4294
    %v4305 = vadd.bf16 %v4248, %v4301
    %v4306 = vmax.bf16 %v4302, 0
    %v4307 = vmax.bf16 %v4303, 0
    %v4308 = vmax.bf16 %v4304, 0
    %v4309 = vmax.bf16 %v4305, 0
    %v4310 = vunpack.c.l.bf16 %v4306
    %v4311 = vunpack.c.l.bf16 %v4307
    %v4312 = vunpack.c.l.bf16 %v4308
    %v4313 = vunpack.c.l.bf16 %v4309
    %v4314 = vunpack.c.h.bf16 %v4306
    %v4315 = vunpack.c.h.bf16 %v4307
    %v4316 = vunpack.c.h.bf16 %v4308
    %v4317 = vunpack.c.h.bf16 %v4309
    %v4319 = vlaneseq
    %v4320 = vshrl.u32 %v4319, 7
    %v4321 = vsub.s32 0, %v4320
    %v4322 = vrot.slane %v100, %v4321
    %v4323 = vlaneseq
    %v4324 = vshrl.u32 %v4323, 7
    %v4325 = vsub.s32 1, %v4324
    %v4326 = vrot.slane %v100, %v4325
    %v4327 = vlaneseq
    %v4328 = vshrl.u32 %v4327, 7
    %v4329 = vsub.s32 2, %v4328
    %v4330 = vrot.slane %v100, %v4329
    %v4331 = vlaneseq
    %v4332 = vshrl.u32 %v4331, 7
    %v4333 = vsub.s32 3, %v4332
    %v4334 = vrot.slane %v100, %v4333
    %v4339 = vmul.f32 %v4310, %v4322
    %v4340 = vmul.f32 %v4311, %v4326
    %v4341 = vmul.f32 %v4312, %v4330
    %v4342 = vmul.f32 %v4313, %v4334
    %v4343 = vmul.f32 %v4314, %v4322
    %v4344 = vmul.f32 %v4315, %v4326
    %v4345 = vmul.f32 %v4316, %v4330
    %v4346 = vmul.f32 %v4317, %v4334
    %v4347 = vadd.f32 %v4339, %v4340
    %v4348 = vadd.f32 %v4347, %v4341
    %v4349 = vadd.f32 %v4348, %v4342
    %4350 = vadd.xlane.f32.xlu0 %v4349
    %v4351 = vpop.xlane.xlu0 %4350
    %v4352 = vadd.f32 %v4343, %v4344
    %v4353 = vadd.f32 %v4352, %v4345
    %v4354 = vadd.f32 %v4353, %v4346
    %4355 = vadd.xlane.f32.xlu0 %v4354
    %v4356 = vpop.xlane.xlu0 %4355
    %vm4357 = vcmask 7168
    %4358 = vst.msk [vmem:[%s12] sm:$0xff] %vm4357, %v4351
    %4359 = vst.msk [vmem:[%s12 + $0x8] sm:$0xff] %vm4357, %v4356
    // Predicated region
    $region66: #{ff_aware_mlp_energy_predictor.1} parent=1 // pred_check
      _
    $region67: #{ff_aware_mlp_energy_predictor.1} parent=1 // pred_check_branch
      %4361 = sbr.rel (0) target = $region69
    $region68: #{ff_aware_mlp_energy_predictor.1} parent=1 // pred_region
      _
    $region69: #{ff_aware_mlp_energy_predictor.1} parent=1 // pred_fallthru
      _
    // Predicated region
    $region70: #{ff_aware_mlp_energy_predictor.1} parent=1 // pred_check
      _
    $region71: #{ff_aware_mlp_energy_predictor.1} parent=1 // pred_check_branch
      %4363 = sbr.rel (0) target = $region73
    $region72: #{ff_aware_mlp_energy_predictor.1} parent=1 // pred_region
      _
    $region73: #{ff_aware_mlp_energy_predictor.1} parent=1 // pred_fallthru
      _
    %4364 = vsyncpa [#allocation3], 1
    %4365 = vsyncpa [#allocation5], 1
    %4366 = vsyncpa [#allocation8], 1

</llo_original>
